<compile_context>
chip_gen: v5e
topology: v5e:2x2
jax: 0.10.0
libtpu: 0.0.40
codegen_flags: <defaults>
</compile_context>

<pallas_src>
import functools
import math

import jax
import jax.numpy as jnp
from jax import lax
from jax.experimental import pallas as pl
from jax.experimental.pallas import tpu as pltpu


# ----------------------------------------------------------------------------
# Fused kernel.
#
# Ref layout (positional):
#   ids_ref : (T*B, 1) int32 token ids, time-major flattened
#   emb_ref : (V, E)   embedding table
#   per layer l: wih_l (in_dim, 8H), whh_l (2H, 8H), b_l (1, 8H)
#       columns packed [i_f|i_b|f_f|f_b|g_f|g_b|o_f|o_b] (H lanes each);
#       whh rows 0:H feed only fwd columns, rows H:2H only bwd columns.
#   wout_ref: (2H, L)  hidden2label weight (transposed)
#   bout_ref: (1, L)
#   logp_ref: (B, L)   output log-probabilities
# Scratch:
#   gx_scr  : (T*B, 8H) hoisted input projection (reused by every layer)
#   seqf_scr: (T*B, H)  forward outputs of the current layer
#   seqb_scr: (T*B, H)  backward outputs of the current layer
#   hb0_scr : (B, H)    backward hidden after loop step 0 of the last layer
# ----------------------------------------------------------------------------
def _fused_lstm_classifier_kernel(*refs, seq_len, batch, hidden_dim, num_layers):
    T, B, H = seq_len, batch, hidden_dim
    TB = T * B
    G2 = 2 * H                                  # width of one (fwd|bwd) gate pair

    ids_ref, emb_ref = refs[0], refs[1]
    layer_refs = refs[2:2 + 3 * num_layers]
    wout_ref = refs[2 + 3 * num_layers]
    bout_ref = refs[3 + 3 * num_layers]
    logp_ref = refs[4 + 3 * num_layers]
    gx_scr, seqf_scr, seqb_scr, hb0_scr = refs[5 + 3 * num_layers:]

    # ---- Embedding lookup as a one-hot MXU matmul (gather stays off XLA). ----
    vocab = emb_ref.shape[0]
    onehot = (ids_ref[...] ==
              lax.broadcasted_iota(jnp.int32, (TB, vocab), 1)).astype(jnp.float32)
    x0 = jnp.dot(onehot, emb_ref[...], preferred_element_type=jnp.float32)  # (TB,E)

    # ---- Hoisted fwd/bwd column-selection mask: gate blocks of width H
    #      alternate fwd/bwd along the 8H axis. Built once, reused every step.
    half = jnp.concatenate([jnp.zeros((B, H), jnp.float32),
                            jnp.ones((B, H), jnp.float32)], axis=-1)        # (B,2H)
    is_bwd_col = jnp.concatenate([half, half, half, half], axis=-1) > 0.5   # (B,8H)

    unroll = True if T <= 16 else 4   # full unroll only while T is small

    def bilstm(whh_ref, *, emit_seq, capture_hb0):
        """Fused fwd+bwd recurrence over gx_scr; h/c live in the fori_loop carry."""

        def step(t, carry):
            h, c = carry
            t_rev = (T - 1) - t
            row = pl.multiple_of(t * B, 8)           # forward reads time t
            row_rev = pl.multiple_of(t_rev * B, 8)   # backward reads time T-1-t

            g_fwd = gx_scr[pl.ds(row, B)]            # (B, 8H)
            g_bwd = gx_scr[pl.ds(row_rev, B)]        # (B, 8H)
            pre = jnp.where(is_bwd_col, g_bwd, g_fwd)   # one vsel blend

            # Single 256-wide recurrent matmul for both directions.
            gates = pre + jnp.dot(h, whh_ref[...],
                                  preferred_element_type=jnp.float32)       # (B,8H)

            i = jax.nn.sigmoid(gates[:, 0 * G2:1 * G2])
            f = jax.nn.sigmoid(gates[:, 1 * G2:2 * G2])
            g = jnp.tanh(gates[:, 2 * G2:3 * G2])
            o = jax.nn.sigmoid(gates[:, 3 * G2:4 * G2])
            c_new = f * c + i * g                    # (B, 2H) = [c_f | c_b]
            h_new = o * jnp.tanh(c_new)              # (B, 2H) = [h_f | h_b]

            if emit_seq:
                # Stores are off the h/c dependence chain; overlap with next MXU.
                seqf_scr[pl.ds(row, B)] = h_new[:, :H]
                seqb_scr[pl.ds(row_rev, B)] = h_new[:, H:]
            if capture_hb0:
                # Backward hidden after loop step 0 has only seen x[T-1]; it is
                # the backward half of lstm_out[-1].
                @pl.when(t == 0)
                def _():
                    hb0_scr[...] = h_new[:, H:]
            return (h_new, c_new)

        init = (jnp.zeros((B, 2 * H), jnp.float32),  # matches init_hidden()
                jnp.zeros((B, 2 * H), jnp.float32))
        h_fin, _ = lax.fori_loop(0, T, step, init, unroll=unroll)
        return h_fin

    h_fin = None
    for layer in range(num_layers):
        wih_ref = layer_refs[3 * layer + 0]
        whh_ref = layer_refs[3 * layer + 1]
        b_ref = layer_refs[3 * layer + 2]
        is_last = layer == num_layers - 1

        # Hoisted input projection for both directions, written once to gx_scr.
        if layer == 0:
            gx = jnp.dot(x0, wih_ref[...], preferred_element_type=jnp.float32)
        else:
            # Consume the previous layer's fwd/bwd scratches directly through a
            # row split of W_ih -> no (T*B, 2H) lane concat is ever built.
            gx = (jnp.dot(seqf_scr[...], wih_ref[:H, :],
                          preferred_element_type=jnp.float32) +
                  jnp.dot(seqb_scr[...], wih_ref[H:, :],
                          preferred_element_type=jnp.float32))
        gx_scr[...] = gx + b_ref[...]

        h_fin = bilstm(whh_ref, emit_seq=not is_last, capture_hb0=is_last)
        # TODO(synk): inter-layer dropout (p) is a training-time op; no-op here.

    # ---- hidden2label + log_softmax on lstm_out[-1] = [h_fwd(T-1) | h_bwd(T-1)].
    y = (jnp.dot(h_fin[:, :H], wout_ref[:H, :],
                 preferred_element_type=jnp.float32) +
         jnp.dot(hb0_scr[...], wout_ref[H:, :],
                 preferred_element_type=jnp.float32) + bout_ref[...])        # (B,L)
    m = jnp.max(y, axis=-1, keepdims=True)
    z = y - m
    logp_ref[...] = z - jnp.log(jnp.sum(jnp.exp(z), axis=-1, keepdims=True))


# ----------------------------------------------------------------------------
# pallas_call wrapper (grid=(1,), everything VMEM-resident).
# ----------------------------------------------------------------------------
def _fused_forward(ids2d, emb, layer_params, w_out_t, b_out, *,
                   seq_len, batch, hidden_dim, num_layers):
    T, B, H = seq_len, batch, hidden_dim
    TB = T * B
    V, E = emb.shape
    L = w_out_t.shape[-1]

    kernel = functools.partial(_fused_lstm_classifier_kernel, seq_len=T,
                               batch=B, hidden_dim=H, num_layers=num_layers)

    in_specs = [pl.BlockSpec((TB, 1), lambda i: (0, 0)),   # token ids
                pl.BlockSpec((V, E), lambda i: (0, 0))]    # embedding table
    inputs = [ids2d, emb]
    for wih, whh, b in layer_params:
        in_specs += [pl.BlockSpec(wih.shape, lambda i: (0, 0)),
                     pl.BlockSpec(whh.shape, lambda i: (0, 0)),
                     pl.BlockSpec(b.shape, lambda i: (0, 0))]
        inputs += [wih, whh, b]
    in_specs += [pl.BlockSpec(w_out_t.shape, lambda i: (0, 0)),
                 pl.BlockSpec(b_out.shape, lambda i: (0, 0))]
    inputs += [w_out_t, b_out]

    return pl.pallas_call(
        kernel,
        out_shape=jax.ShapeDtypeStruct((B, L), jnp.float32),
        grid_spec=pltpu.PrefetchScalarGridSpec(
            num_scalar_prefetch=0,
            grid=(1,),
            # TODO(synk): on v7x at realistic batch sizes, make this a 'parallel'
            # axis over batch chunks (2nd TensorCore) and time-chunk gx_scr
            # (emit_pipeline) once T*B*8H outgrows VMEM.
            in_specs=in_specs,
            out_specs=pl.BlockSpec((B, L), lambda i: (0, 0)),
            scratch_shapes=[
                pltpu.VMEM((TB, 8 * H), jnp.float32),   # hoisted input projection
                pltpu.VMEM((TB, H), jnp.float32),       # layer fwd outputs
                pltpu.VMEM((TB, H), jnp.float32),       # layer bwd outputs
                pltpu.VMEM((B, H), jnp.float32),        # backward h after t=0
            ],
        ),
        compiler_params=pltpu.CompilerParams(
            dimension_semantics=("arbitrary",)),
    )(*inputs)


# ----------------------------------------------------------------------------
# Full forward pass (one kernel launch).
# ----------------------------------------------------------------------------
def lstm_classifier_forward(params, sentence, *, num_layers, hidden_dim):
    T, B = sentence.shape
    Bp = ((B + 7) // 8) * 8   # sublane-dense batch; padded rows discarded below

    ids = sentence.astype(jnp.int32)
    if Bp != B:
        ids = jnp.pad(ids, ((0, 0), (0, Bp - B)))   # pad token id 0 (discarded)
    ids2d = ids.reshape(T * Bp, 1)                  # row = t * Bp + b

    layer_params = [(params[f"layer{l}"]["wih"],
                     params[f"layer{l}"]["whh"],
                     params[f"layer{l}"]["b"]) for l in range(num_layers)]
    logp = _fused_forward(ids2d, params["embedding"], layer_params,
                          params["w_out_t"], params["b_out"],
                          seq_len=T, batch=Bp, hidden_dim=hidden_dim,
                          num_layers=num_layers)
    # TODO(synk): PyTorch module carries self.hidden across forward() calls;
    # here the hidden state is zero-initialized per call (== init_hidden()).
    return logp[:B]


# ----------------------------------------------------------------------------
# Parameter init (shapes/ranges follow nn.LSTM / nn.Linear), packed into the
# interleaved-gate fused layouts the kernel expects. Raw per-direction weights
# are kept for the pure-JAX reference check.
# ----------------------------------------------------------------------------
def _pack_gate_cols(mat_f, mat_b, H):
    # mat_*: (rows, 4H) in PyTorch gate order (i, f, g, o) along columns.
    # Returns (rows, 8H) with columns [i_f|i_b|f_f|f_b|g_f|g_b|o_f|o_b].
    blocks = []
    for k in range(4):
        blocks.append(mat_f[:, k * H:(k + 1) * H])
        blocks.append(mat_b[:, k * H:(k + 1) * H])
    return jnp.concatenate(blocks, axis=1)


def init_params(key, embedding_dim, hidden_dim, vocab_size, label_size,
                num_layers):
    H = hidden_dim
    params = {"raw": {}}
    key, k_emb = jax.random.split(key)
    params["embedding"] = jax.random.normal(
        k_emb, (vocab_size, embedding_dim), jnp.float32)

    stdv = 1.0 / math.sqrt(H)
    for layer in range(num_layers):
        in_dim = embedding_dim if layer == 0 else 2 * H
        dirs = []
        for _ in range(2):  # forward, backward
            key, k1, k2, k3, k4 = jax.random.split(key, 5)
            w_ih = jax.random.uniform(k1, (4 * H, in_dim), jnp.float32,
                                      -stdv, stdv)
            w_hh = jax.random.uniform(k2, (4 * H, H), jnp.float32, -stdv, stdv)
            b_ih = jax.random.uniform(k3, (4 * H,), jnp.float32, -stdv, stdv)
            b_hh = jax.random.uniform(k4, (4 * H,), jnp.float32, -stdv, stdv)
            dirs.append((w_ih, w_hh, b_ih + b_hh))
        (wih_f, whh_f, b_f), (wih_b, whh_b, b_b) = dirs

        wih = _pack_gate_cols(wih_f.T, wih_b.T, H)                   # (in_dim, 8H)
        top = _pack_gate_cols(whh_f.T, jnp.zeros_like(whh_b.T), H)   # (H, 8H)
        bot = _pack_gate_cols(jnp.zeros_like(whh_f.T), whh_b.T, H)   # (H, 8H)
        whh = jnp.concatenate([top, bot], axis=0)                    # (2H, 8H)
        b = _pack_gate_cols(b_f[None, :], b_b[None, :], H)           # (1, 8H)
        params[f"layer{layer}"] = dict(wih=wih, whh=whh, b=b)
        params["raw"][f"layer{layer}"] = dict(
            w_ih_f=wih_f, w_hh_f=whh_f, b_f=b_f,
            w_ih_b=wih_b, w_hh_b=whh_b, b_b=b_b)

    stdv_lin = 1.0 / math.sqrt(2 * H)
    key, k1, k2 = jax.random.split(key, 3)
    params["w_out_t"] = jax.random.uniform(
        k1, (2 * H, label_size), jnp.float32, -stdv_lin, stdv_lin)
    params["b_out"] = jax.random.uniform(
        k2, (1, label_size), jnp.float32, -stdv_lin, stdv_lin)
    return params


# ----------------------------------------------------------------------------
# Pure-JAX reference (uses raw, unpacked weights) for a correctness check.
# ----------------------------------------------------------------------------
def _reference_forward(params, sentence, *, num_layers, hidden_dim):
    H = hidden_dim
    x = params["embedding"][sentence].astype(jnp.float32)   # (T, B, E)

    def run_dir(xseq, w_ih, w_hh, b):
        Bq = xseq.shape[1]

        def cell(carry, x_t):
            h, c = carry
            gates = x_t @ w_ih.T + h @ w_hh.T + b
            i = jax.nn.sigmoid(gates[:, 0 * H:1 * H])
            f = jax.nn.sigmoid(gates[:, 1 * H:2 * H])
            g = jnp.tanh(gates[:, 2 * H:3 * H])
            o = jax.nn.sigmoid(gates[:, 3 * H:4 * H])
            c_new = f * c + i * g
            h_new = o * jnp.tanh(c_new)
            return (h_new, c_new), h_new

        init = (jnp.zeros((Bq, H), jnp.float32), jnp.zeros((Bq, H), jnp.float32))
        _, hs = lax.scan(cell, init, xseq)
        return hs

    for l in range(num_layers):
        raw = params["raw"][f"layer{l}"]
        h_f = run_dir(x, raw["w_ih_f"], raw["w_hh_f"], raw["b_f"])
        h_b = run_dir(x[::-1], raw["w_ih_b"], raw["w_hh_b"], raw["b_b"])[::-1]
        x = jnp.concatenate([h_f, h_b], axis=-1)

    y = x[-1] @ params["w_out_t"] + params["b_out"]
    return jax.nn.log_softmax(y, axis=-1)


if __name__ == "__main__":
    EMBEDDING_DIM = 16
    HIDDEN_DIM = 32
    VOCAB_SIZE = 50
    LABEL_SIZE = 8
    BATCH_SIZE = 4
    SEQ_LEN = 8
    NUM_LAYERS = 2
    P_DROPOUT = 0.3  # unused at inference

    key = jax.random.PRNGKey(0)
    k_params, k_data = jax.random.split(key)
    params = init_params(k_params, EMBEDDING_DIM, HIDDEN_DIM, VOCAB_SIZE,
                         LABEL_SIZE, NUM_LAYERS)

    # sentence: (T, B) integer token ids, time-major like the PyTorch module.
    sentence = jax.random.randint(k_data, (SEQ_LEN, BATCH_SIZE), 0, VOCAB_SIZE,
                                  dtype=jnp.int32)

    fwd = jax.jit(functools.partial(lstm_classifier_forward,
                                    num_layers=NUM_LAYERS,
                                    hidden_dim=HIDDEN_DIM))
    log_probs = jax.block_until_ready(fwd(params, sentence))

    assert log_probs.shape == (BATCH_SIZE, LABEL_SIZE)
    assert bool(jnp.all(jnp.isfinite(log_probs)))
    # rows of exp(log_probs) must sum to 1 (valid log_softmax)
    row_sums = jnp.sum(jnp.exp(log_probs), axis=1)
    assert bool(jnp.all(jnp.abs(row_sums - 1.0) < 1e-4))

    # Cross-check the fused kernel against a plain-JAX bidirectional LSTM.
    ref = _reference_forward(params, sentence, num_layers=NUM_LAYERS,
                             hidden_dim=HIDDEN_DIM)
    assert bool(jnp.allclose(log_probs, ref, atol=1e-3, rtol=1e-3))

    print("KERNEL_OK")
</pallas_src>

<mosaic_0001>
module attributes {stable_mosaic.version = 11 : i64} {
  func.func @_fused_lstm_classifier_kernel(%arg0: i32, %arg1: memref<64x1xi32, #tpu.memory_space<vmem>>, %arg2: memref<50x16xf32, #tpu.memory_space<vmem>>, %arg3: memref<16x256xf32, #tpu.memory_space<vmem>>, %arg4: memref<64x256xf32, #tpu.memory_space<vmem>>, %arg5: memref<1x256xf32, #tpu.memory_space<vmem>>, %arg6: memref<64x256xf32, #tpu.memory_space<vmem>>, %arg7: memref<64x256xf32, #tpu.memory_space<vmem>>, %arg8: memref<1x256xf32, #tpu.memory_space<vmem>>, %arg9: memref<64x8xf32, #tpu.memory_space<vmem>>, %arg10: memref<1x8xf32, #tpu.memory_space<vmem>>, %arg11: memref<8x8xf32, #tpu.memory_space<vmem>>, %arg12: memref<64x256xf32, #tpu.memory_space<vmem>>, %arg13: memref<64x32xf32, #tpu.memory_space<vmem>>, %arg14: memref<64x32xf32, #tpu.memory_space<vmem>>, %arg15: memref<8x32xf32, #tpu.memory_space<vmem>>) attributes {dimension_semantics = [#tpu.dimension_semantics<arbitrary>], iteration_bounds = array<i64: 1>, scalar_prefetch = 0 : i64, scratch_operands = 4 : i64, tpu.core_type = #tpu.core_type<tc>, window_params = [{pipeline_mode = #tpu.pipeline_mode<synchronous>, transform_indices = @transform_0, window_bounds = array<i64: 64, 1>}, {pipeline_mode = #tpu.pipeline_mode<synchronous>, transform_indices = @transform_1, window_bounds = array<i64: 50, 16>}, {pipeline_mode = #tpu.pipeline_mode<synchronous>, transform_indices = @transform_2, window_bounds = array<i64: 16, 256>}, {pipeline_mode = #tpu.pipeline_mode<synchronous>, transform_indices = @transform_3, window_bounds = array<i64: 64, 256>}, {pipeline_mode = #tpu.pipeline_mode<synchronous>, transform_indices = @transform_4, window_bounds = array<i64: 1, 256>}, {pipeline_mode = #tpu.pipeline_mode<synchronous>, transform_indices = @transform_5, window_bounds = array<i64: 64, 256>}, {pipeline_mode = #tpu.pipeline_mode<synchronous>, transform_indices = @transform_6, window_bounds = array<i64: 64, 256>}, {pipeline_mode = #tpu.pipeline_mode<synchronous>, transform_indices = @transform_7, window_bounds = array<i64: 1, 256>}, {pipeline_mode = #tpu.pipeline_mode<synchronous>, transform_indices = @transform_8, window_bounds = array<i64: 64, 8>}, {pipeline_mode = #tpu.pipeline_mode<synchronous>, transform_indices = @transform_9, window_bounds = array<i64: 1, 8>}, {pipeline_mode = #tpu.pipeline_mode<synchronous>, transform_indices = @transform_10, window_bounds = array<i64: 8, 8>}]} {
    %c0 = arith.constant 0 : index
    %c0_0 = arith.constant 0 : index
    %0 = vector.load %arg1[%c0, %c0_0] : memref<64x1xi32, #tpu.memory_space<vmem>>, vector<64x1xi32>
    %1 = tpu.iota {dimensions = array<i32: 1>} : vector<64x50xi32>
    %2 = vector.broadcast %0 : vector<64x1xi32> to vector<64x50xi32>
    %3 = arith.cmpi eq, %2, %1 : vector<64x50xi32>
    %4 = arith.extui %3 : vector<64x50xi1> to vector<64x50xi32>
    %5 = arith.sitofp %4 : vector<64x50xi32> to vector<64x50xf32>
    %c0_1 = arith.constant 0 : index
    %c0_2 = arith.constant 0 : index
    %6 = vector.load %arg2[%c0_1, %c0_2] : memref<50x16xf32, #tpu.memory_space<vmem>>, vector<50x16xf32>
    %cst = arith.constant dense<0.000000e+00> : vector<64x16xf32>
    %7 = tpu.matmul %5, %6, %cst {dimension_numbers = #tpu.dot_dimension_numbers<[1], [0], [0], [1], [0, 0, 1, 1], [], []>} : vector<64x50xf32>, vector<50x16xf32>, vector<64x16xf32> -> vector<64x16xf32>
    %cst_3 = arith.constant 0.000000e+00 : f32
    %8 = vector.broadcast %cst_3 : f32 to vector<8x32xf32>
    %cst_4 = arith.constant 1.000000e+00 : f32
    %9 = vector.broadcast %cst_4 : f32 to vector<8x32xf32>
    %10 = tpu.concatenate %8, %9 in 1 : vector<8x32xf32>, vector<8x32xf32> -> vector<8x64xf32>
    %11 = tpu.concatenate %10, %10, %10, %10 in 1 : vector<8x64xf32>, vector<8x64xf32>, vector<8x64xf32>, vector<8x64xf32> -> vector<8x256xf32>
    %cst_5 = arith.constant 5.000000e-01 : f32
    %12 = vector.broadcast %cst_5 : f32 to vector<8x256xf32>
    %13 = arith.cmpf ogt, %11, %12 : vector<8x256xf32>
    %c0_6 = arith.constant 0 : index
    %c0_7 = arith.constant 0 : index
    %14 = vector.load %arg3[%c0_6, %c0_7] : memref<16x256xf32, #tpu.memory_space<vmem>>, vector<16x256xf32>
    %cst_8 = arith.constant dense<0.000000e+00> : vector<64x256xf32>
    %15 = tpu.matmul %7, %14, %cst_8 {dimension_numbers = #tpu.dot_dimension_numbers<[1], [0], [0], [1], [0, 0, 1, 1], [], []>} : vector<64x16xf32>, vector<16x256xf32>, vector<64x256xf32> -> vector<64x256xf32>
    %c0_9 = arith.constant 0 : index
    %c0_10 = arith.constant 0 : index
    %16 = vector.load %arg5[%c0_9, %c0_10] : memref<1x256xf32, #tpu.memory_space<vmem>>, vector<1x256xf32>
    %17 = vector.broadcast %16 : vector<1x256xf32> to vector<64x256xf32>
    %18 = arith.addf %15, %17 : vector<64x256xf32>
    %c0_11 = arith.constant 0 : index
    %c0_12 = arith.constant 0 : index
    %19 = vector.load %arg12[%c0_11, %c0_12] : memref<64x256xf32, #tpu.memory_space<vmem>>, vector<64x256xf32>
    tpu.vector_store %arg12[%c0_11, %c0_12], %18 {strides = array<i32>} : memref<64x256xf32, #tpu.memory_space<vmem>>, vector<64x256xf32>,
    %cst_13 = arith.constant 0.000000e+00 : f32
    %20 = vector.broadcast %cst_13 : f32 to vector<8x64xf32>
    %cst_14 = arith.constant 0.000000e+00 : f32
    %21 = vector.broadcast %cst_14 : f32 to vector<8x64xf32>
    %c0_i32 = arith.constant 0 : i32
    %c7_i32 = arith.constant 7 : i32
    %22 = arith.subi %c7_i32, %c0_i32 : i32
    %c8_i32 = arith.constant 8 : i32
    %23 = arith.muli %c0_i32, %c8_i32 : i32
    %24 = tpu.assume_multiple %23, 8 : i32
    %c8_i32_15 = arith.constant 8 : i32
    %25 = arith.muli %22, %c8_i32_15 : i32
    %26 = tpu.assume_multiple %25, 8 : i32
    %27 = arith.index_cast %24 : i32 to index
    %c0_16 = arith.constant 0 : index
    %28 = vector.load %arg12[%27, %c0_16] : memref<64x256xf32, #tpu.memory_space<vmem>>, vector<8x256xf32>
    %29 = arith.index_cast %26 : i32 to index
    %c0_17 = arith.constant 0 : index
    %30 = vector.load %arg12[%29, %c0_17] : memref<64x256xf32, #tpu.memory_space<vmem>>, vector<8x256xf32>
    %31 = arith.select %13, %30, %28 : vector<8x256xi1>, vector<8x256xf32>
    %c0_18 = arith.constant 0 : index
    %c0_19 = arith.constant 0 : index
    %32 = vector.load %arg4[%c0_18, %c0_19] : memref<64x256xf32, #tpu.memory_space<vmem>>, vector<64x256xf32>
    %cst_20 = arith.constant dense<0.000000e+00> : vector<8x256xf32>
    %33 = tpu.matmul %20, %32, %cst_20 {dimension_numbers = #tpu.dot_dimension_numbers<[1], [0], [0], [1], [0, 0, 1, 1], [], []>} : vector<8x64xf32>, vector<64x256xf32>, vector<8x256xf32> -> vector<8x256xf32>
    %34 = arith.addf %31, %33 : vector<8x256xf32>
    %35 = vector.extract_strided_slice %34 {offsets = [0, 0], sizes = [8, 64], strides = [1, 1]} : vector<8x256xf32> to vector<8x64xf32>
    %36 = arith.negf %35 : vector<8x64xf32>
    %37 = math.exp %36 : vector<8x64xf32>
    %cst_21 = arith.constant 1.000000e+00 : f32
    %38 = vector.broadcast %cst_21 : f32 to vector<8x64xf32>
    %39 = arith.addf %38, %37 : vector<8x64xf32>
    %40 = arith.divf %38, %39 : vector<8x64xf32>
    %41 = vector.extract_strided_slice %34 {offsets = [0, 64], sizes = [8, 64], strides = [1, 1]} : vector<8x256xf32> to vector<8x64xf32>
    %42 = arith.negf %41 : vector<8x64xf32>
    %43 = math.exp %42 : vector<8x64xf32>
    %cst_22 = arith.constant 1.000000e+00 : f32
    %44 = vector.broadcast %cst_22 : f32 to vector<8x64xf32>
    %45 = arith.addf %44, %43 : vector<8x64xf32>
    %46 = arith.divf %44, %45 : vector<8x64xf32>
    %47 = vector.extract_strided_slice %34 {offsets = [0, 128], sizes = [8, 64], strides = [1, 1]} : vector<8x256xf32> to vector<8x64xf32>
    %48 = math.tanh %47 : vector<8x64xf32>
    %49 = vector.extract_strided_slice %34 {offsets = [0, 192], sizes = [8, 64], strides = [1, 1]} : vector<8x256xf32> to vector<8x64xf32>
    %50 = arith.negf %49 : vector<8x64xf32>
    %51 = math.exp %50 : vector<8x64xf32>
    %cst_23 = arith.constant 1.000000e+00 : f32
    %52 = vector.broadcast %cst_23 : f32 to vector<8x64xf32>
    %53 = arith.addf %52, %51 : vector<8x64xf32>
    %54 = arith.divf %52, %53 : vector<8x64xf32>
    %55 = arith.mulf %46, %21 : vector<8x64xf32>
    %56 = arith.mulf %40, %48 : vector<8x64xf32>
    %57 = arith.addf %55, %56 : vector<8x64xf32>
    %58 = math.tanh %57 : vector<8x64xf32>
    %59 = arith.mulf %54, %58 : vector<8x64xf32>
    %60 = vector.extract_strided_slice %59 {offsets = [0, 0], sizes = [8, 32], strides = [1, 1]} : vector<8x64xf32> to vector<8x32xf32>
    %61 = arith.index_cast %24 : i32 to index
    %c0_24 = arith.constant 0 : index
    %62 = vector.load %arg13[%61, %c0_24] : memref<64x32xf32, #tpu.memory_space<vmem>>, vector<8x32xf32>
    tpu.vector_store %arg13[%61, %c0_24], %60 {strides = array<i32>} : memref<64x32xf32, #tpu.memory_space<vmem>>, vector<8x32xf32>,
    %63 = vector.extract_strided_slice %59 {offsets = [0, 32], sizes = [8, 32], strides = [1, 1]} : vector<8x64xf32> to vector<8x32xf32>
    %64 = arith.index_cast %26 : i32 to index
    %c0_25 = arith.constant 0 : index
    %65 = vector.load %arg14[%64, %c0_25] : memref<64x32xf32, #tpu.memory_space<vmem>>, vector<8x32xf32>
    tpu.vector_store %arg14[%64, %c0_25], %63 {strides = array<i32>} : memref<64x32xf32, #tpu.memory_space<vmem>>, vector<8x32xf32>,
    %c1_i32 = arith.constant 1 : i32
    %c7_i32_26 = arith.constant 7 : i32
    %66 = arith.subi %c7_i32_26, %c1_i32 : i32
    %c8_i32_27 = arith.constant 8 : i32
    %67 = arith.muli %c1_i32, %c8_i32_27 : i32
    %68 = tpu.assume_multiple %67, 8 : i32
    %c8_i32_28 = arith.constant 8 : i32
    %69 = arith.muli %66, %c8_i32_28 : i32
    %70 = tpu.assume_multiple %69, 8 : i32
    %71 = arith.index_cast %68 : i32 to index
    %c0_29 = arith.constant 0 : index
    %72 = vector.load %arg12[%71, %c0_29] : memref<64x256xf32, #tpu.memory_space<vmem>>, vector<8x256xf32>
    %73 = arith.index_cast %70 : i32 to index
    %c0_30 = arith.constant 0 : index
    %74 = vector.load %arg12[%73, %c0_30] : memref<64x256xf32, #tpu.memory_space<vmem>>, vector<8x256xf32>
    %75 = arith.select %13, %74, %72 : vector<8x256xi1>, vector<8x256xf32>
    %c0_31 = arith.constant 0 : index
    %c0_32 = arith.constant 0 : index
    %76 = vector.load %arg4[%c0_31, %c0_32] : memref<64x256xf32, #tpu.memory_space<vmem>>, vector<64x256xf32>
    %cst_33 = arith.constant dense<0.000000e+00> : vector<8x256xf32>
    %77 = tpu.matmul %59, %76, %cst_33 {dimension_numbers = #tpu.dot_dimension_numbers<[1], [0], [0], [1], [0, 0, 1, 1], [], []>} : vector<8x64xf32>, vector<64x256xf32>, vector<8x256xf32> -> vector<8x256xf32>
    %78 = arith.addf %75, %77 : vector<8x256xf32>
    %79 = vector.extract_strided_slice %78 {offsets = [0, 0], sizes = [8, 64], strides = [1, 1]} : vector<8x256xf32> to vector<8x64xf32>
    %80 = arith.negf %79 : vector<8x64xf32>
    %81 = math.exp %80 : vector<8x64xf32>
    %cst_34 = arith.constant 1.000000e+00 : f32
    %82 = vector.broadcast %cst_34 : f32 to vector<8x64xf32>
    %83 = arith.addf %82, %81 : vector<8x64xf32>
    %84 = arith.divf %82, %83 : vector<8x64xf32>
    %85 = vector.extract_strided_slice %78 {offsets = [0, 64], sizes = [8, 64], strides = [1, 1]} : vector<8x256xf32> to vector<8x64xf32>
    %86 = arith.negf %85 : vector<8x64xf32>
    %87 = math.exp %86 : vector<8x64xf32>
    %cst_35 = arith.constant 1.000000e+00 : f32
    %88 = vector.broadcast %cst_35 : f32 to vector<8x64xf32>
    %89 = arith.addf %88, %87 : vector<8x64xf32>
    %90 = arith.divf %88, %89 : vector<8x64xf32>
    %91 = vector.extract_strided_slice %78 {offsets = [0, 128], sizes = [8, 64], strides = [1, 1]} : vector<8x256xf32> to vector<8x64xf32>
    %92 = math.tanh %91 : vector<8x64xf32>
    %93 = vector.extract_strided_slice %78 {offsets = [0, 192], sizes = [8, 64], strides = [1, 1]} : vector<8x256xf32> to vector<8x64xf32>
    %94 = arith.negf %93 : vector<8x64xf32>
    %95 = math.exp %94 : vector<8x64xf32>
    %cst_36 = arith.constant 1.000000e+00 : f32
    %96 = vector.broadcast %cst_36 : f32 to vector<8x64xf32>
    %97 = arith.addf %96, %95 : vector<8x64xf32>
    %98 = arith.divf %96, %97 : vector<8x64xf32>
    %99 = arith.mulf %90, %57 : vector<8x64xf32>
    %100 = arith.mulf %84, %92 : vector<8x64xf32>
    %101 = arith.addf %99, %100 : vector<8x64xf32>
    %102 = math.tanh %101 : vector<8x64xf32>
    %103 = arith.mulf %98, %102 : vector<8x64xf32>
    %104 = vector.extract_strided_slice %103 {offsets = [0, 0], sizes = [8, 32], strides = [1, 1]} : vector<8x64xf32> to vector<8x32xf32>
    %105 = arith.index_cast %68 : i32 to index
    %c0_37 = arith.constant 0 : index
    %106 = vector.load %arg13[%105, %c0_37] : memref<64x32xf32, #tpu.memory_space<vmem>>, vector<8x32xf32>
    tpu.vector_store %arg13[%105, %c0_37], %104 {strides = array<i32>} : memref<64x32xf32, #tpu.memory_space<vmem>>, vector<8x32xf32>,
    %107 = vector.extract_strided_slice %103 {offsets = [0, 32], sizes = [8, 32], strides = [1, 1]} : vector<8x64xf32> to vector<8x32xf32>
    %108 = arith.index_cast %70 : i32 to index
    %c0_38 = arith.constant 0 : index
    %109 = vector.load %arg14[%108, %c0_38] : memref<64x32xf32, #tpu.memory_space<vmem>>, vector<8x32xf32>
    tpu.vector_store %arg14[%108, %c0_38], %107 {strides = array<i32>} : memref<64x32xf32, #tpu.memory_space<vmem>>, vector<8x32xf32>,
    %c2_i32 = arith.constant 2 : i32
    %c7_i32_39 = arith.constant 7 : i32
    %110 = arith.subi %c7_i32_39, %c2_i32 : i32
    %c8_i32_40 = arith.constant 8 : i32
    %111 = arith.muli %c2_i32, %c8_i32_40 : i32
    %112 = tpu.assume_multiple %111, 8 : i32
    %c8_i32_41 = arith.constant 8 : i32
    %113 = arith.muli %110, %c8_i32_41 : i32
    %114 = tpu.assume_multiple %113, 8 : i32
    %115 = arith.index_cast %112 : i32 to index
    %c0_42 = arith.constant 0 : index
    %116 = vector.load %arg12[%115, %c0_42] : memref<64x256xf32, #tpu.memory_space<vmem>>, vector<8x256xf32>
    %117 = arith.index_cast %114 : i32 to index
    %c0_43 = arith.constant 0 : index
    %118 = vector.load %arg12[%117, %c0_43] : memref<64x256xf32, #tpu.memory_space<vmem>>, vector<8x256xf32>
    %119 = arith.select %13, %118, %116 : vector<8x256xi1>, vector<8x256xf32>
    %c0_44 = arith.constant 0 : index
    %c0_45 = arith.constant 0 : index
    %120 = vector.load %arg4[%c0_44, %c0_45] : memref<64x256xf32, #tpu.memory_space<vmem>>, vector<64x256xf32>
    %cst_46 = arith.constant dense<0.000000e+00> : vector<8x256xf32>
    %121 = tpu.matmul %103, %120, %cst_46 {dimension_numbers = #tpu.dot_dimension_numbers<[1], [0], [0], [1], [0, 0, 1, 1], [], []>} : vector<8x64xf32>, vector<64x256xf32>, vector<8x256xf32> -> vector<8x256xf32>
    %122 = arith.addf %119, %121 : vector<8x256xf32>
    %123 = vector.extract_strided_slice %122 {offsets = [0, 0], sizes = [8, 64], strides = [1, 1]} : vector<8x256xf32> to vector<8x64xf32>
    %124 = arith.negf %123 : vector<8x64xf32>
    %125 = math.exp %124 : vector<8x64xf32>
    %cst_47 = arith.constant 1.000000e+00 : f32
    %126 = vector.broadcast %cst_47 : f32 to vector<8x64xf32>
    %127 = arith.addf %126, %125 : vector<8x64xf32>
    %128 = arith.divf %126, %127 : vector<8x64xf32>
    %129 = vector.extract_strided_slice %122 {offsets = [0, 64], sizes = [8, 64], strides = [1, 1]} : vector<8x256xf32> to vector<8x64xf32>
    %130 = arith.negf %129 : vector<8x64xf32>
    %131 = math.exp %130 : vector<8x64xf32>
    %cst_48 = arith.constant 1.000000e+00 : f32
    %132 = vector.broadcast %cst_48 : f32 to vector<8x64xf32>
    %133 = arith.addf %132, %131 : vector<8x64xf32>
    %134 = arith.divf %132, %133 : vector<8x64xf32>
    %135 = vector.extract_strided_slice %122 {offsets = [0, 128], sizes = [8, 64], strides = [1, 1]} : vector<8x256xf32> to vector<8x64xf32>
    %136 = math.tanh %135 : vector<8x64xf32>
    %137 = vector.extract_strided_slice %122 {offsets = [0, 192], sizes = [8, 64], strides = [1, 1]} : vector<8x256xf32> to vector<8x64xf32>
    %138 = arith.negf %137 : vector<8x64xf32>
    %139 = math.exp %138 : vector<8x64xf32>
    %cst_49 = arith.constant 1.000000e+00 : f32
    %140 = vector.broadcast %cst_49 : f32 to vector<8x64xf32>
    %141 = arith.addf %140, %139 : vector<8x64xf32>
    %142 = arith.divf %140, %141 : vector<8x64xf32>
    %143 = arith.mulf %134, %101 : vector<8x64xf32>
    %144 = arith.mulf %128, %136 : vector<8x64xf32>
    %145 = arith.addf %143, %144 : vector<8x64xf32>
    %146 = math.tanh %145 : vector<8x64xf32>
    %147 = arith.mulf %142, %146 : vector<8x64xf32>
    %148 = vector.extract_strided_slice %147 {offsets = [0, 0], sizes = [8, 32], strides = [1, 1]} : vector<8x64xf32> to vector<8x32xf32>
    %149 = arith.index_cast %112 : i32 to index
    %c0_50 = arith.constant 0 : index
    %150 = vector.load %arg13[%149, %c0_50] : memref<64x32xf32, #tpu.memory_space<vmem>>, vector<8x32xf32>
    tpu.vector_store %arg13[%149, %c0_50], %148 {strides = array<i32>} : memref<64x32xf32, #tpu.memory_space<vmem>>, vector<8x32xf32>,
    %151 = vector.extract_strided_slice %147 {offsets = [0, 32], sizes = [8, 32], strides = [1, 1]} : vector<8x64xf32> to vector<8x32xf32>
    %152 = arith.index_cast %114 : i32 to index
    %c0_51 = arith.constant 0 : index
    %153 = vector.load %arg14[%152, %c0_51] : memref<64x32xf32, #tpu.memory_space<vmem>>, vector<8x32xf32>
    tpu.vector_store %arg14[%152, %c0_51], %151 {strides = array<i32>} : memref<64x32xf32, #tpu.memory_space<vmem>>, vector<8x32xf32>,
    %c3_i32 = arith.constant 3 : i32
    %c7_i32_52 = arith.constant 7 : i32
    %154 = arith.subi %c7_i32_52, %c3_i32 : i32
    %c8_i32_53 = arith.constant 8 : i32
    %155 = arith.muli %c3_i32, %c8_i32_53 : i32
    %156 = tpu.assume_multiple %155, 8 : i32
    %c8_i32_54 = arith.constant 8 : i32
    %157 = arith.muli %154, %c8_i32_54 : i32
    %158 = tpu.assume_multiple %157, 8 : i32
    %159 = arith.index_cast %156 : i32 to index
    %c0_55 = arith.constant 0 : index
    %160 = vector.load %arg12[%159, %c0_55] : memref<64x256xf32, #tpu.memory_space<vmem>>, vector<8x256xf32>
    %161 = arith.index_cast %158 : i32 to index
    %c0_56 = arith.constant 0 : index
    %162 = vector.load %arg12[%161, %c0_56] : memref<64x256xf32, #tpu.memory_space<vmem>>, vector<8x256xf32>
    %163 = arith.select %13, %162, %160 : vector<8x256xi1>, vector<8x256xf32>
    %c0_57 = arith.constant 0 : index
    %c0_58 = arith.constant 0 : index
    %164 = vector.load %arg4[%c0_57, %c0_58] : memref<64x256xf32, #tpu.memory_space<vmem>>, vector<64x256xf32>
    %cst_59 = arith.constant dense<0.000000e+00> : vector<8x256xf32>
    %165 = tpu.matmul %147, %164, %cst_59 {dimension_numbers = #tpu.dot_dimension_numbers<[1], [0], [0], [1], [0, 0, 1, 1], [], []>} : vector<8x64xf32>, vector<64x256xf32>, vector<8x256xf32> -> vector<8x256xf32>
    %166 = arith.addf %163, %165 : vector<8x256xf32>
    %167 = vector.extract_strided_slice %166 {offsets = [0, 0], sizes = [8, 64], strides = [1, 1]} : vector<8x256xf32> to vector<8x64xf32>
    %168 = arith.negf %167 : vector<8x64xf32>
    %169 = math.exp %168 : vector<8x64xf32>
    %cst_60 = arith.constant 1.000000e+00 : f32
    %170 = vector.broadcast %cst_60 : f32 to vector<8x64xf32>
    %171 = arith.addf %170, %169 : vector<8x64xf32>
    %172 = arith.divf %170, %171 : vector<8x64xf32>
    %173 = vector.extract_strided_slice %166 {offsets = [0, 64], sizes = [8, 64], strides = [1, 1]} : vector<8x256xf32> to vector<8x64xf32>
    %174 = arith.negf %173 : vector<8x64xf32>
    %175 = math.exp %174 : vector<8x64xf32>
    %cst_61 = arith.constant 1.000000e+00 : f32
    %176 = vector.broadcast %cst_61 : f32 to vector<8x64xf32>
    %177 = arith.addf %176, %175 : vector<8x64xf32>
    %178 = arith.divf %176, %177 : vector<8x64xf32>
    %179 = vector.extract_strided_slice %166 {offsets = [0, 128], sizes = [8, 64], strides = [1, 1]} : vector<8x256xf32> to vector<8x64xf32>
    %180 = math.tanh %179 : vector<8x64xf32>
    %181 = vector.extract_strided_slice %166 {offsets = [0, 192], sizes = [8, 64], strides = [1, 1]} : vector<8x256xf32> to vector<8x64xf32>
    %182 = arith.negf %181 : vector<8x64xf32>
    %183 = math.exp %182 : vector<8x64xf32>
    %cst_62 = arith.constant 1.000000e+00 : f32
    %184 = vector.broadcast %cst_62 : f32 to vector<8x64xf32>
    %185 = arith.addf %184, %183 : vector<8x64xf32>
    %186 = arith.divf %184, %185 : vector<8x64xf32>
    %187 = arith.mulf %178, %145 : vector<8x64xf32>
    %188 = arith.mulf %172, %180 : vector<8x64xf32>
    %189 = arith.addf %187, %188 : vector<8x64xf32>
    %190 = math.tanh %189 : vector<8x64xf32>
    %191 = arith.mulf %186, %190 : vector<8x64xf32>
    %192 = vector.extract_strided_slice %191 {offsets = [0, 0], sizes = [8, 32], strides = [1, 1]} : vector<8x64xf32> to vector<8x32xf32>
    %193 = arith.index_cast %156 : i32 to index
    %c0_63 = arith.constant 0 : index
    %194 = vector.load %arg13[%193, %c0_63] : memref<64x32xf32, #tpu.memory_space<vmem>>, vector<8x32xf32>
    tpu.vector_store %arg13[%193, %c0_63], %192 {strides = array<i32>} : memref<64x32xf32, #tpu.memory_space<vmem>>, vector<8x32xf32>,
    %195 = vector.extract_strided_slice %191 {offsets = [0, 32], sizes = [8, 32], strides = [1, 1]} : vector<8x64xf32> to vector<8x32xf32>
    %196 = arith.index_cast %158 : i32 to index
    %c0_64 = arith.constant 0 : index
    %197 = vector.load %arg14[%196, %c0_64] : memref<64x32xf32, #tpu.memory_space<vmem>>, vector<8x32xf32>
    tpu.vector_store %arg14[%196, %c0_64], %195 {strides = array<i32>} : memref<64x32xf32, #tpu.memory_space<vmem>>, vector<8x32xf32>,
    %c4_i32 = arith.constant 4 : i32
    %c7_i32_65 = arith.constant 7 : i32
    %198 = arith.subi %c7_i32_65, %c4_i32 : i32
    %c8_i32_66 = arith.constant 8 : i32
    %199 = arith.muli %c4_i32, %c8_i32_66 : i32
    %200 = tpu.assume_multiple %199, 8 : i32
    %c8_i32_67 = arith.constant 8 : i32
    %201 = arith.muli %198, %c8_i32_67 : i32
    %202 = tpu.assume_multiple %201, 8 : i32
    %203 = arith.index_cast %200 : i32 to index
    %c0_68 = arith.constant 0 : index
    %204 = vector.load %arg12[%203, %c0_68] : memref<64x256xf32, #tpu.memory_space<vmem>>, vector<8x256xf32>
    %205 = arith.index_cast %202 : i32 to index
    %c0_69 = arith.constant 0 : index
    %206 = vector.load %arg12[%205, %c0_69] : memref<64x256xf32, #tpu.memory_space<vmem>>, vector<8x256xf32>
    %207 = arith.select %13, %206, %204 : vector<8x256xi1>, vector<8x256xf32>
    %c0_70 = arith.constant 0 : index
    %c0_71 = arith.constant 0 : index
    %208 = vector.load %arg4[%c0_70, %c0_71] : memref<64x256xf32, #tpu.memory_space<vmem>>, vector<64x256xf32>
    %cst_72 = arith.constant dense<0.000000e+00> : vector<8x256xf32>
    %209 = tpu.matmul %191, %208, %cst_72 {dimension_numbers = #tpu.dot_dimension_numbers<[1], [0], [0], [1], [0, 0, 1, 1], [], []>} : vector<8x64xf32>, vector<64x256xf32>, vector<8x256xf32> -> vector<8x256xf32>
    %210 = arith.addf %207, %209 : vector<8x256xf32>
    %211 = vector.extract_strided_slice %210 {offsets = [0, 0], sizes = [8, 64], strides = [1, 1]} : vector<8x256xf32> to vector<8x64xf32>
    %212 = arith.negf %211 : vector<8x64xf32>
    %213 = math.exp %212 : vector<8x64xf32>
    %cst_73 = arith.constant 1.000000e+00 : f32
    %214 = vector.broadcast %cst_73 : f32 to vector<8x64xf32>
    %215 = arith.addf %214, %213 : vector<8x64xf32>
    %216 = arith.divf %214, %215 : vector<8x64xf32>
    %217 = vector.extract_strided_slice %210 {offsets = [0, 64], sizes = [8, 64], strides = [1, 1]} : vector<8x256xf32> to vector<8x64xf32>
    %218 = arith.negf %217 : vector<8x64xf32>
    %219 = math.exp %218 : vector<8x64xf32>
    %cst_74 = arith.constant 1.000000e+00 : f32
    %220 = vector.broadcast %cst_74 : f32 to vector<8x64xf32>
    %221 = arith.addf %220, %219 : vector<8x64xf32>
    %222 = arith.divf %220, %221 : vector<8x64xf32>
    %223 = vector.extract_strided_slice %210 {offsets = [0, 128], sizes = [8, 64], strides = [1, 1]} : vector<8x256xf32> to vector<8x64xf32>
    %224 = math.tanh %223 : vector<8x64xf32>
    %225 = vector.extract_strided_slice %210 {offsets = [0, 192], sizes = [8, 64], strides = [1, 1]} : vector<8x256xf32> to vector<8x64xf32>
    %226 = arith.negf %225 : vector<8x64xf32>
    %227 = math.exp %226 : vector<8x64xf32>
    %cst_75 = arith.constant 1.000000e+00 : f32
    %228 = vector.broadcast %cst_75 : f32 to vector<8x64xf32>
    %229 = arith.addf %228, %227 : vector<8x64xf32>
    %230 = arith.divf %228, %229 : vector<8x64xf32>
    %231 = arith.mulf %222, %189 : vector<8x64xf32>
    %232 = arith.mulf %216, %224 : vector<8x64xf32>
    %233 = arith.addf %231, %232 : vector<8x64xf32>
    %234 = math.tanh %233 : vector<8x64xf32>
    %235 = arith.mulf %230, %234 : vector<8x64xf32>
    %236 = vector.extract_strided_slice %235 {offsets = [0, 0], sizes = [8, 32], strides = [1, 1]} : vector<8x64xf32> to vector<8x32xf32>
    %237 = arith.index_cast %200 : i32 to index
    %c0_76 = arith.constant 0 : index
    %238 = vector.load %arg13[%237, %c0_76] : memref<64x32xf32, #tpu.memory_space<vmem>>, vector<8x32xf32>
    tpu.vector_store %arg13[%237, %c0_76], %236 {strides = array<i32>} : memref<64x32xf32, #tpu.memory_space<vmem>>, vector<8x32xf32>,
    %239 = vector.extract_strided_slice %235 {offsets = [0, 32], sizes = [8, 32], strides = [1, 1]} : vector<8x64xf32> to vector<8x32xf32>
    %240 = arith.index_cast %202 : i32 to index
    %c0_77 = arith.constant 0 : index
    %241 = vector.load %arg14[%240, %c0_77] : memref<64x32xf32, #tpu.memory_space<vmem>>, vector<8x32xf32>
    tpu.vector_store %arg14[%240, %c0_77], %239 {strides = array<i32>} : memref<64x32xf32, #tpu.memory_space<vmem>>, vector<8x32xf32>,
    %c5_i32 = arith.constant 5 : i32
    %c7_i32_78 = arith.constant 7 : i32
    %242 = arith.subi %c7_i32_78, %c5_i32 : i32
    %c8_i32_79 = arith.constant 8 : i32
    %243 = arith.muli %c5_i32, %c8_i32_79 : i32
    %244 = tpu.assume_multiple %243, 8 : i32
    %c8_i32_80 = arith.constant 8 : i32
    %245 = arith.muli %242, %c8_i32_80 : i32
    %246 = tpu.assume_multiple %245, 8 : i32
    %247 = arith.index_cast %244 : i32 to index
    %c0_81 = arith.constant 0 : index
    %248 = vector.load %arg12[%247, %c0_81] : memref<64x256xf32, #tpu.memory_space<vmem>>, vector<8x256xf32>
    %249 = arith.index_cast %246 : i32 to index
    %c0_82 = arith.constant 0 : index
    %250 = vector.load %arg12[%249, %c0_82] : memref<64x256xf32, #tpu.memory_space<vmem>>, vector<8x256xf32>
    %251 = arith.select %13, %250, %248 : vector<8x256xi1>, vector<8x256xf32>
    %c0_83 = arith.constant 0 : index
    %c0_84 = arith.constant 0 : index
    %252 = vector.load %arg4[%c0_83, %c0_84] : memref<64x256xf32, #tpu.memory_space<vmem>>, vector<64x256xf32>
    %cst_85 = arith.constant dense<0.000000e+00> : vector<8x256xf32>
    %253 = tpu.matmul %235, %252, %cst_85 {dimension_numbers = #tpu.dot_dimension_numbers<[1], [0], [0], [1], [0, 0, 1, 1], [], []>} : vector<8x64xf32>, vector<64x256xf32>, vector<8x256xf32> -> vector<8x256xf32>
    %254 = arith.addf %251, %253 : vector<8x256xf32>
    %255 = vector.extract_strided_slice %254 {offsets = [0, 0], sizes = [8, 64], strides = [1, 1]} : vector<8x256xf32> to vector<8x64xf32>
    %256 = arith.negf %255 : vector<8x64xf32>
    %257 = math.exp %256 : vector<8x64xf32>
    %cst_86 = arith.constant 1.000000e+00 : f32
    %258 = vector.broadcast %cst_86 : f32 to vector<8x64xf32>
    %259 = arith.addf %258, %257 : vector<8x64xf32>
    %260 = arith.divf %258, %259 : vector<8x64xf32>
    %261 = vector.extract_strided_slice %254 {offsets = [0, 64], sizes = [8, 64], strides = [1, 1]} : vector<8x256xf32> to vector<8x64xf32>
    %262 = arith.negf %261 : vector<8x64xf32>
    %263 = math.exp %262 : vector<8x64xf32>
    %cst_87 = arith.constant 1.000000e+00 : f32
    %264 = vector.broadcast %cst_87 : f32 to vector<8x64xf32>
    %265 = arith.addf %264, %263 : vector<8x64xf32>
    %266 = arith.divf %264, %265 : vector<8x64xf32>
    %267 = vector.extract_strided_slice %254 {offsets = [0, 128], sizes = [8, 64], strides = [1, 1]} : vector<8x256xf32> to vector<8x64xf32>
    %268 = math.tanh %267 : vector<8x64xf32>
    %269 = vector.extract_strided_slice %254 {offsets = [0, 192], sizes = [8, 64], strides = [1, 1]} : vector<8x256xf32> to vector<8x64xf32>
    %270 = arith.negf %269 : vector<8x64xf32>
    %271 = math.exp %270 : vector<8x64xf32>
    %cst_88 = arith.constant 1.000000e+00 : f32
    %272 = vector.broadcast %cst_88 : f32 to vector<8x64xf32>
    %273 = arith.addf %272, %271 : vector<8x64xf32>
    %274 = arith.divf %272, %273 : vector<8x64xf32>
    %275 = arith.mulf %266, %233 : vector<8x64xf32>
    %276 = arith.mulf %260, %268 : vector<8x64xf32>
    %277 = arith.addf %275, %276 : vector<8x64xf32>
    %278 = math.tanh %277 : vector<8x64xf32>
    %279 = arith.mulf %274, %278 : vector<8x64xf32>
    %280 = vector.extract_strided_slice %279 {offsets = [0, 0], sizes = [8, 32], strides = [1, 1]} : vector<8x64xf32> to vector<8x32xf32>
    %281 = arith.index_cast %244 : i32 to index
    %c0_89 = arith.constant 0 : index
    %282 = vector.load %arg13[%281, %c0_89] : memref<64x32xf32, #tpu.memory_space<vmem>>, vector<8x32xf32>
    tpu.vector_store %arg13[%281, %c0_89], %280 {strides = array<i32>} : memref<64x32xf32, #tpu.memory_space<vmem>>, vector<8x32xf32>,
    %283 = vector.extract_strided_slice %279 {offsets = [0, 32], sizes = [8, 32], strides = [1, 1]} : vector<8x64xf32> to vector<8x32xf32>
    %284 = arith.index_cast %246 : i32 to index
    %c0_90 = arith.constant 0 : index
    %285 = vector.load %arg14[%284, %c0_90] : memref<64x32xf32, #tpu.memory_space<vmem>>, vector<8x32xf32>
    tpu.vector_store %arg14[%284, %c0_90], %283 {strides = array<i32>} : memref<64x32xf32, #tpu.memory_space<vmem>>, vector<8x32xf32>,
    %c6_i32 = arith.constant 6 : i32
    %c7_i32_91 = arith.constant 7 : i32
    %286 = arith.subi %c7_i32_91, %c6_i32 : i32
    %c8_i32_92 = arith.constant 8 : i32
    %287 = arith.muli %c6_i32, %c8_i32_92 : i32
    %288 = tpu.assume_multiple %287, 8 : i32
    %c8_i32_93 = arith.constant 8 : i32
    %289 = arith.muli %286, %c8_i32_93 : i32
    %290 = tpu.assume_multiple %289, 8 : i32
    %291 = arith.index_cast %288 : i32 to index
    %c0_94 = arith.constant 0 : index
    %292 = vector.load %arg12[%291, %c0_94] : memref<64x256xf32, #tpu.memory_space<vmem>>, vector<8x256xf32>
    %293 = arith.index_cast %290 : i32 to index
    %c0_95 = arith.constant 0 : index
    %294 = vector.load %arg12[%293, %c0_95] : memref<64x256xf32, #tpu.memory_space<vmem>>, vector<8x256xf32>
    %295 = arith.select %13, %294, %292 : vector<8x256xi1>, vector<8x256xf32>
    %c0_96 = arith.constant 0 : index
    %c0_97 = arith.constant 0 : index
    %296 = vector.load %arg4[%c0_96, %c0_97] : memref<64x256xf32, #tpu.memory_space<vmem>>, vector<64x256xf32>
    %cst_98 = arith.constant dense<0.000000e+00> : vector<8x256xf32>
    %297 = tpu.matmul %279, %296, %cst_98 {dimension_numbers = #tpu.dot_dimension_numbers<[1], [0], [0], [1], [0, 0, 1, 1], [], []>} : vector<8x64xf32>, vector<64x256xf32>, vector<8x256xf32> -> vector<8x256xf32>
    %298 = arith.addf %295, %297 : vector<8x256xf32>
    %299 = vector.extract_strided_slice %298 {offsets = [0, 0], sizes = [8, 64], strides = [1, 1]} : vector<8x256xf32> to vector<8x64xf32>
    %300 = arith.negf %299 : vector<8x64xf32>
    %301 = math.exp %300 : vector<8x64xf32>
    %cst_99 = arith.constant 1.000000e+00 : f32
    %302 = vector.broadcast %cst_99 : f32 to vector<8x64xf32>
    %303 = arith.addf %302, %301 : vector<8x64xf32>
    %304 = arith.divf %302, %303 : vector<8x64xf32>
    %305 = vector.extract_strided_slice %298 {offsets = [0, 64], sizes = [8, 64], strides = [1, 1]} : vector<8x256xf32> to vector<8x64xf32>
    %306 = arith.negf %305 : vector<8x64xf32>
    %307 = math.exp %306 : vector<8x64xf32>
    %cst_100 = arith.constant 1.000000e+00 : f32
    %308 = vector.broadcast %cst_100 : f32 to vector<8x64xf32>
    %309 = arith.addf %308, %307 : vector<8x64xf32>
    %310 = arith.divf %308, %309 : vector<8x64xf32>
    %311 = vector.extract_strided_slice %298 {offsets = [0, 128], sizes = [8, 64], strides = [1, 1]} : vector<8x256xf32> to vector<8x64xf32>
    %312 = math.tanh %311 : vector<8x64xf32>
    %313 = vector.extract_strided_slice %298 {offsets = [0, 192], sizes = [8, 64], strides = [1, 1]} : vector<8x256xf32> to vector<8x64xf32>
    %314 = arith.negf %313 : vector<8x64xf32>
    %315 = math.exp %314 : vector<8x64xf32>
    %cst_101 = arith.constant 1.000000e+00 : f32
    %316 = vector.broadcast %cst_101 : f32 to vector<8x64xf32>
    %317 = arith.addf %316, %315 : vector<8x64xf32>
    %318 = arith.divf %316, %317 : vector<8x64xf32>
    %319 = arith.mulf %310, %277 : vector<8x64xf32>
    %320 = arith.mulf %304, %312 : vector<8x64xf32>
    %321 = arith.addf %319, %320 : vector<8x64xf32>
    %322 = math.tanh %321 : vector<8x64xf32>
    %323 = arith.mulf %318, %322 : vector<8x64xf32>
    %324 = vector.extract_strided_slice %323 {offsets = [0, 0], sizes = [8, 32], strides = [1, 1]} : vector<8x64xf32> to vector<8x32xf32>
    %325 = arith.index_cast %288 : i32 to index
    %c0_102 = arith.constant 0 : index
    %326 = vector.load %arg13[%325, %c0_102] : memref<64x32xf32, #tpu.memory_space<vmem>>, vector<8x32xf32>
    tpu.vector_store %arg13[%325, %c0_102], %324 {strides = array<i32>} : memref<64x32xf32, #tpu.memory_space<vmem>>, vector<8x32xf32>,
    %327 = vector.extract_strided_slice %323 {offsets = [0, 32], sizes = [8, 32], strides = [1, 1]} : vector<8x64xf32> to vector<8x32xf32>
    %328 = arith.index_cast %290 : i32 to index
    %c0_103 = arith.constant 0 : index
    %329 = vector.load %arg14[%328, %c0_103] : memref<64x32xf32, #tpu.memory_space<vmem>>, vector<8x32xf32>
    tpu.vector_store %arg14[%328, %c0_103], %327 {strides = array<i32>} : memref<64x32xf32, #tpu.memory_space<vmem>>, vector<8x32xf32>,
    %c7_i32_104 = arith.constant 7 : i32
    %c7_i32_105 = arith.constant 7 : i32
    %330 = arith.subi %c7_i32_105, %c7_i32_104 : i32
    %c8_i32_106 = arith.constant 8 : i32
    %331 = arith.muli %c7_i32_104, %c8_i32_106 : i32
    %332 = tpu.assume_multiple %331, 8 : i32
    %c8_i32_107 = arith.constant 8 : i32
    %333 = arith.muli %330, %c8_i32_107 : i32
    %334 = tpu.assume_multiple %333, 8 : i32
    %335 = arith.index_cast %332 : i32 to index
    %c0_108 = arith.constant 0 : index
    %336 = vector.load %arg12[%335, %c0_108] : memref<64x256xf32, #tpu.memory_space<vmem>>, vector<8x256xf32>
    %337 = arith.index_cast %334 : i32 to index
    %c0_109 = arith.constant 0 : index
    %338 = vector.load %arg12[%337, %c0_109] : memref<64x256xf32, #tpu.memory_space<vmem>>, vector<8x256xf32>
    %339 = arith.select %13, %338, %336 : vector<8x256xi1>, vector<8x256xf32>
    %c0_110 = arith.constant 0 : index
    %c0_111 = arith.constant 0 : index
    %340 = vector.load %arg4[%c0_110, %c0_111] : memref<64x256xf32, #tpu.memory_space<vmem>>, vector<64x256xf32>
    %cst_112 = arith.constant dense<0.000000e+00> : vector<8x256xf32>
    %341 = tpu.matmul %323, %340, %cst_112 {dimension_numbers = #tpu.dot_dimension_numbers<[1], [0], [0], [1], [0, 0, 1, 1], [], []>} : vector<8x64xf32>, vector<64x256xf32>, vector<8x256xf32> -> vector<8x256xf32>
    %342 = arith.addf %339, %341 : vector<8x256xf32>
    %343 = vector.extract_strided_slice %342 {offsets = [0, 0], sizes = [8, 64], strides = [1, 1]} : vector<8x256xf32> to vector<8x64xf32>
    %344 = arith.negf %343 : vector<8x64xf32>
    %345 = math.exp %344 : vector<8x64xf32>
    %cst_113 = arith.constant 1.000000e+00 : f32
    %346 = vector.broadcast %cst_113 : f32 to vector<8x64xf32>
    %347 = arith.addf %346, %345 : vector<8x64xf32>
    %348 = arith.divf %346, %347 : vector<8x64xf32>
    %349 = vector.extract_strided_slice %342 {offsets = [0, 64], sizes = [8, 64], strides = [1, 1]} : vector<8x256xf32> to vector<8x64xf32>
    %350 = arith.negf %349 : vector<8x64xf32>
    %351 = math.exp %350 : vector<8x64xf32>
    %cst_114 = arith.constant 1.000000e+00 : f32
    %352 = vector.broadcast %cst_114 : f32 to vector<8x64xf32>
    %353 = arith.addf %352, %351 : vector<8x64xf32>
    %354 = arith.divf %352, %353 : vector<8x64xf32>
    %355 = vector.extract_strided_slice %342 {offsets = [0, 128], sizes = [8, 64], strides = [1, 1]} : vector<8x256xf32> to vector<8x64xf32>
    %356 = math.tanh %355 : vector<8x64xf32>
    %357 = vector.extract_strided_slice %342 {offsets = [0, 192], sizes = [8, 64], strides = [1, 1]} : vector<8x256xf32> to vector<8x64xf32>
    %358 = arith.negf %357 : vector<8x64xf32>
    %359 = math.exp %358 : vector<8x64xf32>
    %cst_115 = arith.constant 1.000000e+00 : f32
    %360 = vector.broadcast %cst_115 : f32 to vector<8x64xf32>
    %361 = arith.addf %360, %359 : vector<8x64xf32>
    %362 = arith.divf %360, %361 : vector<8x64xf32>
    %363 = arith.mulf %354, %321 : vector<8x64xf32>
    %364 = arith.mulf %348, %356 : vector<8x64xf32>
    %365 = arith.addf %363, %364 : vector<8x64xf32>
    %366 = math.tanh %365 : vector<8x64xf32>
    %367 = arith.mulf %362, %366 : vector<8x64xf32>
    %368 = vector.extract_strided_slice %367 {offsets = [0, 0], sizes = [8, 32], strides = [1, 1]} : vector<8x64xf32> to vector<8x32xf32>
    %369 = arith.index_cast %332 : i32 to index
    %c0_116 = arith.constant 0 : index
    %370 = vector.load %arg13[%369, %c0_116] : memref<64x32xf32, #tpu.memory_space<vmem>>, vector<8x32xf32>
    tpu.vector_store %arg13[%369, %c0_116], %368 {strides = array<i32>} : memref<64x32xf32, #tpu.memory_space<vmem>>, vector<8x32xf32>,
    %371 = vector.extract_strided_slice %367 {offsets = [0, 32], sizes = [8, 32], strides = [1, 1]} : vector<8x64xf32> to vector<8x32xf32>
    %372 = arith.index_cast %334 : i32 to index
    %c0_117 = arith.constant 0 : index
    %373 = vector.load %arg14[%372, %c0_117] : memref<64x32xf32, #tpu.memory_space<vmem>>, vector<8x32xf32>
    tpu.vector_store %arg14[%372, %c0_117], %371 {strides = array<i32>} : memref<64x32xf32, #tpu.memory_space<vmem>>, vector<8x32xf32>,
    %c8_i32_118 = arith.constant 8 : i32
    %c0_119 = arith.constant 0 : index
    %c0_120 = arith.constant 0 : index
    %374 = vector.load %arg13[%c0_119, %c0_120] : memref<64x32xf32, #tpu.memory_space<vmem>>, vector<64x32xf32>
    %c0_121 = arith.constant 0 : index
    %c0_122 = arith.constant 0 : index
    %375 = vector.load %arg6[%c0_121, %c0_122] : memref<64x256xf32, #tpu.memory_space<vmem>>, vector<32x256xf32>
    %cst_123 = arith.constant dense<0.000000e+00> : vector<64x256xf32>
    %376 = tpu.matmul %374, %375, %cst_123 {dimension_numbers = #tpu.dot_dimension_numbers<[1], [0], [0], [1], [0, 0, 1, 1], [], []>} : vector<64x32xf32>, vector<32x256xf32>, vector<64x256xf32> -> vector<64x256xf32>
    %c0_124 = arith.constant 0 : index
    %c0_125 = arith.constant 0 : index
    %377 = vector.load %arg14[%c0_124, %c0_125] : memref<64x32xf32, #tpu.memory_space<vmem>>, vector<64x32xf32>
    %c32 = arith.constant 32 : index
    %c0_126 = arith.constant 0 : index
    %378 = vector.load %arg6[%c32, %c0_126] : memref<64x256xf32, #tpu.memory_space<vmem>>, vector<32x256xf32>
    %cst_127 = arith.constant dense<0.000000e+00> : vector<64x256xf32>
    %379 = tpu.matmul %377, %378, %cst_127 {dimension_numbers = #tpu.dot_dimension_numbers<[1], [0], [0], [1], [0, 0, 1, 1], [], []>} : vector<64x32xf32>, vector<32x256xf32>, vector<64x256xf32> -> vector<64x256xf32>
    %380 = arith.addf %376, %379 : vector<64x256xf32>
    %c0_128 = arith.constant 0 : index
    %c0_129 = arith.constant 0 : index
    %381 = vector.load %arg8[%c0_128, %c0_129] : memref<1x256xf32, #tpu.memory_space<vmem>>, vector<1x256xf32>
    %382 = vector.broadcast %381 : vector<1x256xf32> to vector<64x256xf32>
    %383 = arith.addf %380, %382 : vector<64x256xf32>
    %c0_130 = arith.constant 0 : index
    %c0_131 = arith.constant 0 : index
    %384 = vector.load %arg12[%c0_130, %c0_131] : memref<64x256xf32, #tpu.memory_space<vmem>>, vector<64x256xf32>
    tpu.vector_store %arg12[%c0_130, %c0_131], %383 {strides = array<i32>} : memref<64x256xf32, #tpu.memory_space<vmem>>, vector<64x256xf32>,
    %cst_132 = arith.constant 0.000000e+00 : f32
    %385 = vector.broadcast %cst_132 : f32 to vector<8x64xf32>
    %cst_133 = arith.constant 0.000000e+00 : f32
    %386 = vector.broadcast %cst_133 : f32 to vector<8x64xf32>
    %c0_i32_134 = arith.constant 0 : i32
    %c7_i32_135 = arith.constant 7 : i32
    %387 = arith.subi %c7_i32_135, %c0_i32_134 : i32
    %c8_i32_136 = arith.constant 8 : i32
    %388 = arith.muli %c0_i32_134, %c8_i32_136 : i32
    %389 = tpu.assume_multiple %388, 8 : i32
    %c8_i32_137 = arith.constant 8 : i32
    %390 = arith.muli %387, %c8_i32_137 : i32
    %391 = tpu.assume_multiple %390, 8 : i32
    %392 = arith.index_cast %389 : i32 to index
    %c0_138 = arith.constant 0 : index
    %393 = vector.load %arg12[%392, %c0_138] : memref<64x256xf32, #tpu.memory_space<vmem>>, vector<8x256xf32>
    %394 = arith.index_cast %391 : i32 to index
    %c0_139 = arith.constant 0 : index
    %395 = vector.load %arg12[%394, %c0_139] : memref<64x256xf32, #tpu.memory_space<vmem>>, vector<8x256xf32>
    %396 = arith.select %13, %395, %393 : vector<8x256xi1>, vector<8x256xf32>
    %c0_140 = arith.constant 0 : index
    %c0_141 = arith.constant 0 : index
    %397 = vector.load %arg7[%c0_140, %c0_141] : memref<64x256xf32, #tpu.memory_space<vmem>>, vector<64x256xf32>
    %cst_142 = arith.constant dense<0.000000e+00> : vector<8x256xf32>
    %398 = tpu.matmul %385, %397, %cst_142 {dimension_numbers = #tpu.dot_dimension_numbers<[1], [0], [0], [1], [0, 0, 1, 1], [], []>} : vector<8x64xf32>, vector<64x256xf32>, vector<8x256xf32> -> vector<8x256xf32>
    %399 = arith.addf %396, %398 : vector<8x256xf32>
    %400 = vector.extract_strided_slice %399 {offsets = [0, 0], sizes = [8, 64], strides = [1, 1]} : vector<8x256xf32> to vector<8x64xf32>
    %401 = arith.negf %400 : vector<8x64xf32>
    %402 = math.exp %401 : vector<8x64xf32>
    %cst_143 = arith.constant 1.000000e+00 : f32
    %403 = vector.broadcast %cst_143 : f32 to vector<8x64xf32>
    %404 = arith.addf %403, %402 : vector<8x64xf32>
    %405 = arith.divf %403, %404 : vector<8x64xf32>
    %406 = vector.extract_strided_slice %399 {offsets = [0, 64], sizes = [8, 64], strides = [1, 1]} : vector<8x256xf32> to vector<8x64xf32>
    %407 = arith.negf %406 : vector<8x64xf32>
    %408 = math.exp %407 : vector<8x64xf32>
    %cst_144 = arith.constant 1.000000e+00 : f32
    %409 = vector.broadcast %cst_144 : f32 to vector<8x64xf32>
    %410 = arith.addf %409, %408 : vector<8x64xf32>
    %411 = arith.divf %409, %410 : vector<8x64xf32>
    %412 = vector.extract_strided_slice %399 {offsets = [0, 128], sizes = [8, 64], strides = [1, 1]} : vector<8x256xf32> to vector<8x64xf32>
    %413 = math.tanh %412 : vector<8x64xf32>
    %414 = vector.extract_strided_slice %399 {offsets = [0, 192], sizes = [8, 64], strides = [1, 1]} : vector<8x256xf32> to vector<8x64xf32>
    %415 = arith.negf %414 : vector<8x64xf32>
    %416 = math.exp %415 : vector<8x64xf32>
    %cst_145 = arith.constant 1.000000e+00 : f32
    %417 = vector.broadcast %cst_145 : f32 to vector<8x64xf32>
    %418 = arith.addf %417, %416 : vector<8x64xf32>
    %419 = arith.divf %417, %418 : vector<8x64xf32>
    %420 = arith.mulf %411, %386 : vector<8x64xf32>
    %421 = arith.mulf %405, %413 : vector<8x64xf32>
    %422 = arith.addf %420, %421 : vector<8x64xf32>
    %423 = math.tanh %422 : vector<8x64xf32>
    %424 = arith.mulf %419, %423 : vector<8x64xf32>
    %c0_i32_146 = arith.constant 0 : i32
    %425 = arith.cmpi eq, %c0_i32_134, %c0_i32_146 : i32
    %426 = arith.extui %425 : i1 to i32
    %c0_i32_147 = arith.constant 0 : i32
    %427 = arith.cmpi ne, %426, %c0_i32_147 : i32
    scf.if %427 {
      %736 = vector.extract_strided_slice %424 {offsets = [0, 32], sizes = [8, 32], strides = [1, 1]} : vector<8x64xf32> to vector<8x32xf32>
      %c0_261 = arith.constant 0 : index
      %c0_262 = arith.constant 0 : index
      %737 = vector.load %arg15[%c0_261, %c0_262] : memref<8x32xf32, #tpu.memory_space<vmem>>, vector<8x32xf32>
      tpu.vector_store %arg15[%c0_261, %c0_262], %736 {strides = array<i32>} : memref<8x32xf32, #tpu.memory_space<vmem>>, vector<8x32xf32>,
    } else {
    }
    %c1_i32_148 = arith.constant 1 : i32
    %c7_i32_149 = arith.constant 7 : i32
    %428 = arith.subi %c7_i32_149, %c1_i32_148 : i32
    %c8_i32_150 = arith.constant 8 : i32
    %429 = arith.muli %c1_i32_148, %c8_i32_150 : i32
    %430 = tpu.assume_multiple %429, 8 : i32
    %c8_i32_151 = arith.constant 8 : i32
    %431 = arith.muli %428, %c8_i32_151 : i32
    %432 = tpu.assume_multiple %431, 8 : i32
    %433 = arith.index_cast %430 : i32 to index
    %c0_152 = arith.constant 0 : index
    %434 = vector.load %arg12[%433, %c0_152] : memref<64x256xf32, #tpu.memory_space<vmem>>, vector<8x256xf32>
    %435 = arith.index_cast %432 : i32 to index
    %c0_153 = arith.constant 0 : index
    %436 = vector.load %arg12[%435, %c0_153] : memref<64x256xf32, #tpu.memory_space<vmem>>, vector<8x256xf32>
    %437 = arith.select %13, %436, %434 : vector<8x256xi1>, vector<8x256xf32>
    %c0_154 = arith.constant 0 : index
    %c0_155 = arith.constant 0 : index
    %438 = vector.load %arg7[%c0_154, %c0_155] : memref<64x256xf32, #tpu.memory_space<vmem>>, vector<64x256xf32>
    %cst_156 = arith.constant dense<0.000000e+00> : vector<8x256xf32>
    %439 = tpu.matmul %424, %438, %cst_156 {dimension_numbers = #tpu.dot_dimension_numbers<[1], [0], [0], [1], [0, 0, 1, 1], [], []>} : vector<8x64xf32>, vector<64x256xf32>, vector<8x256xf32> -> vector<8x256xf32>
    %440 = arith.addf %437, %439 : vector<8x256xf32>
    %441 = vector.extract_strided_slice %440 {offsets = [0, 0], sizes = [8, 64], strides = [1, 1]} : vector<8x256xf32> to vector<8x64xf32>
    %442 = arith.negf %441 : vector<8x64xf32>
    %443 = math.exp %442 : vector<8x64xf32>
    %cst_157 = arith.constant 1.000000e+00 : f32
    %444 = vector.broadcast %cst_157 : f32 to vector<8x64xf32>
    %445 = arith.addf %444, %443 : vector<8x64xf32>
    %446 = arith.divf %444, %445 : vector<8x64xf32>
    %447 = vector.extract_strided_slice %440 {offsets = [0, 64], sizes = [8, 64], strides = [1, 1]} : vector<8x256xf32> to vector<8x64xf32>
    %448 = arith.negf %447 : vector<8x64xf32>
    %449 = math.exp %448 : vector<8x64xf32>
    %cst_158 = arith.constant 1.000000e+00 : f32
    %450 = vector.broadcast %cst_158 : f32 to vector<8x64xf32>
    %451 = arith.addf %450, %449 : vector<8x64xf32>
    %452 = arith.divf %450, %451 : vector<8x64xf32>
    %453 = vector.extract_strided_slice %440 {offsets = [0, 128], sizes = [8, 64], strides = [1, 1]} : vector<8x256xf32> to vector<8x64xf32>
    %454 = math.tanh %453 : vector<8x64xf32>
    %455 = vector.extract_strided_slice %440 {offsets = [0, 192], sizes = [8, 64], strides = [1, 1]} : vector<8x256xf32> to vector<8x64xf32>
    %456 = arith.negf %455 : vector<8x64xf32>
    %457 = math.exp %456 : vector<8x64xf32>
    %cst_159 = arith.constant 1.000000e+00 : f32
    %458 = vector.broadcast %cst_159 : f32 to vector<8x64xf32>
    %459 = arith.addf %458, %457 : vector<8x64xf32>
    %460 = arith.divf %458, %459 : vector<8x64xf32>
    %461 = arith.mulf %452, %422 : vector<8x64xf32>
    %462 = arith.mulf %446, %454 : vector<8x64xf32>
    %463 = arith.addf %461, %462 : vector<8x64xf32>
    %464 = math.tanh %463 : vector<8x64xf32>
    %465 = arith.mulf %460, %464 : vector<8x64xf32>
    %c0_i32_160 = arith.constant 0 : i32
    %466 = arith.cmpi eq, %c1_i32_148, %c0_i32_160 : i32
    %467 = arith.extui %466 : i1 to i32
    %c0_i32_161 = arith.constant 0 : i32
    %468 = arith.cmpi ne, %467, %c0_i32_161 : i32
    scf.if %468 {
      %736 = vector.extract_strided_slice %465 {offsets = [0, 32], sizes = [8, 32], strides = [1, 1]} : vector<8x64xf32> to vector<8x32xf32>
      %c0_261 = arith.constant 0 : index
      %c0_262 = arith.constant 0 : index
      %737 = vector.load %arg15[%c0_261, %c0_262] : memref<8x32xf32, #tpu.memory_space<vmem>>, vector<8x32xf32>
      tpu.vector_store %arg15[%c0_261, %c0_262], %736 {strides = array<i32>} : memref<8x32xf32, #tpu.memory_space<vmem>>, vector<8x32xf32>,
    } else {
    }
    %c2_i32_162 = arith.constant 2 : i32
    %c7_i32_163 = arith.constant 7 : i32
    %469 = arith.subi %c7_i32_163, %c2_i32_162 : i32
    %c8_i32_164 = arith.constant 8 : i32
    %470 = arith.muli %c2_i32_162, %c8_i32_164 : i32
    %471 = tpu.assume_multiple %470, 8 : i32
    %c8_i32_165 = arith.constant 8 : i32
    %472 = arith.muli %469, %c8_i32_165 : i32
    %473 = tpu.assume_multiple %472, 8 : i32
    %474 = arith.index_cast %471 : i32 to index
    %c0_166 = arith.constant 0 : index
    %475 = vector.load %arg12[%474, %c0_166] : memref<64x256xf32, #tpu.memory_space<vmem>>, vector<8x256xf32>
    %476 = arith.index_cast %473 : i32 to index
    %c0_167 = arith.constant 0 : index
    %477 = vector.load %arg12[%476, %c0_167] : memref<64x256xf32, #tpu.memory_space<vmem>>, vector<8x256xf32>
    %478 = arith.select %13, %477, %475 : vector<8x256xi1>, vector<8x256xf32>
    %c0_168 = arith.constant 0 : index
    %c0_169 = arith.constant 0 : index
    %479 = vector.load %arg7[%c0_168, %c0_169] : memref<64x256xf32, #tpu.memory_space<vmem>>, vector<64x256xf32>
    %cst_170 = arith.constant dense<0.000000e+00> : vector<8x256xf32>
    %480 = tpu.matmul %465, %479, %cst_170 {dimension_numbers = #tpu.dot_dimension_numbers<[1], [0], [0], [1], [0, 0, 1, 1], [], []>} : vector<8x64xf32>, vector<64x256xf32>, vector<8x256xf32> -> vector<8x256xf32>
    %481 = arith.addf %478, %480 : vector<8x256xf32>
    %482 = vector.extract_strided_slice %481 {offsets = [0, 0], sizes = [8, 64], strides = [1, 1]} : vector<8x256xf32> to vector<8x64xf32>
    %483 = arith.negf %482 : vector<8x64xf32>
    %484 = math.exp %483 : vector<8x64xf32>
    %cst_171 = arith.constant 1.000000e+00 : f32
    %485 = vector.broadcast %cst_171 : f32 to vector<8x64xf32>
    %486 = arith.addf %485, %484 : vector<8x64xf32>
    %487 = arith.divf %485, %486 : vector<8x64xf32>
    %488 = vector.extract_strided_slice %481 {offsets = [0, 64], sizes = [8, 64], strides = [1, 1]} : vector<8x256xf32> to vector<8x64xf32>
    %489 = arith.negf %488 : vector<8x64xf32>
    %490 = math.exp %489 : vector<8x64xf32>
    %cst_172 = arith.constant 1.000000e+00 : f32
    %491 = vector.broadcast %cst_172 : f32 to vector<8x64xf32>
    %492 = arith.addf %491, %490 : vector<8x64xf32>
    %493 = arith.divf %491, %492 : vector<8x64xf32>
    %494 = vector.extract_strided_slice %481 {offsets = [0, 128], sizes = [8, 64], strides = [1, 1]} : vector<8x256xf32> to vector<8x64xf32>
    %495 = math.tanh %494 : vector<8x64xf32>
    %496 = vector.extract_strided_slice %481 {offsets = [0, 192], sizes = [8, 64], strides = [1, 1]} : vector<8x256xf32> to vector<8x64xf32>
    %497 = arith.negf %496 : vector<8x64xf32>
    %498 = math.exp %497 : vector<8x64xf32>
    %cst_173 = arith.constant 1.000000e+00 : f32
    %499 = vector.broadcast %cst_173 : f32 to vector<8x64xf32>
    %500 = arith.addf %499, %498 : vector<8x64xf32>
    %501 = arith.divf %499, %500 : vector<8x64xf32>
    %502 = arith.mulf %493, %463 : vector<8x64xf32>
    %503 = arith.mulf %487, %495 : vector<8x64xf32>
    %504 = arith.addf %502, %503 : vector<8x64xf32>
    %505 = math.tanh %504 : vector<8x64xf32>
    %506 = arith.mulf %501, %505 : vector<8x64xf32>
    %c0_i32_174 = arith.constant 0 : i32
    %507 = arith.cmpi eq, %c2_i32_162, %c0_i32_174 : i32
    %508 = arith.extui %507 : i1 to i32
    %c0_i32_175 = arith.constant 0 : i32
    %509 = arith.cmpi ne, %508, %c0_i32_175 : i32
    scf.if %509 {
      %736 = vector.extract_strided_slice %506 {offsets = [0, 32], sizes = [8, 32], strides = [1, 1]} : vector<8x64xf32> to vector<8x32xf32>
      %c0_261 = arith.constant 0 : index
      %c0_262 = arith.constant 0 : index
      %737 = vector.load %arg15[%c0_261, %c0_262] : memref<8x32xf32, #tpu.memory_space<vmem>>, vector<8x32xf32>
      tpu.vector_store %arg15[%c0_261, %c0_262], %736 {strides = array<i32>} : memref<8x32xf32, #tpu.memory_space<vmem>>, vector<8x32xf32>,
    } else {
    }
    %c3_i32_176 = arith.constant 3 : i32
    %c7_i32_177 = arith.constant 7 : i32
    %510 = arith.subi %c7_i32_177, %c3_i32_176 : i32
    %c8_i32_178 = arith.constant 8 : i32
    %511 = arith.muli %c3_i32_176, %c8_i32_178 : i32
    %512 = tpu.assume_multiple %511, 8 : i32
    %c8_i32_179 = arith.constant 8 : i32
    %513 = arith.muli %510, %c8_i32_179 : i32
    %514 = tpu.assume_multiple %513, 8 : i32
    %515 = arith.index_cast %512 : i32 to index
    %c0_180 = arith.constant 0 : index
    %516 = vector.load %arg12[%515, %c0_180] : memref<64x256xf32, #tpu.memory_space<vmem>>, vector<8x256xf32>
    %517 = arith.index_cast %514 : i32 to index
    %c0_181 = arith.constant 0 : index
    %518 = vector.load %arg12[%517, %c0_181] : memref<64x256xf32, #tpu.memory_space<vmem>>, vector<8x256xf32>
    %519 = arith.select %13, %518, %516 : vector<8x256xi1>, vector<8x256xf32>
    %c0_182 = arith.constant 0 : index
    %c0_183 = arith.constant 0 : index
    %520 = vector.load %arg7[%c0_182, %c0_183] : memref<64x256xf32, #tpu.memory_space<vmem>>, vector<64x256xf32>
    %cst_184 = arith.constant dense<0.000000e+00> : vector<8x256xf32>
    %521 = tpu.matmul %506, %520, %cst_184 {dimension_numbers = #tpu.dot_dimension_numbers<[1], [0], [0], [1], [0, 0, 1, 1], [], []>} : vector<8x64xf32>, vector<64x256xf32>, vector<8x256xf32> -> vector<8x256xf32>
    %522 = arith.addf %519, %521 : vector<8x256xf32>
    %523 = vector.extract_strided_slice %522 {offsets = [0, 0], sizes = [8, 64], strides = [1, 1]} : vector<8x256xf32> to vector<8x64xf32>
    %524 = arith.negf %523 : vector<8x64xf32>
    %525 = math.exp %524 : vector<8x64xf32>
    %cst_185 = arith.constant 1.000000e+00 : f32
    %526 = vector.broadcast %cst_185 : f32 to vector<8x64xf32>
    %527 = arith.addf %526, %525 : vector<8x64xf32>
    %528 = arith.divf %526, %527 : vector<8x64xf32>
    %529 = vector.extract_strided_slice %522 {offsets = [0, 64], sizes = [8, 64], strides = [1, 1]} : vector<8x256xf32> to vector<8x64xf32>
    %530 = arith.negf %529 : vector<8x64xf32>
    %531 = math.exp %530 : vector<8x64xf32>
    %cst_186 = arith.constant 1.000000e+00 : f32
    %532 = vector.broadcast %cst_186 : f32 to vector<8x64xf32>
    %533 = arith.addf %532, %531 : vector<8x64xf32>
    %534 = arith.divf %532, %533 : vector<8x64xf32>
    %535 = vector.extract_strided_slice %522 {offsets = [0, 128], sizes = [8, 64], strides = [1, 1]} : vector<8x256xf32> to vector<8x64xf32>
    %536 = math.tanh %535 : vector<8x64xf32>
    %537 = vector.extract_strided_slice %522 {offsets = [0, 192], sizes = [8, 64], strides = [1, 1]} : vector<8x256xf32> to vector<8x64xf32>
    %538 = arith.negf %537 : vector<8x64xf32>
    %539 = math.exp %538 : vector<8x64xf32>
    %cst_187 = arith.constant 1.000000e+00 : f32
    %540 = vector.broadcast %cst_187 : f32 to vector<8x64xf32>
    %541 = arith.addf %540, %539 : vector<8x64xf32>
    %542 = arith.divf %540, %541 : vector<8x64xf32>
    %543 = arith.mulf %534, %504 : vector<8x64xf32>
    %544 = arith.mulf %528, %536 : vector<8x64xf32>
    %545 = arith.addf %543, %544 : vector<8x64xf32>
    %546 = math.tanh %545 : vector<8x64xf32>
    %547 = arith.mulf %542, %546 : vector<8x64xf32>
    %c0_i32_188 = arith.constant 0 : i32
    %548 = arith.cmpi eq, %c3_i32_176, %c0_i32_188 : i32
    %549 = arith.extui %548 : i1 to i32
    %c0_i32_189 = arith.constant 0 : i32
    %550 = arith.cmpi ne, %549, %c0_i32_189 : i32
    scf.if %550 {
      %736 = vector.extract_strided_slice %547 {offsets = [0, 32], sizes = [8, 32], strides = [1, 1]} : vector<8x64xf32> to vector<8x32xf32>
      %c0_261 = arith.constant 0 : index
      %c0_262 = arith.constant 0 : index
      %737 = vector.load %arg15[%c0_261, %c0_262] : memref<8x32xf32, #tpu.memory_space<vmem>>, vector<8x32xf32>
      tpu.vector_store %arg15[%c0_261, %c0_262], %736 {strides = array<i32>} : memref<8x32xf32, #tpu.memory_space<vmem>>, vector<8x32xf32>,
    } else {
    }
    %c4_i32_190 = arith.constant 4 : i32
    %c7_i32_191 = arith.constant 7 : i32
    %551 = arith.subi %c7_i32_191, %c4_i32_190 : i32
    %c8_i32_192 = arith.constant 8 : i32
    %552 = arith.muli %c4_i32_190, %c8_i32_192 : i32
    %553 = tpu.assume_multiple %552, 8 : i32
    %c8_i32_193 = arith.constant 8 : i32
    %554 = arith.muli %551, %c8_i32_193 : i32
    %555 = tpu.assume_multiple %554, 8 : i32
    %556 = arith.index_cast %553 : i32 to index
    %c0_194 = arith.constant 0 : index
    %557 = vector.load %arg12[%556, %c0_194] : memref<64x256xf32, #tpu.memory_space<vmem>>, vector<8x256xf32>
    %558 = arith.index_cast %555 : i32 to index
    %c0_195 = arith.constant 0 : index
    %559 = vector.load %arg12[%558, %c0_195] : memref<64x256xf32, #tpu.memory_space<vmem>>, vector<8x256xf32>
    %560 = arith.select %13, %559, %557 : vector<8x256xi1>, vector<8x256xf32>
    %c0_196 = arith.constant 0 : index
    %c0_197 = arith.constant 0 : index
    %561 = vector.load %arg7[%c0_196, %c0_197] : memref<64x256xf32, #tpu.memory_space<vmem>>, vector<64x256xf32>
    %cst_198 = arith.constant dense<0.000000e+00> : vector<8x256xf32>
    %562 = tpu.matmul %547, %561, %cst_198 {dimension_numbers = #tpu.dot_dimension_numbers<[1], [0], [0], [1], [0, 0, 1, 1], [], []>} : vector<8x64xf32>, vector<64x256xf32>, vector<8x256xf32> -> vector<8x256xf32>
    %563 = arith.addf %560, %562 : vector<8x256xf32>
    %564 = vector.extract_strided_slice %563 {offsets = [0, 0], sizes = [8, 64], strides = [1, 1]} : vector<8x256xf32> to vector<8x64xf32>
    %565 = arith.negf %564 : vector<8x64xf32>
    %566 = math.exp %565 : vector<8x64xf32>
    %cst_199 = arith.constant 1.000000e+00 : f32
    %567 = vector.broadcast %cst_199 : f32 to vector<8x64xf32>
    %568 = arith.addf %567, %566 : vector<8x64xf32>
    %569 = arith.divf %567, %568 : vector<8x64xf32>
    %570 = vector.extract_strided_slice %563 {offsets = [0, 64], sizes = [8, 64], strides = [1, 1]} : vector<8x256xf32> to vector<8x64xf32>
    %571 = arith.negf %570 : vector<8x64xf32>
    %572 = math.exp %571 : vector<8x64xf32>
    %cst_200 = arith.constant 1.000000e+00 : f32
    %573 = vector.broadcast %cst_200 : f32 to vector<8x64xf32>
    %574 = arith.addf %573, %572 : vector<8x64xf32>
    %575 = arith.divf %573, %574 : vector<8x64xf32>
    %576 = vector.extract_strided_slice %563 {offsets = [0, 128], sizes = [8, 64], strides = [1, 1]} : vector<8x256xf32> to vector<8x64xf32>
    %577 = math.tanh %576 : vector<8x64xf32>
    %578 = vector.extract_strided_slice %563 {offsets = [0, 192], sizes = [8, 64], strides = [1, 1]} : vector<8x256xf32> to vector<8x64xf32>
    %579 = arith.negf %578 : vector<8x64xf32>
    %580 = math.exp %579 : vector<8x64xf32>
    %cst_201 = arith.constant 1.000000e+00 : f32
    %581 = vector.broadcast %cst_201 : f32 to vector<8x64xf32>
    %582 = arith.addf %581, %580 : vector<8x64xf32>
    %583 = arith.divf %581, %582 : vector<8x64xf32>
    %584 = arith.mulf %575, %545 : vector<8x64xf32>
    %585 = arith.mulf %569, %577 : vector<8x64xf32>
    %586 = arith.addf %584, %585 : vector<8x64xf32>
    %587 = math.tanh %586 : vector<8x64xf32>
    %588 = arith.mulf %583, %587 : vector<8x64xf32>
    %c0_i32_202 = arith.constant 0 : i32
    %589 = arith.cmpi eq, %c4_i32_190, %c0_i32_202 : i32
    %590 = arith.extui %589 : i1 to i32
    %c0_i32_203 = arith.constant 0 : i32
    %591 = arith.cmpi ne, %590, %c0_i32_203 : i32
    scf.if %591 {
      %736 = vector.extract_strided_slice %588 {offsets = [0, 32], sizes = [8, 32], strides = [1, 1]} : vector<8x64xf32> to vector<8x32xf32>
      %c0_261 = arith.constant 0 : index
      %c0_262 = arith.constant 0 : index
      %737 = vector.load %arg15[%c0_261, %c0_262] : memref<8x32xf32, #tpu.memory_space<vmem>>, vector<8x32xf32>
      tpu.vector_store %arg15[%c0_261, %c0_262], %736 {strides = array<i32>} : memref<8x32xf32, #tpu.memory_space<vmem>>, vector<8x32xf32>,
    } else {
    }
    %c5_i32_204 = arith.constant 5 : i32
    %c7_i32_205 = arith.constant 7 : i32
    %592 = arith.subi %c7_i32_205, %c5_i32_204 : i32
    %c8_i32_206 = arith.constant 8 : i32
    %593 = arith.muli %c5_i32_204, %c8_i32_206 : i32
    %594 = tpu.assume_multiple %593, 8 : i32
    %c8_i32_207 = arith.constant 8 : i32
    %595 = arith.muli %592, %c8_i32_207 : i32
    %596 = tpu.assume_multiple %595, 8 : i32
    %597 = arith.index_cast %594 : i32 to index
    %c0_208 = arith.constant 0 : index
    %598 = vector.load %arg12[%597, %c0_208] : memref<64x256xf32, #tpu.memory_space<vmem>>, vector<8x256xf32>
    %599 = arith.index_cast %596 : i32 to index
    %c0_209 = arith.constant 0 : index
    %600 = vector.load %arg12[%599, %c0_209] : memref<64x256xf32, #tpu.memory_space<vmem>>, vector<8x256xf32>
    %601 = arith.select %13, %600, %598 : vector<8x256xi1>, vector<8x256xf32>
    %c0_210 = arith.constant 0 : index
    %c0_211 = arith.constant 0 : index
    %602 = vector.load %arg7[%c0_210, %c0_211] : memref<64x256xf32, #tpu.memory_space<vmem>>, vector<64x256xf32>
    %cst_212 = arith.constant dense<0.000000e+00> : vector<8x256xf32>
    %603 = tpu.matmul %588, %602, %cst_212 {dimension_numbers = #tpu.dot_dimension_numbers<[1], [0], [0], [1], [0, 0, 1, 1], [], []>} : vector<8x64xf32>, vector<64x256xf32>, vector<8x256xf32> -> vector<8x256xf32>
    %604 = arith.addf %601, %603 : vector<8x256xf32>
    %605 = vector.extract_strided_slice %604 {offsets = [0, 0], sizes = [8, 64], strides = [1, 1]} : vector<8x256xf32> to vector<8x64xf32>
    %606 = arith.negf %605 : vector<8x64xf32>
    %607 = math.exp %606 : vector<8x64xf32>
    %cst_213 = arith.constant 1.000000e+00 : f32
    %608 = vector.broadcast %cst_213 : f32 to vector<8x64xf32>
    %609 = arith.addf %608, %607 : vector<8x64xf32>
    %610 = arith.divf %608, %609 : vector<8x64xf32>
    %611 = vector.extract_strided_slice %604 {offsets = [0, 64], sizes = [8, 64], strides = [1, 1]} : vector<8x256xf32> to vector<8x64xf32>
    %612 = arith.negf %611 : vector<8x64xf32>
    %613 = math.exp %612 : vector<8x64xf32>
    %cst_214 = arith.constant 1.000000e+00 : f32
    %614 = vector.broadcast %cst_214 : f32 to vector<8x64xf32>
    %615 = arith.addf %614, %613 : vector<8x64xf32>
    %616 = arith.divf %614, %615 : vector<8x64xf32>
    %617 = vector.extract_strided_slice %604 {offsets = [0, 128], sizes = [8, 64], strides = [1, 1]} : vector<8x256xf32> to vector<8x64xf32>
    %618 = math.tanh %617 : vector<8x64xf32>
    %619 = vector.extract_strided_slice %604 {offsets = [0, 192], sizes = [8, 64], strides = [1, 1]} : vector<8x256xf32> to vector<8x64xf32>
    %620 = arith.negf %619 : vector<8x64xf32>
    %621 = math.exp %620 : vector<8x64xf32>
    %cst_215 = arith.constant 1.000000e+00 : f32
    %622 = vector.broadcast %cst_215 : f32 to vector<8x64xf32>
    %623 = arith.addf %622, %621 : vector<8x64xf32>
    %624 = arith.divf %622, %623 : vector<8x64xf32>
    %625 = arith.mulf %616, %586 : vector<8x64xf32>
    %626 = arith.mulf %610, %618 : vector<8x64xf32>
    %627 = arith.addf %625, %626 : vector<8x64xf32>
    %628 = math.tanh %627 : vector<8x64xf32>
    %629 = arith.mulf %624, %628 : vector<8x64xf32>
    %c0_i32_216 = arith.constant 0 : i32
    %630 = arith.cmpi eq, %c5_i32_204, %c0_i32_216 : i32
    %631 = arith.extui %630 : i1 to i32
    %c0_i32_217 = arith.constant 0 : i32
    %632 = arith.cmpi ne, %631, %c0_i32_217 : i32
    scf.if %632 {
      %736 = vector.extract_strided_slice %629 {offsets = [0, 32], sizes = [8, 32], strides = [1, 1]} : vector<8x64xf32> to vector<8x32xf32>
      %c0_261 = arith.constant 0 : index
      %c0_262 = arith.constant 0 : index
      %737 = vector.load %arg15[%c0_261, %c0_262] : memref<8x32xf32, #tpu.memory_space<vmem>>, vector<8x32xf32>
      tpu.vector_store %arg15[%c0_261, %c0_262], %736 {strides = array<i32>} : memref<8x32xf32, #tpu.memory_space<vmem>>, vector<8x32xf32>,
    } else {
    }
    %c6_i32_218 = arith.constant 6 : i32
    %c7_i32_219 = arith.constant 7 : i32
    %633 = arith.subi %c7_i32_219, %c6_i32_218 : i32
    %c8_i32_220 = arith.constant 8 : i32
    %634 = arith.muli %c6_i32_218, %c8_i32_220 : i32
    %635 = tpu.assume_multiple %634, 8 : i32
    %c8_i32_221 = arith.constant 8 : i32
    %636 = arith.muli %633, %c8_i32_221 : i32
    %637 = tpu.assume_multiple %636, 8 : i32
    %638 = arith.index_cast %635 : i32 to index
    %c0_222 = arith.constant 0 : index
    %639 = vector.load %arg12[%638, %c0_222] : memref<64x256xf32, #tpu.memory_space<vmem>>, vector<8x256xf32>
    %640 = arith.index_cast %637 : i32 to index
    %c0_223 = arith.constant 0 : index
    %641 = vector.load %arg12[%640, %c0_223] : memref<64x256xf32, #tpu.memory_space<vmem>>, vector<8x256xf32>
    %642 = arith.select %13, %641, %639 : vector<8x256xi1>, vector<8x256xf32>
    %c0_224 = arith.constant 0 : index
    %c0_225 = arith.constant 0 : index
    %643 = vector.load %arg7[%c0_224, %c0_225] : memref<64x256xf32, #tpu.memory_space<vmem>>, vector<64x256xf32>
    %cst_226 = arith.constant dense<0.000000e+00> : vector<8x256xf32>
    %644 = tpu.matmul %629, %643, %cst_226 {dimension_numbers = #tpu.dot_dimension_numbers<[1], [0], [0], [1], [0, 0, 1, 1], [], []>} : vector<8x64xf32>, vector<64x256xf32>, vector<8x256xf32> -> vector<8x256xf32>
    %645 = arith.addf %642, %644 : vector<8x256xf32>
    %646 = vector.extract_strided_slice %645 {offsets = [0, 0], sizes = [8, 64], strides = [1, 1]} : vector<8x256xf32> to vector<8x64xf32>
    %647 = arith.negf %646 : vector<8x64xf32>
    %648 = math.exp %647 : vector<8x64xf32>
    %cst_227 = arith.constant 1.000000e+00 : f32
    %649 = vector.broadcast %cst_227 : f32 to vector<8x64xf32>
    %650 = arith.addf %649, %648 : vector<8x64xf32>
    %651 = arith.divf %649, %650 : vector<8x64xf32>
    %652 = vector.extract_strided_slice %645 {offsets = [0, 64], sizes = [8, 64], strides = [1, 1]} : vector<8x256xf32> to vector<8x64xf32>
    %653 = arith.negf %652 : vector<8x64xf32>
    %654 = math.exp %653 : vector<8x64xf32>
    %cst_228 = arith.constant 1.000000e+00 : f32
    %655 = vector.broadcast %cst_228 : f32 to vector<8x64xf32>
    %656 = arith.addf %655, %654 : vector<8x64xf32>
    %657 = arith.divf %655, %656 : vector<8x64xf32>
    %658 = vector.extract_strided_slice %645 {offsets = [0, 128], sizes = [8, 64], strides = [1, 1]} : vector<8x256xf32> to vector<8x64xf32>
    %659 = math.tanh %658 : vector<8x64xf32>
    %660 = vector.extract_strided_slice %645 {offsets = [0, 192], sizes = [8, 64], strides = [1, 1]} : vector<8x256xf32> to vector<8x64xf32>
    %661 = arith.negf %660 : vector<8x64xf32>
    %662 = math.exp %661 : vector<8x64xf32>
    %cst_229 = arith.constant 1.000000e+00 : f32
    %663 = vector.broadcast %cst_229 : f32 to vector<8x64xf32>
    %664 = arith.addf %663, %662 : vector<8x64xf32>
    %665 = arith.divf %663, %664 : vector<8x64xf32>
    %666 = arith.mulf %657, %627 : vector<8x64xf32>
    %667 = arith.mulf %651, %659 : vector<8x64xf32>
    %668 = arith.addf %666, %667 : vector<8x64xf32>
    %669 = math.tanh %668 : vector<8x64xf32>
    %670 = arith.mulf %665, %669 : vector<8x64xf32>
    %c0_i32_230 = arith.constant 0 : i32
    %671 = arith.cmpi eq, %c6_i32_218, %c0_i32_230 : i32
    %672 = arith.extui %671 : i1 to i32
    %c0_i32_231 = arith.constant 0 : i32
    %673 = arith.cmpi ne, %672, %c0_i32_231 : i32
    scf.if %673 {
      %736 = vector.extract_strided_slice %670 {offsets = [0, 32], sizes = [8, 32], strides = [1, 1]} : vector<8x64xf32> to vector<8x32xf32>
      %c0_261 = arith.constant 0 : index
      %c0_262 = arith.constant 0 : index
      %737 = vector.load %arg15[%c0_261, %c0_262] : memref<8x32xf32, #tpu.memory_space<vmem>>, vector<8x32xf32>
      tpu.vector_store %arg15[%c0_261, %c0_262], %736 {strides = array<i32>} : memref<8x32xf32, #tpu.memory_space<vmem>>, vector<8x32xf32>,
    } else {
    }
    %c7_i32_232 = arith.constant 7 : i32
    %c7_i32_233 = arith.constant 7 : i32
    %674 = arith.subi %c7_i32_233, %c7_i32_232 : i32
    %c8_i32_234 = arith.constant 8 : i32
    %675 = arith.muli %c7_i32_232, %c8_i32_234 : i32
    %676 = tpu.assume_multiple %675, 8 : i32
    %c8_i32_235 = arith.constant 8 : i32
    %677 = arith.muli %674, %c8_i32_235 : i32
    %678 = tpu.assume_multiple %677, 8 : i32
    %679 = arith.index_cast %676 : i32 to index
    %c0_236 = arith.constant 0 : index
    %680 = vector.load %arg12[%679, %c0_236] : memref<64x256xf32, #tpu.memory_space<vmem>>, vector<8x256xf32>
    %681 = arith.index_cast %678 : i32 to index
    %c0_237 = arith.constant 0 : index
    %682 = vector.load %arg12[%681, %c0_237] : memref<64x256xf32, #tpu.memory_space<vmem>>, vector<8x256xf32>
    %683 = arith.select %13, %682, %680 : vector<8x256xi1>, vector<8x256xf32>
    %c0_238 = arith.constant 0 : index
    %c0_239 = arith.constant 0 : index
    %684 = vector.load %arg7[%c0_238, %c0_239] : memref<64x256xf32, #tpu.memory_space<vmem>>, vector<64x256xf32>
    %cst_240 = arith.constant dense<0.000000e+00> : vector<8x256xf32>
    %685 = tpu.matmul %670, %684, %cst_240 {dimension_numbers = #tpu.dot_dimension_numbers<[1], [0], [0], [1], [0, 0, 1, 1], [], []>} : vector<8x64xf32>, vector<64x256xf32>, vector<8x256xf32> -> vector<8x256xf32>
    %686 = arith.addf %683, %685 : vector<8x256xf32>
    %687 = vector.extract_strided_slice %686 {offsets = [0, 0], sizes = [8, 64], strides = [1, 1]} : vector<8x256xf32> to vector<8x64xf32>
    %688 = arith.negf %687 : vector<8x64xf32>
    %689 = math.exp %688 : vector<8x64xf32>
    %cst_241 = arith.constant 1.000000e+00 : f32
    %690 = vector.broadcast %cst_241 : f32 to vector<8x64xf32>
    %691 = arith.addf %690, %689 : vector<8x64xf32>
    %692 = arith.divf %690, %691 : vector<8x64xf32>
    %693 = vector.extract_strided_slice %686 {offsets = [0, 64], sizes = [8, 64], strides = [1, 1]} : vector<8x256xf32> to vector<8x64xf32>
    %694 = arith.negf %693 : vector<8x64xf32>
    %695 = math.exp %694 : vector<8x64xf32>
    %cst_242 = arith.constant 1.000000e+00 : f32
    %696 = vector.broadcast %cst_242 : f32 to vector<8x64xf32>
    %697 = arith.addf %696, %695 : vector<8x64xf32>
    %698 = arith.divf %696, %697 : vector<8x64xf32>
    %699 = vector.extract_strided_slice %686 {offsets = [0, 128], sizes = [8, 64], strides = [1, 1]} : vector<8x256xf32> to vector<8x64xf32>
    %700 = math.tanh %699 : vector<8x64xf32>
    %701 = vector.extract_strided_slice %686 {offsets = [0, 192], sizes = [8, 64], strides = [1, 1]} : vector<8x256xf32> to vector<8x64xf32>
    %702 = arith.negf %701 : vector<8x64xf32>
    %703 = math.exp %702 : vector<8x64xf32>
    %cst_243 = arith.constant 1.000000e+00 : f32
    %704 = vector.broadcast %cst_243 : f32 to vector<8x64xf32>
    %705 = arith.addf %704, %703 : vector<8x64xf32>
    %706 = arith.divf %704, %705 : vector<8x64xf32>
    %707 = arith.mulf %698, %668 : vector<8x64xf32>
    %708 = arith.mulf %692, %700 : vector<8x64xf32>
    %709 = arith.addf %707, %708 : vector<8x64xf32>
    %710 = math.tanh %709 : vector<8x64xf32>
    %711 = arith.mulf %706, %710 : vector<8x64xf32>
    %c0_i32_244 = arith.constant 0 : i32
    %712 = arith.cmpi eq, %c7_i32_232, %c0_i32_244 : i32
    %713 = arith.extui %712 : i1 to i32
    %c0_i32_245 = arith.constant 0 : i32
    %714 = arith.cmpi ne, %713, %c0_i32_245 : i32
    scf.if %714 {
      %736 = vector.extract_strided_slice %711 {offsets = [0, 32], sizes = [8, 32], strides = [1, 1]} : vector<8x64xf32> to vector<8x32xf32>
      %c0_261 = arith.constant 0 : index
      %c0_262 = arith.constant 0 : index
      %737 = vector.load %arg15[%c0_261, %c0_262] : memref<8x32xf32, #tpu.memory_space<vmem>>, vector<8x32xf32>
      tpu.vector_store %arg15[%c0_261, %c0_262], %736 {strides = array<i32>} : memref<8x32xf32, #tpu.memory_space<vmem>>, vector<8x32xf32>,
    } else {
    }
    %c8_i32_246 = arith.constant 8 : i32
    %715 = vector.extract_strided_slice %711 {offsets = [0, 0], sizes = [8, 32], strides = [1, 1]} : vector<8x64xf32> to vector<8x32xf32>
    %c0_247 = arith.constant 0 : index
    %c0_248 = arith.constant 0 : index
    %716 = vector.load %arg9[%c0_247, %c0_248] : memref<64x8xf32, #tpu.memory_space<vmem>>, vector<32x8xf32>
    %cst_249 = arith.constant dense<0.000000e+00> : vector<8x8xf32>
    %717 = tpu.matmul %715, %716, %cst_249 {dimension_numbers = #tpu.dot_dimension_numbers<[1], [0], [0], [1], [0, 0, 1, 1], [], []>} : vector<8x32xf32>, vector<32x8xf32>, vector<8x8xf32> -> vector<8x8xf32>
    %c0_250 = arith.constant 0 : index
    %c0_251 = arith.constant 0 : index
    %718 = vector.load %arg15[%c0_250, %c0_251] : memref<8x32xf32, #tpu.memory_space<vmem>>, vector<8x32xf32>
    %c32_252 = arith.constant 32 : index
    %c0_253 = arith.constant 0 : index
    %719 = vector.load %arg9[%c32_252, %c0_253] : memref<64x8xf32, #tpu.memory_space<vmem>>, vector<32x8xf32>
    %cst_254 = arith.constant dense<0.000000e+00> : vector<8x8xf32>
    %720 = tpu.matmul %718, %719, %cst_254 {dimension_numbers = #tpu.dot_dimension_numbers<[1], [0], [0], [1], [0, 0, 1, 1], [], []>} : vector<8x32xf32>, vector<32x8xf32>, vector<8x8xf32> -> vector<8x8xf32>
    %721 = arith.addf %717, %720 : vector<8x8xf32>
    %c0_255 = arith.constant 0 : index
    %c0_256 = arith.constant 0 : index
    %722 = vector.load %arg10[%c0_255, %c0_256] : memref<1x8xf32, #tpu.memory_space<vmem>>, vector<1x8xf32>
    %723 = vector.broadcast %722 : vector<1x8xf32> to vector<8x8xf32>
    %724 = arith.addf %721, %723 : vector<8x8xf32>
    %cst_257 = arith.constant dense<0xFF800000> : vector<8xf32>
    %725 = vector.multi_reduction <maximumf>, %724, %cst_257 [1] : vector<8x8xf32> to vector<8xf32>
    %726 = vector.shape_cast %725 : vector<8xf32> to vector<8x1xf32>
    %727 = vector.broadcast %726 : vector<8x1xf32> to vector<8x8xf32>
    %728 = arith.subf %724, %727 : vector<8x8xf32>
    %729 = math.exp %728 : vector<8x8xf32>
    %cst_258 = arith.constant dense<0.000000e+00> : vector<8xf32>
    %730 = vector.multi_reduction <add>, %729, %cst_258 [1] : vector<8x8xf32> to vector<8xf32>
    %731 = vector.shape_cast %730 : vector<8xf32> to vector<8x1xf32>
    %732 = math.log %731 : vector<8x1xf32>
    %733 = vector.broadcast %732 : vector<8x1xf32> to vector<8x8xf32>
    %734 = arith.subf %728, %733 : vector<8x8xf32>
    %c0_259 = arith.constant 0 : index
    %c0_260 = arith.constant 0 : index
    %735 = vector.load %arg11[%c0_259, %c0_260] : memref<8x8xf32, #tpu.memory_space<vmem>>, vector<8x8xf32>
    tpu.vector_store %arg11[%c0_259, %c0_260], %734 {strides = array<i32>} : memref<8x8xf32, #tpu.memory_space<vmem>>, vector<8x8xf32>,
    return
  }
  func.func @transform_0(%arg0: i32) -> (i32, i32) {
    %c0_i32 = arith.constant 0 : i32
    %c0_i32_0 = arith.constant 0 : i32
    %c0_i32_1 = arith.constant 0 : i32
    return %c0_i32, %c0_i32_0 : i32, i32
  }
  func.func @transform_1(%arg0: i32) -> (i32, i32) {
    %c0_i32 = arith.constant 0 : i32
    %c0_i32_0 = arith.constant 0 : i32
    %c0_i32_1 = arith.constant 0 : i32
    return %c0_i32, %c0_i32_0 : i32, i32
  }
  func.func @transform_2(%arg0: i32) -> (i32, i32) {
    %c0_i32 = arith.constant 0 : i32
    %c0_i32_0 = arith.constant 0 : i32
    %c0_i32_1 = arith.constant 0 : i32
    return %c0_i32, %c0_i32_0 : i32, i32
  }
  func.func @transform_3(%arg0: i32) -> (i32, i32) {
    %c0_i32 = arith.constant 0 : i32
    %c0_i32_0 = arith.constant 0 : i32
    %c0_i32_1 = arith.constant 0 : i32
    return %c0_i32, %c0_i32_0 : i32, i32
  }
  func.func @transform_4(%arg0: i32) -> (i32, i32) {
    %c0_i32 = arith.constant 0 : i32
    %c0_i32_0 = arith.constant 0 : i32
    %c0_i32_1 = arith.constant 0 : i32
    return %c0_i32, %c0_i32_0 : i32, i32
  }
  func.func @transform_5(%arg0: i32) -> (i32, i32) {
    %c0_i32 = arith.constant 0 : i32
    %c0_i32_0 = arith.constant 0 : i32
    %c0_i32_1 = arith.constant 0 : i32
    return %c0_i32, %c0_i32_0 : i32, i32
  }
  func.func @transform_6(%arg0: i32) -> (i32, i32) {
    %c0_i32 = arith.constant 0 : i32
    %c0_i32_0 = arith.constant 0 : i32
    %c0_i32_1 = arith.constant 0 : i32
    return %c0_i32, %c0_i32_0 : i32, i32
  }
  func.func @transform_7(%arg0: i32) -> (i32, i32) {
    %c0_i32 = arith.constant 0 : i32
    %c0_i32_0 = arith.constant 0 : i32
    %c0_i32_1 = arith.constant 0 : i32
    return %c0_i32, %c0_i32_0 : i32, i32
  }
  func.func @transform_8(%arg0: i32) -> (i32, i32) {
    %c0_i32 = arith.constant 0 : i32
    %c0_i32_0 = arith.constant 0 : i32
    %c0_i32_1 = arith.constant 0 : i32
    return %c0_i32, %c0_i32_0 : i32, i32
  }
  func.func @transform_9(%arg0: i32) -> (i32, i32) {
    %c0_i32 = arith.constant 0 : i32
    %c0_i32_0 = arith.constant 0 : i32
    %c0_i32_1 = arith.constant 0 : i32
    return %c0_i32, %c0_i32_0 : i32, i32
  }
  func.func @transform_10(%arg0: i32) -> (i32, i32) {
    %c0_i32 = arith.constant 0 : i32
    %c0_i32_0 = arith.constant 0 : i32
    %c0_i32_1 = arith.constant 0 : i32
    return %c0_i32, %c0_i32_0 : i32, i32
  }
}

</mosaic_0001>

<llo_original>
// kernel: lstm_classifier_forward.1
$region0: #{lstm_classifier_forward.1}
  #allocation0 [shape = 'u32[]', space=smem, size = 0x4, offset = 0x4, fixed_abs, tag = 'smem constant byte address 0x4 - core index']
  #allocation1 [shape = 'u32[72,128]{1,0:T(1,128)}', space=vmem, size = 0x9000, scoped, tag = 'internal scratch']
  #allocation2 [shape = 'f32[64,256]{1,0:T(8,128)}', space=vmem, size = 0x10000, scoped, tag = 'scratch operand']
  #allocation3 [shape = 'f32[64,32]{1,0:T(8,128)}', space=vmem, size = 0x8000, scoped, tag = 'scratch operand']
  #allocation4 [shape = 'f32[64,32]{1,0:T(8,128)}', space=vmem, size = 0x8000, scoped, tag = 'scratch operand']
  #allocation5 [shape = 'f32[8,32]{1,0:T(8,128)}', space=vmem, size = 0x1000, scoped, tag = 'scratch operand']
  %s0 = inlined_call_operand.vmem [shape: s32[64,1], index: 0, kind: input, shape index: {}]
  %s1 = inlined_call_operand.vmem [shape: f32[50,16], index: 1, kind: input, shape index: {}]
  %s2 = inlined_call_operand.vmem [shape: f32[16,256], index: 2, kind: input, shape index: {}]
  %s3 = inlined_call_operand.vmem [shape: f32[64,256], index: 3, kind: input, shape index: {}]
  %s4 = inlined_call_operand.vmem [shape: f32[1,256], index: 4, kind: input, shape index: {}]
  %s5 = inlined_call_operand.hbm [shape: f32[64,256], index: 5, kind: input, shape index: {}]
  %s6 = inlined_call_operand.hbm [shape: f32[64,256], index: 6, kind: input, shape index: {}]
  %s7 = inlined_call_operand.vmem [shape: f32[1,256], index: 7, kind: input, shape index: {}]
  %s8 = inlined_call_operand.vmem [shape: f32[64,8], index: 8, kind: input, shape index: {}]
  %s9 = inlined_call_operand.vmem [shape: f32[1,8], index: 9, kind: input, shape index: {}]
  %s10 = inlined_call_operand.vmem [shape: f32[8,8], index: 10, kind: output, shape index: {}]
  %s11 = sld [smem:[#allocation0]]
  $region58: #{lstm_classifier_forward.1} parent=0
    _
  %s13 = ssub.s32 1, %s11
  %s14 = scalar_select 0, %s13, %s11
  $region1: #{lstm_classifier_forward.1} parent=0
    #allocation6 [shape = 'u8[65536]{0}', space=vmem, size = 0x10000, scoped, tag = 'input window, operand 5, single buffered']
    #allocation7 [shape = 's32[1]{0}', space=sflag, size = 0x4, scoped, tag = 'scoped memory for lstm_classifier_forward.1']
    #allocation8 [shape = 'u8[65536]{0}', space=vmem, size = 0x10000, scoped, tag = 'input window, operand 6, single buffered']
    #allocation9 [shape = 's32[1]{0}', space=sflag, size = 0x4, scoped, tag = 'scoped memory for lstm_classifier_forward.1']
    %15 = vsyncpa [#allocation7], 0
    %16 = vsyncpa [#allocation9], 0
    // Predicated region
    $region2: #{lstm_classifier_forward.1} parent=1 // pred_check
      _
    $region3: #{lstm_classifier_forward.1} parent=1 // pred_check_branch
      %18 = sbr.rel (0) target = $region5
    $region4: #{lstm_classifier_forward.1} parent=1 // pred_region
      _
    $region5: #{lstm_classifier_forward.1} parent=1 // pred_fallthru
      _
    // Predicated region
    $region6: #{lstm_classifier_forward.1} parent=1 // pred_check
      _
    $region7: #{lstm_classifier_forward.1} parent=1 // pred_check_branch
      %20 = sbr.rel (0) target = $region9
    $region8: #{lstm_classifier_forward.1} parent=1 // pred_region
      _
    $region9: #{lstm_classifier_forward.1} parent=1 // pred_fallthru
      _
    // Predicated region
    $region10: #{lstm_classifier_forward.1} parent=1 // pred_check
      _
    $region11: #{lstm_classifier_forward.1} parent=1 // pred_check_branch
      %22 = sbr.rel (0) target = $region13
    $region12: #{lstm_classifier_forward.1} parent=1 // pred_region
      _
    $region13: #{lstm_classifier_forward.1} parent=1 // pred_fallthru
      _
    // Predicated region
    $region14: #{lstm_classifier_forward.1} parent=1 // pred_check
      _
    $region15: #{lstm_classifier_forward.1} parent=1 // pred_check_branch
      %24 = sbr.rel (0) target = $region17
    $region16: #{lstm_classifier_forward.1} parent=1 // pred_region
      _
    $region17: #{lstm_classifier_forward.1} parent=1 // pred_fallthru
      _
    // Predicated region
    $region18: #{lstm_classifier_forward.1} parent=1 // pred_check
      _
    $region19: #{lstm_classifier_forward.1} parent=1 // pred_check_branch
      %26 = sbr.rel (0) target = $region21
    $region20: #{lstm_classifier_forward.1} parent=1 // pred_region
      _
    $region21: #{lstm_classifier_forward.1} parent=1 // pred_fallthru
      _
    // Predicated region
    $region22: #{lstm_classifier_forward.1} parent=1 // pred_check
      _
    $region23: #{lstm_classifier_forward.1} parent=1 // pred_check_branch
      %28 = sbr.rel (0) target = $region25
    $region24: #{lstm_classifier_forward.1} parent=1 // pred_region
      %30 = vsyncadd [#allocation7], 0
      %s31 = sshll.u32 %s5, 4
      %s32 = int_to_ptr.hbm [resolvable:$true] %s31
      %s33 = sshll.u32 [#allocation6], 4
      %s34 = int_to_ptr.vmem [resolvable:$true] %s33
      %39 = dma.hbm_to_vmem [thread:$0]  %s32, 2048, %s34, [#allocation7], 256, 256, 16
    $region25: #{lstm_classifier_forward.1} parent=1 // pred_fallthru
      _
    // Predicated region
    $region26: #{lstm_classifier_forward.1} parent=1 // pred_check
      _
    $region27: #{lstm_classifier_forward.1} parent=1 // pred_check_branch
      %41 = sbr.rel (0) target = $region29
    $region28: #{lstm_classifier_forward.1} parent=1 // pred_region
      %43 = vsyncadd [#allocation9], 0
      %s44 = sshll.u32 %s6, 4
      %s45 = int_to_ptr.hbm [resolvable:$true] %s44
      %s46 = sshll.u32 [#allocation8], 4
      %s47 = int_to_ptr.vmem [resolvable:$true] %s46
      %52 = dma.hbm_to_vmem [thread:$0]  %s45, 2048, %s47, [#allocation9], 256, 256, 16
    $region29: #{lstm_classifier_forward.1} parent=1 // pred_fallthru
      _
    // Predicated region
    $region30: #{lstm_classifier_forward.1} parent=1 // pred_check
      _
    $region31: #{lstm_classifier_forward.1} parent=1 // pred_check_branch
      %54 = sbr.rel (0) target = $region33
    $region32: #{lstm_classifier_forward.1} parent=1 // pred_region
      _
    $region33: #{lstm_classifier_forward.1} parent=1 // pred_fallthru
      _
    // Predicated region
    $region34: #{lstm_classifier_forward.1} parent=1 // pred_check
      _
    $region35: #{lstm_classifier_forward.1} parent=1 // pred_check_branch
      %56 = sbr.rel (0) target = $region37
    $region36: #{lstm_classifier_forward.1} parent=1 // pred_region
      _
    $region37: #{lstm_classifier_forward.1} parent=1 // pred_fallthru
      _
    // Predicated region
    $region38: #{lstm_classifier_forward.1} parent=1 // pred_check
      _
    $region39: #{lstm_classifier_forward.1} parent=1 // pred_check_branch
      %58 = sbr.rel (0) target = $region41
    $region40: #{lstm_classifier_forward.1} parent=1 // pred_region
      _
    $region41: #{lstm_classifier_forward.1} parent=1 // pred_fallthru
      _
    // Predicated region
    $region42: #{lstm_classifier_forward.1} parent=1 // pred_check
      _
    $region43: #{lstm_classifier_forward.1} parent=1 // pred_check_branch
      %60 = sbr.rel (0) target = $region45
    $region44: #{lstm_classifier_forward.1} parent=1 // pred_region
      %62 = dma.done [#allocation7], 2048
    $region45: #{lstm_classifier_forward.1} parent=1 // pred_fallthru
      _
    // Predicated region
    $region46: #{lstm_classifier_forward.1} parent=1 // pred_check
      _
    $region47: #{lstm_classifier_forward.1} parent=1 // pred_check_branch
      %64 = sbr.rel (0) target = $region49
    $region48: #{lstm_classifier_forward.1} parent=1 // pred_region
      %66 = dma.done [#allocation9], 2048
    $region49: #{lstm_classifier_forward.1} parent=1 // pred_fallthru
      _
    %v67 = vld [vmem:[%s0] sm:$0xff]
    %v68 = vld [vmem:[%s0 + $0x8] sm:$0xff]
    %v69 = vld [vmem:[%s0 + $0x10] sm:$0xff]
    %v70 = vld [vmem:[%s0 + $0x18] sm:$0xff]
    %v71 = vld [vmem:[%s0 + $0x20] sm:$0xff]
    %v72 = vld [vmem:[%s0 + $0x28] sm:$0xff]
    %v73 = vld [vmem:[%s0 + $0x30] sm:$0xff]
    %v74 = vld [vmem:[%s0 + $0x38] sm:$0xff]
    %v75 = vlaneseq
    %v76 = vand.u32 %v75, 127
    %77 = vset.pattern.permute.xlu0 0
    %78 = vperm.xlu0 %77, %v67
    %v79 = vpop.permute.xlu0 %78
    %80 = vset.pattern.permute.xlu0 0
    %81 = vperm.xlu0 %80, %v68
    %v82 = vpop.permute.xlu0 %81
    %83 = vset.pattern.permute.xlu0 0
    %84 = vperm.xlu0 %83, %v69
    %v85 = vpop.permute.xlu0 %84
    %86 = vset.pattern.permute.xlu0 0
    %87 = vperm.xlu0 %86, %v70
    %v88 = vpop.permute.xlu0 %87
    %89 = vset.pattern.permute.xlu0 0
    %90 = vperm.xlu0 %89, %v71
    %v91 = vpop.permute.xlu0 %90
    %92 = vset.pattern.permute.xlu0 0
    %93 = vperm.xlu0 %92, %v72
    %v94 = vpop.permute.xlu0 %93
    %95 = vset.pattern.permute.xlu0 0
    %96 = vperm.xlu0 %95, %v73
    %v97 = vpop.permute.xlu0 %96
    %98 = vset.pattern.permute.xlu0 0
    %99 = vperm.xlu0 %98, %v74
    %v100 = vpop.permute.xlu0 %99
    %vm101 = vcmp.eq.s32.totalorder %v79, %v76
    %vm102 = vcmp.eq.s32.totalorder %v82, %v76
    %vm103 = vcmp.eq.s32.totalorder %v85, %v76
    %vm104 = vcmp.eq.s32.totalorder %v88, %v76
    %vm105 = vcmp.eq.s32.totalorder %v91, %v76
    %vm106 = vcmp.eq.s32.totalorder %v94, %v76
    %vm107 = vcmp.eq.s32.totalorder %v97, %v76
    %vm108 = vcmp.eq.s32.totalorder %v100, %v76
    %v109 = vsel %vm101, 1, 0
    %v110 = vsel %vm102, 1, 0
    %v111 = vsel %vm103, 1, 0
    %v112 = vsel %vm104, 1, 0
    %v113 = vsel %vm105, 1, 0
    %v114 = vsel %vm106, 1, 0
    %v115 = vsel %vm107, 1, 0
    %v116 = vsel %vm108, 1, 0
    %v117 = vcvt.s32.f32 %v109
    %v118 = vcvt.s32.f32 %v110
    %v119 = vcvt.s32.f32 %v111
    %v120 = vcvt.s32.f32 %v112
    %v121 = vcvt.s32.f32 %v113
    %v122 = vcvt.s32.f32 %v114
    %v123 = vcvt.s32.f32 %v115
    %v124 = vcvt.s32.f32 %v116
    %v125 = vld [vmem:[%s1] sm:$0xff]
    %v126 = vld [vmem:[%s1 + $0x8] sm:$0xff]
    %v127 = vld [vmem:[%s1 + $0x10] sm:$0xff]
    %v128 = vld [vmem:[%s1 + $0x18] sm:$0xff]
    %v129 = vld [vmem:[%s1 + $0x20] sm:$0xff]
    %v130 = vld [vmem:[%s1 + $0x28] sm:$0xff]
    %v131 = vld [vmem:[%s1 + $0x30] sm:$0x3]
    %vm132 = vcmask 408576
    %v134 = vsel %vm132, %v117, 0
    %v137 = vsel %vm132, %v118, 0
    %v140 = vsel %vm132, %v119, 0
    %v143 = vsel %vm132, %v120, 0
    %v146 = vsel %vm132, %v121, 0
    %v149 = vsel %vm132, %v122, 0
    %v152 = vsel %vm132, %v123, 0
    %v155 = vsel %vm132, %v124, 0
    %vm157 = vcmask 1041408
    %v159 = vsel %vm157, %v131, 0
    %161 = vmatpush.msra.mxu0 0.0
    %162 = vmatpush.msra.mxu0 0.0
    %163 = vmatpush.msra.mxu0 0.0
    %164 = vmatpush.msra.mxu0 0.0
    %165 = vmatpush.msra.mxu0 0.0
    %166 = vmatpush.msra.mxu0 0.0
    %167 = vmatpush.msra.mxu0 0.0
    %168 = vmatpush.msra.mxu0 0.0
    %169 = vmatpush.msra.mxu0 0.0
    %170 = vmatpush.msra.mxu0 %v159
    %171 = vmatpush.msra.mxu0 %v130
    %172 = vmatpush.msra.mxu0 %v129
    %173 = vmatpush.msra.mxu0 %v128
    %174 = vmatpush.msra.mxu0 %v127
    %175 = vmatpush.msra.mxu0 %v126
    %176 = vmatpush.msra.mxu0 %v125
    %177 = vmatmul.f32.gmra.mxu0 %v134
    %v178 = vpop.f32.mrf.mxu0
    %v179 = vadd.f32 0.0, %v178
    %180 = vmatmul.f32.gmra.mxu0 %v137
    %v181 = vpop.f32.mrf.mxu0
    %v182 = vadd.f32 0.0, %v181
    %183 = vmatmul.f32.gmra.mxu0 %v140
    %v184 = vpop.f32.mrf.mxu0
    %v185 = vadd.f32 0.0, %v184
    %186 = vmatmul.f32.gmra.mxu0 %v143
    %v187 = vpop.f32.mrf.mxu0
    %v188 = vadd.f32 0.0, %v187
    %189 = vmatmul.f32.gmra.mxu0 %v146
    %v190 = vpop.f32.mrf.mxu0
    %v191 = vadd.f32 0.0, %v190
    %192 = vmatmul.f32.gmra.mxu0 %v149
    %v193 = vpop.f32.mrf.mxu0
    %v194 = vadd.f32 0.0, %v193
    %195 = vmatmul.f32.gmra.mxu0 %v152
    %v196 = vpop.f32.mrf.mxu0
    %v197 = vadd.f32 0.0, %v196
    %198 = vmatmul.f32.gmra.mxu0 %v155
    %v199 = vpop.f32.mrf.mxu0
    %v200 = vadd.f32 0.0, %v199
    %201 = vdwg.mxu0
    %vm202 = vcmask 261120
    %v203 = vsel %vm202, 0.0, 1.0
    %205 = vrot.lane.b32.xlu0 %v203, 64
    %v206 = vpop.permute.xlu0 %205
    %vm208 = vcmask 523264
    %v209 = vsel %vm208, %v203, %v206
    %vm210 = vcmp.gt.f32.partialorder %v209, 0.5
    %v211 = vld [vmem:[%s2] sm:$0xff]
    %v212 = vld [vmem:[%s2 + $0x8] sm:$0xff]
    %v213 = vld [vmem:[%s2 + $0x10] sm:$0xff]
    %v214 = vld [vmem:[%s2 + $0x18] sm:$0xff]
    %v215 = vld [vmem:[%s4] sm:$0x3]
    %v217 = vperm.slane %v215, 0
    %v218 = vperm.slane %v215, 1
    %vm221 = vcmask 130048
    %v223 = vsel %vm221, %v179, 0
    %v226 = vsel %vm221, %v182, 0
    %v229 = vsel %vm221, %v185, 0
    %v232 = vsel %vm221, %v188, 0
    %v235 = vsel %vm221, %v191, 0
    %v238 = vsel %vm221, %v194, 0
    %v241 = vsel %vm221, %v197, 0
    %v244 = vsel %vm221, %v200, 0
    %246 = vmatpush.msra.mxu0 0.0
    %247 = vmatpush.msra.mxu0 0.0
    %248 = vmatpush.msra.mxu0 0.0
    %249 = vmatpush.msra.mxu0 0.0
    %250 = vmatpush.msra.mxu0 0.0
    %251 = vmatpush.msra.mxu0 0.0
    %252 = vmatpush.msra.mxu0 0.0
    %253 = vmatpush.msra.mxu0 0.0
    %254 = vmatpush.msra.mxu0 0.0
    %255 = vmatpush.msra.mxu0 0.0
    %256 = vmatpush.msra.mxu0 0.0
    %257 = vmatpush.msra.mxu0 0.0
    %258 = vmatpush.msra.mxu0 0.0
    %259 = vmatpush.msra.mxu0 0.0
    %260 = vmatpush.msra.mxu0 %v213
    %261 = vmatpush.msra.mxu0 %v211
    %262 = vmatmul.f32.gmra.mxu0 %v223
    %v263 = vpop.f32.mrf.mxu0
    %v264 = vadd.f32 %v217, %v263
    %265 = vmatmul.f32.gmra.mxu0 %v226
    %v266 = vpop.f32.mrf.mxu0
    %v267 = vadd.f32 %v217, %v266
    %268 = vmatmul.f32.gmra.mxu0 %v229
    %v269 = vpop.f32.mrf.mxu0
    %v270 = vadd.f32 %v217, %v269
    %271 = vmatmul.f32.gmra.mxu0 %v232
    %v272 = vpop.f32.mrf.mxu0
    %v273 = vadd.f32 %v217, %v272
    %274 = vmatmul.f32.gmra.mxu0 %v235
    %v275 = vpop.f32.mrf.mxu0
    %v276 = vadd.f32 %v217, %v275
    %277 = vmatmul.f32.gmra.mxu0 %v238
    %v278 = vpop.f32.mrf.mxu0
    %v279 = vadd.f32 %v217, %v278
    %280 = vmatmul.f32.gmra.mxu0 %v241
    %v281 = vpop.f32.mrf.mxu0
    %v282 = vadd.f32 %v217, %v281
    %283 = vmatmul.f32.gmra.mxu0 %v244
    %v284 = vpop.f32.mrf.mxu0
    %v285 = vadd.f32 %v217, %v284
    %286 = vdwg.mxu0
    %287 = vmatpush.msra.mxu0 0.0
    %288 = vmatpush.msra.mxu0 0.0
    %289 = vmatpush.msra.mxu0 0.0
    %290 = vmatpush.msra.mxu0 0.0
    %291 = vmatpush.msra.mxu0 0.0
    %292 = vmatpush.msra.mxu0 0.0
    %293 = vmatpush.msra.mxu0 0.0
    %294 = vmatpush.msra.mxu0 0.0
    %295 = vmatpush.msra.mxu0 0.0
    %296 = vmatpush.msra.mxu0 0.0
    %297 = vmatpush.msra.mxu0 0.0
    %298 = vmatpush.msra.mxu0 0.0
    %299 = vmatpush.msra.mxu0 0.0
    %300 = vmatpush.msra.mxu0 0.0
    %301 = vmatpush.msra.mxu0 %v214
    %302 = vmatpush.msra.mxu0 %v212
    %303 = vmatmul.f32.gmra.mxu0 %v223
    %v304 = vpop.f32.mrf.mxu0
    %v305 = vadd.f32 %v218, %v304
    %306 = vmatmul.f32.gmra.mxu0 %v226
    %v307 = vpop.f32.mrf.mxu0
    %v308 = vadd.f32 %v218, %v307
    %309 = vmatmul.f32.gmra.mxu0 %v229
    %v310 = vpop.f32.mrf.mxu0
    %v311 = vadd.f32 %v218, %v310
    %312 = vmatmul.f32.gmra.mxu0 %v232
    %v313 = vpop.f32.mrf.mxu0
    %v314 = vadd.f32 %v218, %v313
    %315 = vmatmul.f32.gmra.mxu0 %v235
    %v316 = vpop.f32.mrf.mxu0
    %v317 = vadd.f32 %v218, %v316
    %318 = vmatmul.f32.gmra.mxu0 %v238
    %v319 = vpop.f32.mrf.mxu0
    %v320 = vadd.f32 %v218, %v319
    %321 = vmatmul.f32.gmra.mxu0 %v241
    %v322 = vpop.f32.mrf.mxu0
    %v323 = vadd.f32 %v218, %v322
    %324 = vmatmul.f32.gmra.mxu0 %v244
    %v325 = vpop.f32.mrf.mxu0
    %v326 = vadd.f32 %v218, %v325
    %327 = vdwg.mxu0
    %328 = vst [vmem:[#allocation2] sm:$0xff] %v264
    %329 = vst [vmem:[#allocation2 + $0x8] sm:$0xff] %v305
    %330 = vst [vmem:[#allocation2 + $0x10] sm:$0xff] %v267
    %331 = vst [vmem:[#allocation2 + $0x18] sm:$0xff] %v308
    %332 = vst [vmem:[#allocation2 + $0x20] sm:$0xff] %v270
    %333 = vst [vmem:[#allocation2 + $0x28] sm:$0xff] %v311
    %334 = vst [vmem:[#allocation2 + $0x30] sm:$0xff] %v273
    %335 = vst [vmem:[#allocation2 + $0x38] sm:$0xff] %v314
    %336 = vst [vmem:[#allocation2 + $0x40] sm:$0xff] %v276
    %337 = vst [vmem:[#allocation2 + $0x48] sm:$0xff] %v317
    %338 = vst [vmem:[#allocation2 + $0x50] sm:$0xff] %v279
    %339 = vst [vmem:[#allocation2 + $0x58] sm:$0xff] %v320
    %340 = vst [vmem:[#allocation2 + $0x60] sm:$0xff] %v282
    %341 = vst [vmem:[#allocation2 + $0x68] sm:$0xff] %v323
    %342 = vst [vmem:[#allocation2 + $0x70] sm:$0xff] %v285
    %343 = vst [vmem:[#allocation2 + $0x78] sm:$0xff] %v326
    %s344 = smul.u32 0, 2
    %s345 = smul.addr %s344, 8
    %s346 = scalar_lea.vmem [#allocation2], %s345
    %v347 = vld [vmem:[%s346] sm:$0xff]
    %v348 = vld [vmem:[%s346 + $0x8] sm:$0xff]
    %s349 = smul.u32 7, 2
    %s350 = smul.addr %s349, 8
    %s351 = scalar_lea.vmem [#allocation2], %s350
    %v352 = vld [vmem:[%s351] sm:$0xff]
    %v353 = vld [vmem:[%s351 + $0x8] sm:$0xff]
    %v354 = vsel %vm210, %v352, %v347
    %v355 = vsel %vm210, %v353, %v348
    %v356 = vld [vmem:[%s3] sm:$0xff]
    %v357 = vld [vmem:[%s3 + $0x8] sm:$0xff]
    %v358 = vld [vmem:[%s3 + $0x10] sm:$0xff]
    %v359 = vld [vmem:[%s3 + $0x18] sm:$0xff]
    %v360 = vld [vmem:[%s3 + $0x20] sm:$0xff]
    %v361 = vld [vmem:[%s3 + $0x28] sm:$0xff]
    %v362 = vld [vmem:[%s3 + $0x30] sm:$0xff]
    %v363 = vld [vmem:[%s3 + $0x38] sm:$0xff]
    %v364 = vld [vmem:[%s3 + $0x40] sm:$0xff]
    %v365 = vld [vmem:[%s3 + $0x48] sm:$0xff]
    %v366 = vld [vmem:[%s3 + $0x50] sm:$0xff]
    %v367 = vld [vmem:[%s3 + $0x58] sm:$0xff]
    %v368 = vld [vmem:[%s3 + $0x60] sm:$0xff]
    %v369 = vld [vmem:[%s3 + $0x68] sm:$0xff]
    %v370 = vld [vmem:[%s3 + $0x70] sm:$0xff]
    %v371 = vld [vmem:[%s3 + $0x78] sm:$0xff]
    %v373 = vsel %vm208, 0.0, 0
    %375 = vmatpush.msra.mxu0 0.0
    %376 = vmatpush.msra.mxu0 0.0
    %377 = vmatpush.msra.mxu0 0.0
    %378 = vmatpush.msra.mxu0 0.0
    %379 = vmatpush.msra.mxu0 0.0
    %380 = vmatpush.msra.mxu0 0.0
    %381 = vmatpush.msra.mxu0 0.0
    %382 = vmatpush.msra.mxu0 0.0
    %383 = vmatpush.msra.mxu0 %v370
    %384 = vmatpush.msra.mxu0 %v368
    %385 = vmatpush.msra.mxu0 %v366
    %386 = vmatpush.msra.mxu0 %v364
    %387 = vmatpush.msra.mxu0 %v362
    %388 = vmatpush.msra.mxu0 %v360
    %389 = vmatpush.msra.mxu0 %v358
    %390 = vmatpush.msra.mxu0 %v356
    %391 = vmatmul.f32.gmra.mxu0 %v373
    %v392 = vpop.f32.mrf.mxu0
    %v393 = vadd.f32 0.0, %v392
    %394 = vdwg.mxu0
    %395 = vmatpush.msra.mxu0 0.0
    %396 = vmatpush.msra.mxu0 0.0
    %397 = vmatpush.msra.mxu0 0.0
    %398 = vmatpush.msra.mxu0 0.0
    %399 = vmatpush.msra.mxu0 0.0
    %400 = vmatpush.msra.mxu0 0.0
    %401 = vmatpush.msra.mxu0 0.0
    %402 = vmatpush.msra.mxu0 0.0
    %403 = vmatpush.msra.mxu0 %v371
    %404 = vmatpush.msra.mxu0 %v369
    %405 = vmatpush.msra.mxu0 %v367
    %406 = vmatpush.msra.mxu0 %v365
    %407 = vmatpush.msra.mxu0 %v363
    %408 = vmatpush.msra.mxu0 %v361
    %409 = vmatpush.msra.mxu0 %v359
    %410 = vmatpush.msra.mxu0 %v357
    %411 = vmatmul.f32.gmra.mxu0 %v373
    %v412 = vpop.f32.mrf.mxu0
    %v413 = vadd.f32 0.0, %v412
    %414 = vdwg.mxu0
    %v415 = vadd.f32 %v354, %v393
    %v416 = vadd.f32 %v355, %v413
    %v417 = vxor.u32 %v415, 2147483648
    %v418 = vmul.f32 %v417, 1.442695
    %v419 = vpow.pop %v418
    %v420 = vadd.f32 %v419, 1.0
    %v421 = vrcp.pop %v420
    %v422 = vmul.f32 %v420, %v421
    %v423 = vsub.f32 1.0, %v422
    %v424 = vmul.f32 %v421, %v423
    %v425 = vadd.f32 %v421, %v424
    %vm426 = vweird.f32 %v420
    %vm427 = vweird.f32 %v421
    %vm428 = vmor %vm426, %vm427
    %v429 = vsel %vm428, %v421, %v425
    %v430 = vand.u32 2147483647, %v420
    %vm431 = vcmp.eq.f32.partialorder %v430, 8.507059e+37
    %v432 = vand.u32 %v420, 2147483648
    %v433 = vor.u32 1.1754944e-38, %v432
    %v434 = vsel %vm431, %v433, %v429
    %v435 = vmul.f32 1.0, %v434
    %v436 = vtanh.pop %v416
    %v437 = vxor.u32 %v416, 2147483648
    %v438 = vmul.f32 %v437, 1.442695
    %v439 = vpow.pop %v438
    %v440 = vadd.f32 %v439, 1.0
    %v441 = vrcp.pop %v440
    %v442 = vmul.f32 %v440, %v441
    %v443 = vsub.f32 1.0, %v442
    %v444 = vmul.f32 %v441, %v443
    %v445 = vadd.f32 %v441, %v444
    %vm446 = vweird.f32 %v440
    %vm447 = vweird.f32 %v441
    %vm448 = vmor %vm446, %vm447
    %v449 = vsel %vm448, %v441, %v445
    %v450 = vand.u32 2147483647, %v440
    %vm451 = vcmp.eq.f32.partialorder %v450, 8.507059e+37
    %v452 = vand.u32 %v440, 2147483648
    %v453 = vor.u32 1.1754944e-38, %v452
    %v454 = vsel %vm451, %v453, %v449
    %v455 = vmul.f32 1.0, %v454
    %v456 = vmul.f32 %v435, 0.0
    %v457 = vmul.f32 %v435, %v436
    %459 = vrot.lane.b32.xlu0 %v457, 64
    %v460 = vpop.permute.xlu0 %459
    %v462 = vadd.f32 %v456, %v460
    %v463 = vtanh.pop %v462
    %v464 = vmul.f32 %v455, %v463
    %466 = vrot.lane.b32.xlu0 %v464, 64
    %v467 = vpop.permute.xlu0 %466
    %469 = vst.msk [vmem:[#allocation3] sm:$0xff] %vm202, %v467
    %470 = vrot.lane.b32.xlu0 %v464, 32
    %v471 = vpop.permute.xlu0 %470
    %s473 = scalar_lea.vmem [#allocation4], 56
    %474 = vst.msk [vmem:[%s473] sm:$0xff] %vm202, %v471
    %s475 = smul.u32 1, 2
    %s476 = smul.addr %s475, 8
    %s477 = scalar_lea.vmem [#allocation2], %s476
    %v478 = vld [vmem:[%s477] sm:$0xff]
    %v479 = vld [vmem:[%s477 + $0x8] sm:$0xff]
    %s480 = smul.u32 6, 2
    %s481 = smul.addr %s480, 8
    %s482 = scalar_lea.vmem [#allocation2], %s481
    %v483 = vld [vmem:[%s482] sm:$0xff]
    %v484 = vld [vmem:[%s482 + $0x8] sm:$0xff]
    %v485 = vsel %vm210, %v483, %v478
    %v486 = vsel %vm210, %v484, %v479
    %v487 = vld [vmem:[%s3] sm:$0xff]
    %v488 = vld [vmem:[%s3 + $0x8] sm:$0xff]
    %v489 = vld [vmem:[%s3 + $0x10] sm:$0xff]
    %v490 = vld [vmem:[%s3 + $0x18] sm:$0xff]
    %v491 = vld [vmem:[%s3 + $0x20] sm:$0xff]
    %v492 = vld [vmem:[%s3 + $0x28] sm:$0xff]
    %v493 = vld [vmem:[%s3 + $0x30] sm:$0xff]
    %v494 = vld [vmem:[%s3 + $0x38] sm:$0xff]
    %v495 = vld [vmem:[%s3 + $0x40] sm:$0xff]
    %v496 = vld [vmem:[%s3 + $0x48] sm:$0xff]
    %v497 = vld [vmem:[%s3 + $0x50] sm:$0xff]
    %v498 = vld [vmem:[%s3 + $0x58] sm:$0xff]
    %v499 = vld [vmem:[%s3 + $0x60] sm:$0xff]
    %v500 = vld [vmem:[%s3 + $0x68] sm:$0xff]
    %v501 = vld [vmem:[%s3 + $0x70] sm:$0xff]
    %v502 = vld [vmem:[%s3 + $0x78] sm:$0xff]
    %v503 = vsel %vm208, %v467, 0
    %505 = vmatpush.msra.mxu0 0.0
    %506 = vmatpush.msra.mxu0 0.0
    %507 = vmatpush.msra.mxu0 0.0
    %508 = vmatpush.msra.mxu0 0.0
    %509 = vmatpush.msra.mxu0 0.0
    %510 = vmatpush.msra.mxu0 0.0
    %511 = vmatpush.msra.mxu0 0.0
    %512 = vmatpush.msra.mxu0 0.0
    %513 = vmatpush.msra.mxu0 %v501
    %514 = vmatpush.msra.mxu0 %v499
    %515 = vmatpush.msra.mxu0 %v497
    %516 = vmatpush.msra.mxu0 %v495
    %517 = vmatpush.msra.mxu0 %v493
    %518 = vmatpush.msra.mxu0 %v491
    %519 = vmatpush.msra.mxu0 %v489
    %520 = vmatpush.msra.mxu0 %v487
    %521 = vmatmul.f32.gmra.mxu0 %v503
    %v522 = vpop.f32.mrf.mxu0
    %v523 = vadd.f32 0.0, %v522
    %524 = vdwg.mxu0
    %525 = vmatpush.msra.mxu0 0.0
    %526 = vmatpush.msra.mxu0 0.0
    %527 = vmatpush.msra.mxu0 0.0
    %528 = vmatpush.msra.mxu0 0.0
    %529 = vmatpush.msra.mxu0 0.0
    %530 = vmatpush.msra.mxu0 0.0
    %531 = vmatpush.msra.mxu0 0.0
    %532 = vmatpush.msra.mxu0 0.0
    %533 = vmatpush.msra.mxu0 %v502
    %534 = vmatpush.msra.mxu0 %v500
    %535 = vmatpush.msra.mxu0 %v498
    %536 = vmatpush.msra.mxu0 %v496
    %537 = vmatpush.msra.mxu0 %v494
    %538 = vmatpush.msra.mxu0 %v492
    %539 = vmatpush.msra.mxu0 %v490
    %540 = vmatpush.msra.mxu0 %v488
    %541 = vmatmul.f32.gmra.mxu0 %v503
    %v542 = vpop.f32.mrf.mxu0
    %v543 = vadd.f32 0.0, %v542
    %544 = vdwg.mxu0
    %v545 = vadd.f32 %v485, %v523
    %v546 = vadd.f32 %v486, %v543
    %v547 = vxor.u32 %v545, 2147483648
    %v548 = vmul.f32 %v547, 1.442695
    %v549 = vpow.pop %v548
    %v550 = vadd.f32 %v549, 1.0
    %v551 = vrcp.pop %v550
    %v552 = vmul.f32 %v550, %v551
    %v553 = vsub.f32 1.0, %v552
    %v554 = vmul.f32 %v551, %v553
    %v555 = vadd.f32 %v551, %v554
    %vm556 = vweird.f32 %v550
    %vm557 = vweird.f32 %v551
    %vm558 = vmor %vm556, %vm557
    %v559 = vsel %vm558, %v551, %v555
    %v560 = vand.u32 2147483647, %v550
    %vm561 = vcmp.eq.f32.partialorder %v560, 8.507059e+37
    %v562 = vand.u32 %v550, 2147483648
    %v563 = vor.u32 1.1754944e-38, %v562
    %v564 = vsel %vm561, %v563, %v559
    %v565 = vmul.f32 1.0, %v564
    %v566 = vtanh.pop %v546
    %v567 = vxor.u32 %v546, 2147483648
    %v568 = vmul.f32 %v567, 1.442695
    %v569 = vpow.pop %v568
    %v570 = vadd.f32 %v569, 1.0
    %v571 = vrcp.pop %v570
    %v572 = vmul.f32 %v570, %v571
    %v573 = vsub.f32 1.0, %v572
    %v574 = vmul.f32 %v571, %v573
    %v575 = vadd.f32 %v571, %v574
    %vm576 = vweird.f32 %v570
    %vm577 = vweird.f32 %v571
    %vm578 = vmor %vm576, %vm577
    %v579 = vsel %vm578, %v571, %v575
    %v580 = vand.u32 2147483647, %v570
    %vm581 = vcmp.eq.f32.partialorder %v580, 8.507059e+37
    %v582 = vand.u32 %v570, 2147483648
    %v583 = vor.u32 1.1754944e-38, %v582
    %v584 = vsel %vm581, %v583, %v579
    %v585 = vmul.f32 1.0, %v584
    %v586 = vmul.f32 %v565, %v462
    %v587 = vmul.f32 %v565, %v566
    %589 = vrot.lane.b32.xlu0 %v587, 64
    %v590 = vpop.permute.xlu0 %589
    %v592 = vadd.f32 %v586, %v590
    %v593 = vtanh.pop %v592
    %v594 = vmul.f32 %v585, %v593
    %596 = vrot.lane.b32.xlu0 %v594, 64
    %v597 = vpop.permute.xlu0 %596
    %s599 = scalar_lea.vmem [#allocation3], 8
    %600 = vst.msk [vmem:[%s599] sm:$0xff] %vm202, %v597
    %601 = vrot.lane.b32.xlu0 %v594, 32
    %v602 = vpop.permute.xlu0 %601
    %s604 = scalar_lea.vmem [#allocation4], 48
    %605 = vst.msk [vmem:[%s604] sm:$0xff] %vm202, %v602
    %s606 = smul.u32 2, 2
    %s607 = smul.addr %s606, 8
    %s608 = scalar_lea.vmem [#allocation2], %s607
    %v609 = vld [vmem:[%s608] sm:$0xff]
    %v610 = vld [vmem:[%s608 + $0x8] sm:$0xff]
    %s611 = smul.u32 5, 2
    %s612 = smul.addr %s611, 8
    %s613 = scalar_lea.vmem [#allocation2], %s612
    %v614 = vld [vmem:[%s613] sm:$0xff]
    %v615 = vld [vmem:[%s613 + $0x8] sm:$0xff]
    %v616 = vsel %vm210, %v614, %v609
    %v617 = vsel %vm210, %v615, %v610
    %v618 = vld [vmem:[%s3] sm:$0xff]
    %v619 = vld [vmem:[%s3 + $0x8] sm:$0xff]
    %v620 = vld [vmem:[%s3 + $0x10] sm:$0xff]
    %v621 = vld [vmem:[%s3 + $0x18] sm:$0xff]
    %v622 = vld [vmem:[%s3 + $0x20] sm:$0xff]
    %v623 = vld [vmem:[%s3 + $0x28] sm:$0xff]
    %v624 = vld [vmem:[%s3 + $0x30] sm:$0xff]
    %v625 = vld [vmem:[%s3 + $0x38] sm:$0xff]
    %v626 = vld [vmem:[%s3 + $0x40] sm:$0xff]
    %v627 = vld [vmem:[%s3 + $0x48] sm:$0xff]
    %v628 = vld [vmem:[%s3 + $0x50] sm:$0xff]
    %v629 = vld [vmem:[%s3 + $0x58] sm:$0xff]
    %v630 = vld [vmem:[%s3 + $0x60] sm:$0xff]
    %v631 = vld [vmem:[%s3 + $0x68] sm:$0xff]
    %v632 = vld [vmem:[%s3 + $0x70] sm:$0xff]
    %v633 = vld [vmem:[%s3 + $0x78] sm:$0xff]
    %v634 = vsel %vm208, %v597, 0
    %636 = vmatpush.msra.mxu0 0.0
    %637 = vmatpush.msra.mxu0 0.0
    %638 = vmatpush.msra.mxu0 0.0
    %639 = vmatpush.msra.mxu0 0.0
    %640 = vmatpush.msra.mxu0 0.0
    %641 = vmatpush.msra.mxu0 0.0
    %642 = vmatpush.msra.mxu0 0.0
    %643 = vmatpush.msra.mxu0 0.0
    %644 = vmatpush.msra.mxu0 %v632
    %645 = vmatpush.msra.mxu0 %v630
    %646 = vmatpush.msra.mxu0 %v628
    %647 = vmatpush.msra.mxu0 %v626
    %648 = vmatpush.msra.mxu0 %v624
    %649 = vmatpush.msra.mxu0 %v622
    %650 = vmatpush.msra.mxu0 %v620
    %651 = vmatpush.msra.mxu0 %v618
    %652 = vmatmul.f32.gmra.mxu0 %v634
    %v653 = vpop.f32.mrf.mxu0
    %v654 = vadd.f32 0.0, %v653
    %655 = vdwg.mxu0
    %656 = vmatpush.msra.mxu0 0.0
    %657 = vmatpush.msra.mxu0 0.0
    %658 = vmatpush.msra.mxu0 0.0
    %659 = vmatpush.msra.mxu0 0.0
    %660 = vmatpush.msra.mxu0 0.0
    %661 = vmatpush.msra.mxu0 0.0
    %662 = vmatpush.msra.mxu0 0.0
    %663 = vmatpush.msra.mxu0 0.0
    %664 = vmatpush.msra.mxu0 %v633
    %665 = vmatpush.msra.mxu0 %v631
    %666 = vmatpush.msra.mxu0 %v629
    %667 = vmatpush.msra.mxu0 %v627
    %668 = vmatpush.msra.mxu0 %v625
    %669 = vmatpush.msra.mxu0 %v623
    %670 = vmatpush.msra.mxu0 %v621
    %671 = vmatpush.msra.mxu0 %v619
    %672 = vmatmul.f32.gmra.mxu0 %v634
    %v673 = vpop.f32.mrf.mxu0
    %v674 = vadd.f32 0.0, %v673
    %675 = vdwg.mxu0
    %v676 = vadd.f32 %v616, %v654
    %v677 = vadd.f32 %v617, %v674
    %v678 = vxor.u32 %v676, 2147483648
    %v679 = vmul.f32 %v678, 1.442695
    %v680 = vpow.pop %v679
    %v681 = vadd.f32 %v680, 1.0
    %v682 = vrcp.pop %v681
    %v683 = vmul.f32 %v681, %v682
    %v684 = vsub.f32 1.0, %v683
    %v685 = vmul.f32 %v682, %v684
    %v686 = vadd.f32 %v682, %v685
    %vm687 = vweird.f32 %v681
    %vm688 = vweird.f32 %v682
    %vm689 = vmor %vm687, %vm688
    %v690 = vsel %vm689, %v682, %v686
    %v691 = vand.u32 2147483647, %v681
    %vm692 = vcmp.eq.f32.partialorder %v691, 8.507059e+37
    %v693 = vand.u32 %v681, 2147483648
    %v694 = vor.u32 1.1754944e-38, %v693
    %v695 = vsel %vm692, %v694, %v690
    %v696 = vmul.f32 1.0, %v695
    %v697 = vtanh.pop %v677
    %v698 = vxor.u32 %v677, 2147483648
    %v699 = vmul.f32 %v698, 1.442695
    %v700 = vpow.pop %v699
    %v701 = vadd.f32 %v700, 1.0
    %v702 = vrcp.pop %v701
    %v703 = vmul.f32 %v701, %v702
    %v704 = vsub.f32 1.0, %v703
    %v705 = vmul.f32 %v702, %v704
    %v706 = vadd.f32 %v702, %v705
    %vm707 = vweird.f32 %v701
    %vm708 = vweird.f32 %v702
    %vm709 = vmor %vm707, %vm708
    %v710 = vsel %vm709, %v702, %v706
    %v711 = vand.u32 2147483647, %v701
    %vm712 = vcmp.eq.f32.partialorder %v711, 8.507059e+37
    %v713 = vand.u32 %v701, 2147483648
    %v714 = vor.u32 1.1754944e-38, %v713
    %v715 = vsel %vm712, %v714, %v710
    %v716 = vmul.f32 1.0, %v715
    %v717 = vmul.f32 %v696, %v592
    %v718 = vmul.f32 %v696, %v697
    %720 = vrot.lane.b32.xlu0 %v718, 64
    %v721 = vpop.permute.xlu0 %720
    %v723 = vadd.f32 %v717, %v721
    %v724 = vtanh.pop %v723
    %v725 = vmul.f32 %v716, %v724
    %727 = vrot.lane.b32.xlu0 %v725, 64
    %v728 = vpop.permute.xlu0 %727
    %s730 = scalar_lea.vmem [#allocation3], 16
    %731 = vst.msk [vmem:[%s730] sm:$0xff] %vm202, %v728
    %732 = vrot.lane.b32.xlu0 %v725, 32
    %v733 = vpop.permute.xlu0 %732
    %s735 = scalar_lea.vmem [#allocation4], 40
    %736 = vst.msk [vmem:[%s735] sm:$0xff] %vm202, %v733
    %s737 = smul.u32 3, 2
    %s738 = smul.addr %s737, 8
    %s739 = scalar_lea.vmem [#allocation2], %s738
    %v740 = vld [vmem:[%s739] sm:$0xff]
    %v741 = vld [vmem:[%s739 + $0x8] sm:$0xff]
    %s742 = smul.u32 4, 2
    %s743 = smul.addr %s742, 8
    %s744 = scalar_lea.vmem [#allocation2], %s743
    %v745 = vld [vmem:[%s744] sm:$0xff]
    %v746 = vld [vmem:[%s744 + $0x8] sm:$0xff]
    %v747 = vsel %vm210, %v745, %v740
    %v748 = vsel %vm210, %v746, %v741
    %v749 = vld [vmem:[%s3] sm:$0xff]
    %v750 = vld [vmem:[%s3 + $0x8] sm:$0xff]
    %v751 = vld [vmem:[%s3 + $0x10] sm:$0xff]
    %v752 = vld [vmem:[%s3 + $0x18] sm:$0xff]
    %v753 = vld [vmem:[%s3 + $0x20] sm:$0xff]
    %v754 = vld [vmem:[%s3 + $0x28] sm:$0xff]
    %v755 = vld [vmem:[%s3 + $0x30] sm:$0xff]
    %v756 = vld [vmem:[%s3 + $0x38] sm:$0xff]
    %v757 = vld [vmem:[%s3 + $0x40] sm:$0xff]
    %v758 = vld [vmem:[%s3 + $0x48] sm:$0xff]
    %v759 = vld [vmem:[%s3 + $0x50] sm:$0xff]
    %v760 = vld [vmem:[%s3 + $0x58] sm:$0xff]
    %v761 = vld [vmem:[%s3 + $0x60] sm:$0xff]
    %v762 = vld [vmem:[%s3 + $0x68] sm:$0xff]
    %v763 = vld [vmem:[%s3 + $0x70] sm:$0xff]
    %v764 = vld [vmem:[%s3 + $0x78] sm:$0xff]
    %v765 = vsel %vm208, %v728, 0
    %767 = vmatpush.msra.mxu0 0.0
    %768 = vmatpush.msra.mxu0 0.0
    %769 = vmatpush.msra.mxu0 0.0
    %770 = vmatpush.msra.mxu0 0.0
    %771 = vmatpush.msra.mxu0 0.0
    %772 = vmatpush.msra.mxu0 0.0
    %773 = vmatpush.msra.mxu0 0.0
    %774 = vmatpush.msra.mxu0 0.0
    %775 = vmatpush.msra.mxu0 %v763
    %776 = vmatpush.msra.mxu0 %v761
    %777 = vmatpush.msra.mxu0 %v759
    %778 = vmatpush.msra.mxu0 %v757
    %779 = vmatpush.msra.mxu0 %v755
    %780 = vmatpush.msra.mxu0 %v753
    %781 = vmatpush.msra.mxu0 %v751
    %782 = vmatpush.msra.mxu0 %v749
    %783 = vmatmul.f32.gmra.mxu0 %v765
    %v784 = vpop.f32.mrf.mxu0
    %v785 = vadd.f32 0.0, %v784
    %786 = vdwg.mxu0
    %787 = vmatpush.msra.mxu0 0.0
    %788 = vmatpush.msra.mxu0 0.0
    %789 = vmatpush.msra.mxu0 0.0
    %790 = vmatpush.msra.mxu0 0.0
    %791 = vmatpush.msra.mxu0 0.0
    %792 = vmatpush.msra.mxu0 0.0
    %793 = vmatpush.msra.mxu0 0.0
    %794 = vmatpush.msra.mxu0 0.0
    %795 = vmatpush.msra.mxu0 %v764
    %796 = vmatpush.msra.mxu0 %v762
    %797 = vmatpush.msra.mxu0 %v760
    %798 = vmatpush.msra.mxu0 %v758
    %799 = vmatpush.msra.mxu0 %v756
    %800 = vmatpush.msra.mxu0 %v754
    %801 = vmatpush.msra.mxu0 %v752
    %802 = vmatpush.msra.mxu0 %v750
    %803 = vmatmul.f32.gmra.mxu0 %v765
    %v804 = vpop.f32.mrf.mxu0
    %v805 = vadd.f32 0.0, %v804
    %806 = vdwg.mxu0
    %v807 = vadd.f32 %v747, %v785
    %v808 = vadd.f32 %v748, %v805
    %v809 = vxor.u32 %v807, 2147483648
    %v810 = vmul.f32 %v809, 1.442695
    %v811 = vpow.pop %v810
    %v812 = vadd.f32 %v811, 1.0
    %v813 = vrcp.pop %v812
    %v814 = vmul.f32 %v812, %v813
    %v815 = vsub.f32 1.0, %v814
    %v816 = vmul.f32 %v813, %v815
    %v817 = vadd.f32 %v813, %v816
    %vm818 = vweird.f32 %v812
    %vm819 = vweird.f32 %v813
    %vm820 = vmor %vm818, %vm819
    %v821 = vsel %vm820, %v813, %v817
    %v822 = vand.u32 2147483647, %v812
    %vm823 = vcmp.eq.f32.partialorder %v822, 8.507059e+37
    %v824 = vand.u32 %v812, 2147483648
    %v825 = vor.u32 1.1754944e-38, %v824
    %v826 = vsel %vm823, %v825, %v821
    %v827 = vmul.f32 1.0, %v826
    %v828 = vtanh.pop %v808
    %v829 = vxor.u32 %v808, 2147483648
    %v830 = vmul.f32 %v829, 1.442695
    %v831 = vpow.pop %v830
    %v832 = vadd.f32 %v831, 1.0
    %v833 = vrcp.pop %v832
    %v834 = vmul.f32 %v832, %v833
    %v835 = vsub.f32 1.0, %v834
    %v836 = vmul.f32 %v833, %v835
    %v837 = vadd.f32 %v833, %v836
    %vm838 = vweird.f32 %v832
    %vm839 = vweird.f32 %v833
    %vm840 = vmor %vm838, %vm839
    %v841 = vsel %vm840, %v833, %v837
    %v842 = vand.u32 2147483647, %v832
    %vm843 = vcmp.eq.f32.partialorder %v842, 8.507059e+37
    %v844 = vand.u32 %v832, 2147483648
    %v845 = vor.u32 1.1754944e-38, %v844
    %v846 = vsel %vm843, %v845, %v841
    %v847 = vmul.f32 1.0, %v846
    %v848 = vmul.f32 %v827, %v723
    %v849 = vmul.f32 %v827, %v828
    %851 = vrot.lane.b32.xlu0 %v849, 64
    %v852 = vpop.permute.xlu0 %851
    %v854 = vadd.f32 %v848, %v852
    %v855 = vtanh.pop %v854
    %v856 = vmul.f32 %v847, %v855
    %858 = vrot.lane.b32.xlu0 %v856, 64
    %v859 = vpop.permute.xlu0 %858
    %s861 = scalar_lea.vmem [#allocation3], 24
    %862 = vst.msk [vmem:[%s861] sm:$0xff] %vm202, %v859
    %863 = vrot.lane.b32.xlu0 %v856, 32
    %v864 = vpop.permute.xlu0 %863
    %s866 = scalar_lea.vmem [#allocation4], 32
    %867 = vst.msk [vmem:[%s866] sm:$0xff] %vm202, %v864
    %v868 = vld [vmem:[%s744] sm:$0xff]
    %v869 = vld [vmem:[%s744 + $0x8] sm:$0xff]
    %v870 = vld [vmem:[%s739] sm:$0xff]
    %v871 = vld [vmem:[%s739 + $0x8] sm:$0xff]
    %v872 = vsel %vm210, %v870, %v868
    %v873 = vsel %vm210, %v871, %v869
    %v874 = vld [vmem:[%s3] sm:$0xff]
    %v875 = vld [vmem:[%s3 + $0x8] sm:$0xff]
    %v876 = vld [vmem:[%s3 + $0x10] sm:$0xff]
    %v877 = vld [vmem:[%s3 + $0x18] sm:$0xff]
    %v878 = vld [vmem:[%s3 + $0x20] sm:$0xff]
    %v879 = vld [vmem:[%s3 + $0x28] sm:$0xff]
    %v880 = vld [vmem:[%s3 + $0x30] sm:$0xff]
    %v881 = vld [vmem:[%s3 + $0x38] sm:$0xff]
    %v882 = vld [vmem:[%s3 + $0x40] sm:$0xff]
    %v883 = vld [vmem:[%s3 + $0x48] sm:$0xff]
    %v884 = vld [vmem:[%s3 + $0x50] sm:$0xff]
    %v885 = vld [vmem:[%s3 + $0x58] sm:$0xff]
    %v886 = vld [vmem:[%s3 + $0x60] sm:$0xff]
    %v887 = vld [vmem:[%s3 + $0x68] sm:$0xff]
    %v888 = vld [vmem:[%s3 + $0x70] sm:$0xff]
    %v889 = vld [vmem:[%s3 + $0x78] sm:$0xff]
    %v890 = vsel %vm208, %v859, 0
    %892 = vmatpush.msra.mxu0 0.0
    %893 = vmatpush.msra.mxu0 0.0
    %894 = vmatpush.msra.mxu0 0.0
    %895 = vmatpush.msra.mxu0 0.0
    %896 = vmatpush.msra.mxu0 0.0
    %897 = vmatpush.msra.mxu0 0.0
    %898 = vmatpush.msra.mxu0 0.0
    %899 = vmatpush.msra.mxu0 0.0
    %900 = vmatpush.msra.mxu0 %v888
    %901 = vmatpush.msra.mxu0 %v886
    %902 = vmatpush.msra.mxu0 %v884
    %903 = vmatpush.msra.mxu0 %v882
    %904 = vmatpush.msra.mxu0 %v880
    %905 = vmatpush.msra.mxu0 %v878
    %906 = vmatpush.msra.mxu0 %v876
    %907 = vmatpush.msra.mxu0 %v874
    %908 = vmatmul.f32.gmra.mxu0 %v890
    %v909 = vpop.f32.mrf.mxu0
    %v910 = vadd.f32 0.0, %v909
    %911 = vdwg.mxu0
    %912 = vmatpush.msra.mxu0 0.0
    %913 = vmatpush.msra.mxu0 0.0
    %914 = vmatpush.msra.mxu0 0.0
    %915 = vmatpush.msra.mxu0 0.0
    %916 = vmatpush.msra.mxu0 0.0
    %917 = vmatpush.msra.mxu0 0.0
    %918 = vmatpush.msra.mxu0 0.0
    %919 = vmatpush.msra.mxu0 0.0
    %920 = vmatpush.msra.mxu0 %v889
    %921 = vmatpush.msra.mxu0 %v887
    %922 = vmatpush.msra.mxu0 %v885
    %923 = vmatpush.msra.mxu0 %v883
    %924 = vmatpush.msra.mxu0 %v881
    %925 = vmatpush.msra.mxu0 %v879
    %926 = vmatpush.msra.mxu0 %v877
    %927 = vmatpush.msra.mxu0 %v875
    %928 = vmatmul.f32.gmra.mxu0 %v890
    %v929 = vpop.f32.mrf.mxu0
    %v930 = vadd.f32 0.0, %v929
    %931 = vdwg.mxu0
    %v932 = vadd.f32 %v872, %v910
    %v933 = vadd.f32 %v873, %v930
    %v934 = vxor.u32 %v932, 2147483648
    %v935 = vmul.f32 %v934, 1.442695
    %v936 = vpow.pop %v935
    %v937 = vadd.f32 %v936, 1.0
    %v938 = vrcp.pop %v937
    %v939 = vmul.f32 %v937, %v938
    %v940 = vsub.f32 1.0, %v939
    %v941 = vmul.f32 %v938, %v940
    %v942 = vadd.f32 %v938, %v941
    %vm943 = vweird.f32 %v937
    %vm944 = vweird.f32 %v938
    %vm945 = vmor %vm943, %vm944
    %v946 = vsel %vm945, %v938, %v942
    %v947 = vand.u32 2147483647, %v937
    %vm948 = vcmp.eq.f32.partialorder %v947, 8.507059e+37
    %v949 = vand.u32 %v937, 2147483648
    %v950 = vor.u32 1.1754944e-38, %v949
    %v951 = vsel %vm948, %v950, %v946
    %v952 = vmul.f32 1.0, %v951
    %v953 = vtanh.pop %v933
    %v954 = vxor.u32 %v933, 2147483648
    %v955 = vmul.f32 %v954, 1.442695
    %v956 = vpow.pop %v955
    %v957 = vadd.f32 %v956, 1.0
    %v958 = vrcp.pop %v957
    %v959 = vmul.f32 %v957, %v958
    %v960 = vsub.f32 1.0, %v959
    %v961 = vmul.f32 %v958, %v960
    %v962 = vadd.f32 %v958, %v961
    %vm963 = vweird.f32 %v957
    %vm964 = vweird.f32 %v958
    %vm965 = vmor %vm963, %vm964
    %v966 = vsel %vm965, %v958, %v962
    %v967 = vand.u32 2147483647, %v957
    %vm968 = vcmp.eq.f32.partialorder %v967, 8.507059e+37
    %v969 = vand.u32 %v957, 2147483648
    %v970 = vor.u32 1.1754944e-38, %v969
    %v971 = vsel %vm968, %v970, %v966
    %v972 = vmul.f32 1.0, %v971
    %v973 = vmul.f32 %v952, %v854
    %v974 = vmul.f32 %v952, %v953
    %976 = vrot.lane.b32.xlu0 %v974, 64
    %v977 = vpop.permute.xlu0 %976
    %v979 = vadd.f32 %v973, %v977
    %v980 = vtanh.pop %v979
    %v981 = vmul.f32 %v972, %v980
    %983 = vrot.lane.b32.xlu0 %v981, 64
    %v984 = vpop.permute.xlu0 %983
    %s986 = scalar_lea.vmem [#allocation3], 32
    %987 = vst.msk [vmem:[%s986] sm:$0xff] %vm202, %v984
    %988 = vrot.lane.b32.xlu0 %v981, 32
    %v989 = vpop.permute.xlu0 %988
    %s991 = scalar_lea.vmem [#allocation4], 24
    %992 = vst.msk [vmem:[%s991] sm:$0xff] %vm202, %v989
    %v993 = vld [vmem:[%s613] sm:$0xff]
    %v994 = vld [vmem:[%s613 + $0x8] sm:$0xff]
    %v995 = vld [vmem:[%s608] sm:$0xff]
    %v996 = vld [vmem:[%s608 + $0x8] sm:$0xff]
    %v997 = vsel %vm210, %v995, %v993
    %v998 = vsel %vm210, %v996, %v994
    %v999 = vld [vmem:[%s3] sm:$0xff]
    %v1000 = vld [vmem:[%s3 + $0x8] sm:$0xff]
    %v1001 = vld [vmem:[%s3 + $0x10] sm:$0xff]
    %v1002 = vld [vmem:[%s3 + $0x18] sm:$0xff]
    %v1003 = vld [vmem:[%s3 + $0x20] sm:$0xff]
    %v1004 = vld [vmem:[%s3 + $0x28] sm:$0xff]
    %v1005 = vld [vmem:[%s3 + $0x30] sm:$0xff]
    %v1006 = vld [vmem:[%s3 + $0x38] sm:$0xff]
    %v1007 = vld [vmem:[%s3 + $0x40] sm:$0xff]
    %v1008 = vld [vmem:[%s3 + $0x48] sm:$0xff]
    %v1009 = vld [vmem:[%s3 + $0x50] sm:$0xff]
    %v1010 = vld [vmem:[%s3 + $0x58] sm:$0xff]
    %v1011 = vld [vmem:[%s3 + $0x60] sm:$0xff]
    %v1012 = vld [vmem:[%s3 + $0x68] sm:$0xff]
    %v1013 = vld [vmem:[%s3 + $0x70] sm:$0xff]
    %v1014 = vld [vmem:[%s3 + $0x78] sm:$0xff]
    %v1015 = vsel %vm208, %v984, 0
    %1017 = vmatpush.msra.mxu0 0.0
    %1018 = vmatpush.msra.mxu0 0.0
    %1019 = vmatpush.msra.mxu0 0.0
    %1020 = vmatpush.msra.mxu0 0.0
    %1021 = vmatpush.msra.mxu0 0.0
    %1022 = vmatpush.msra.mxu0 0.0
    %1023 = vmatpush.msra.mxu0 0.0
    %1024 = vmatpush.msra.mxu0 0.0
    %1025 = vmatpush.msra.mxu0 %v1013
    %1026 = vmatpush.msra.mxu0 %v1011
    %1027 = vmatpush.msra.mxu0 %v1009
    %1028 = vmatpush.msra.mxu0 %v1007
    %1029 = vmatpush.msra.mxu0 %v1005
    %1030 = vmatpush.msra.mxu0 %v1003
    %1031 = vmatpush.msra.mxu0 %v1001
    %1032 = vmatpush.msra.mxu0 %v999
    %1033 = vmatmul.f32.gmra.mxu0 %v1015
    %v1034 = vpop.f32.mrf.mxu0
    %v1035 = vadd.f32 0.0, %v1034
    %1036 = vdwg.mxu0
    %1037 = vmatpush.msra.mxu0 0.0
    %1038 = vmatpush.msra.mxu0 0.0
    %1039 = vmatpush.msra.mxu0 0.0
    %1040 = vmatpush.msra.mxu0 0.0
    %1041 = vmatpush.msra.mxu0 0.0
    %1042 = vmatpush.msra.mxu0 0.0
    %1043 = vmatpush.msra.mxu0 0.0
    %1044 = vmatpush.msra.mxu0 0.0
    %1045 = vmatpush.msra.mxu0 %v1014
    %1046 = vmatpush.msra.mxu0 %v1012
    %1047 = vmatpush.msra.mxu0 %v1010
    %1048 = vmatpush.msra.mxu0 %v1008
    %1049 = vmatpush.msra.mxu0 %v1006
    %1050 = vmatpush.msra.mxu0 %v1004
    %1051 = vmatpush.msra.mxu0 %v1002
    %1052 = vmatpush.msra.mxu0 %v1000
    %1053 = vmatmul.f32.gmra.mxu0 %v1015
    %v1054 = vpop.f32.mrf.mxu0
    %v1055 = vadd.f32 0.0, %v1054
    %1056 = vdwg.mxu0
    %v1057 = vadd.f32 %v997, %v1035
    %v1058 = vadd.f32 %v998, %v1055
    %v1059 = vxor.u32 %v1057, 2147483648
    %v1060 = vmul.f32 %v1059, 1.442695
    %v1061 = vpow.pop %v1060
    %v1062 = vadd.f32 %v1061, 1.0
    %v1063 = vrcp.pop %v1062
    %v1064 = vmul.f32 %v1062, %v1063
    %v1065 = vsub.f32 1.0, %v1064
    %v1066 = vmul.f32 %v1063, %v1065
    %v1067 = vadd.f32 %v1063, %v1066
    %vm1068 = vweird.f32 %v1062
    %vm1069 = vweird.f32 %v1063
    %vm1070 = vmor %vm1068, %vm1069
    %v1071 = vsel %vm1070, %v1063, %v1067
    %v1072 = vand.u32 2147483647, %v1062
    %vm1073 = vcmp.eq.f32.partialorder %v1072, 8.507059e+37
    %v1074 = vand.u32 %v1062, 2147483648
    %v1075 = vor.u32 1.1754944e-38, %v1074
    %v1076 = vsel %vm1073, %v1075, %v1071
    %v1077 = vmul.f32 1.0, %v1076
    %v1078 = vtanh.pop %v1058
    %v1079 = vxor.u32 %v1058, 2147483648
    %v1080 = vmul.f32 %v1079, 1.442695
    %v1081 = vpow.pop %v1080
    %v1082 = vadd.f32 %v1081, 1.0
    %v1083 = vrcp.pop %v1082
    %v1084 = vmul.f32 %v1082, %v1083
    %v1085 = vsub.f32 1.0, %v1084
    %v1086 = vmul.f32 %v1083, %v1085
    %v1087 = vadd.f32 %v1083, %v1086
    %vm1088 = vweird.f32 %v1082
    %vm1089 = vweird.f32 %v1083
    %vm1090 = vmor %vm1088, %vm1089
    %v1091 = vsel %vm1090, %v1083, %v1087
    %v1092 = vand.u32 2147483647, %v1082
    %vm1093 = vcmp.eq.f32.partialorder %v1092, 8.507059e+37
    %v1094 = vand.u32 %v1082, 2147483648
    %v1095 = vor.u32 1.1754944e-38, %v1094
    %v1096 = vsel %vm1093, %v1095, %v1091
    %v1097 = vmul.f32 1.0, %v1096
    %v1098 = vmul.f32 %v1077, %v979
    %v1099 = vmul.f32 %v1077, %v1078
    %1101 = vrot.lane.b32.xlu0 %v1099, 64
    %v1102 = vpop.permute.xlu0 %1101
    %v1104 = vadd.f32 %v1098, %v1102
    %v1105 = vtanh.pop %v1104
    %v1106 = vmul.f32 %v1097, %v1105
    %1108 = vrot.lane.b32.xlu0 %v1106, 64
    %v1109 = vpop.permute.xlu0 %1108
    %s1111 = scalar_lea.vmem [#allocation3], 40
    %1112 = vst.msk [vmem:[%s1111] sm:$0xff] %vm202, %v1109
    %1113 = vrot.lane.b32.xlu0 %v1106, 32
    %v1114 = vpop.permute.xlu0 %1113
    %s1116 = scalar_lea.vmem [#allocation4], 16
    %1117 = vst.msk [vmem:[%s1116] sm:$0xff] %vm202, %v1114
    %v1118 = vld [vmem:[%s482] sm:$0xff]
    %v1119 = vld [vmem:[%s482 + $0x8] sm:$0xff]
    %v1120 = vld [vmem:[%s477] sm:$0xff]
    %v1121 = vld [vmem:[%s477 + $0x8] sm:$0xff]
    %v1122 = vsel %vm210, %v1120, %v1118
    %v1123 = vsel %vm210, %v1121, %v1119
    %v1124 = vld [vmem:[%s3] sm:$0xff]
    %v1125 = vld [vmem:[%s3 + $0x8] sm:$0xff]
    %v1126 = vld [vmem:[%s3 + $0x10] sm:$0xff]
    %v1127 = vld [vmem:[%s3 + $0x18] sm:$0xff]
    %v1128 = vld [vmem:[%s3 + $0x20] sm:$0xff]
    %v1129 = vld [vmem:[%s3 + $0x28] sm:$0xff]
    %v1130 = vld [vmem:[%s3 + $0x30] sm:$0xff]
    %v1131 = vld [vmem:[%s3 + $0x38] sm:$0xff]
    %v1132 = vld [vmem:[%s3 + $0x40] sm:$0xff]
    %v1133 = vld [vmem:[%s3 + $0x48] sm:$0xff]
    %v1134 = vld [vmem:[%s3 + $0x50] sm:$0xff]
    %v1135 = vld [vmem:[%s3 + $0x58] sm:$0xff]
    %v1136 = vld [vmem:[%s3 + $0x60] sm:$0xff]
    %v1137 = vld [vmem:[%s3 + $0x68] sm:$0xff]
    %v1138 = vld [vmem:[%s3 + $0x70] sm:$0xff]
    %v1139 = vld [vmem:[%s3 + $0x78] sm:$0xff]
    %v1140 = vsel %vm208, %v1109, 0
    %1142 = vmatpush.msra.mxu0 0.0
    %1143 = vmatpush.msra.mxu0 0.0
    %1144 = vmatpush.msra.mxu0 0.0
    %1145 = vmatpush.msra.mxu0 0.0
    %1146 = vmatpush.msra.mxu0 0.0
    %1147 = vmatpush.msra.mxu0 0.0
    %1148 = vmatpush.msra.mxu0 0.0
    %1149 = vmatpush.msra.mxu0 0.0
    %1150 = vmatpush.msra.mxu0 %v1138
    %1151 = vmatpush.msra.mxu0 %v1136
    %1152 = vmatpush.msra.mxu0 %v1134
    %1153 = vmatpush.msra.mxu0 %v1132
    %1154 = vmatpush.msra.mxu0 %v1130
    %1155 = vmatpush.msra.mxu0 %v1128
    %1156 = vmatpush.msra.mxu0 %v1126
    %1157 = vmatpush.msra.mxu0 %v1124
    %1158 = vmatmul.f32.gmra.mxu0 %v1140
    %v1159 = vpop.f32.mrf.mxu0
    %v1160 = vadd.f32 0.0, %v1159
    %1161 = vdwg.mxu0
    %1162 = vmatpush.msra.mxu0 0.0
    %1163 = vmatpush.msra.mxu0 0.0
    %1164 = vmatpush.msra.mxu0 0.0
    %1165 = vmatpush.msra.mxu0 0.0
    %1166 = vmatpush.msra.mxu0 0.0
    %1167 = vmatpush.msra.mxu0 0.0
    %1168 = vmatpush.msra.mxu0 0.0
    %1169 = vmatpush.msra.mxu0 0.0
    %1170 = vmatpush.msra.mxu0 %v1139
    %1171 = vmatpush.msra.mxu0 %v1137
    %1172 = vmatpush.msra.mxu0 %v1135
    %1173 = vmatpush.msra.mxu0 %v1133
    %1174 = vmatpush.msra.mxu0 %v1131
    %1175 = vmatpush.msra.mxu0 %v1129
    %1176 = vmatpush.msra.mxu0 %v1127
    %1177 = vmatpush.msra.mxu0 %v1125
    %1178 = vmatmul.f32.gmra.mxu0 %v1140
    %v1179 = vpop.f32.mrf.mxu0
    %v1180 = vadd.f32 0.0, %v1179
    %1181 = vdwg.mxu0
    %v1182 = vadd.f32 %v1122, %v1160
    %v1183 = vadd.f32 %v1123, %v1180
    %v1184 = vxor.u32 %v1182, 2147483648
    %v1185 = vmul.f32 %v1184, 1.442695
    %v1186 = vpow.pop %v1185
    %v1187 = vadd.f32 %v1186, 1.0
    %v1188 = vrcp.pop %v1187
    %v1189 = vmul.f32 %v1187, %v1188
    %v1190 = vsub.f32 1.0, %v1189
    %v1191 = vmul.f32 %v1188, %v1190
    %v1192 = vadd.f32 %v1188, %v1191
    %vm1193 = vweird.f32 %v1187
    %vm1194 = vweird.f32 %v1188
    %vm1195 = vmor %vm1193, %vm1194
    %v1196 = vsel %vm1195, %v1188, %v1192
    %v1197 = vand.u32 2147483647, %v1187
    %vm1198 = vcmp.eq.f32.partialorder %v1197, 8.507059e+37
    %v1199 = vand.u32 %v1187, 2147483648
    %v1200 = vor.u32 1.1754944e-38, %v1199
    %v1201 = vsel %vm1198, %v1200, %v1196
    %v1202 = vmul.f32 1.0, %v1201
    %v1203 = vtanh.pop %v1183
    %v1204 = vxor.u32 %v1183, 2147483648
    %v1205 = vmul.f32 %v1204, 1.442695
    %v1206 = vpow.pop %v1205
    %v1207 = vadd.f32 %v1206, 1.0
    %v1208 = vrcp.pop %v1207
    %v1209 = vmul.f32 %v1207, %v1208
    %v1210 = vsub.f32 1.0, %v1209
    %v1211 = vmul.f32 %v1208, %v1210
    %v1212 = vadd.f32 %v1208, %v1211
    %vm1213 = vweird.f32 %v1207
    %vm1214 = vweird.f32 %v1208
    %vm1215 = vmor %vm1213, %vm1214
    %v1216 = vsel %vm1215, %v1208, %v1212
    %v1217 = vand.u32 2147483647, %v1207
    %vm1218 = vcmp.eq.f32.partialorder %v1217, 8.507059e+37
    %v1219 = vand.u32 %v1207, 2147483648
    %v1220 = vor.u32 1.1754944e-38, %v1219
    %v1221 = vsel %vm1218, %v1220, %v1216
    %v1222 = vmul.f32 1.0, %v1221
    %v1223 = vmul.f32 %v1202, %v1104
    %v1224 = vmul.f32 %v1202, %v1203
    %1226 = vrot.lane.b32.xlu0 %v1224, 64
    %v1227 = vpop.permute.xlu0 %1226
    %v1229 = vadd.f32 %v1223, %v1227
    %v1230 = vtanh.pop %v1229
    %v1231 = vmul.f32 %v1222, %v1230
    %1233 = vrot.lane.b32.xlu0 %v1231, 64
    %v1234 = vpop.permute.xlu0 %1233
    %s1236 = scalar_lea.vmem [#allocation3], 48
    %1237 = vst.msk [vmem:[%s1236] sm:$0xff] %vm202, %v1234
    %1238 = vrot.lane.b32.xlu0 %v1231, 32
    %v1239 = vpop.permute.xlu0 %1238
    %s1241 = scalar_lea.vmem [#allocation4], 8
    %1242 = vst.msk [vmem:[%s1241] sm:$0xff] %vm202, %v1239
    %v1243 = vld [vmem:[%s351] sm:$0xff]
    %v1244 = vld [vmem:[%s351 + $0x8] sm:$0xff]
    %v1245 = vld [vmem:[%s346] sm:$0xff]
    %v1246 = vld [vmem:[%s346 + $0x8] sm:$0xff]
    %v1247 = vsel %vm210, %v1245, %v1243
    %v1248 = vsel %vm210, %v1246, %v1244
    %v1249 = vld [vmem:[%s3] sm:$0xff]
    %v1250 = vld [vmem:[%s3 + $0x8] sm:$0xff]
    %v1251 = vld [vmem:[%s3 + $0x10] sm:$0xff]
    %v1252 = vld [vmem:[%s3 + $0x18] sm:$0xff]
    %v1253 = vld [vmem:[%s3 + $0x20] sm:$0xff]
    %v1254 = vld [vmem:[%s3 + $0x28] sm:$0xff]
    %v1255 = vld [vmem:[%s3 + $0x30] sm:$0xff]
    %v1256 = vld [vmem:[%s3 + $0x38] sm:$0xff]
    %v1257 = vld [vmem:[%s3 + $0x40] sm:$0xff]
    %v1258 = vld [vmem:[%s3 + $0x48] sm:$0xff]
    %v1259 = vld [vmem:[%s3 + $0x50] sm:$0xff]
    %v1260 = vld [vmem:[%s3 + $0x58] sm:$0xff]
    %v1261 = vld [vmem:[%s3 + $0x60] sm:$0xff]
    %v1262 = vld [vmem:[%s3 + $0x68] sm:$0xff]
    %v1263 = vld [vmem:[%s3 + $0x70] sm:$0xff]
    %v1264 = vld [vmem:[%s3 + $0x78] sm:$0xff]
    %v1265 = vsel %vm208, %v1234, 0
    %1267 = vmatpush.msra.mxu0 0.0
    %1268 = vmatpush.msra.mxu0 0.0
    %1269 = vmatpush.msra.mxu0 0.0
    %1270 = vmatpush.msra.mxu0 0.0
    %1271 = vmatpush.msra.mxu0 0.0
    %1272 = vmatpush.msra.mxu0 0.0
    %1273 = vmatpush.msra.mxu0 0.0
    %1274 = vmatpush.msra.mxu0 0.0
    %1275 = vmatpush.msra.mxu0 %v1263
    %1276 = vmatpush.msra.mxu0 %v1261
    %1277 = vmatpush.msra.mxu0 %v1259
    %1278 = vmatpush.msra.mxu0 %v1257
    %1279 = vmatpush.msra.mxu0 %v1255
    %1280 = vmatpush.msra.mxu0 %v1253
    %1281 = vmatpush.msra.mxu0 %v1251
    %1282 = vmatpush.msra.mxu0 %v1249
    %1283 = vmatmul.f32.gmra.mxu0 %v1265
    %v1284 = vpop.f32.mrf.mxu0
    %v1285 = vadd.f32 0.0, %v1284
    %1286 = vdwg.mxu0
    %1287 = vmatpush.msra.mxu0 0.0
    %1288 = vmatpush.msra.mxu0 0.0
    %1289 = vmatpush.msra.mxu0 0.0
    %1290 = vmatpush.msra.mxu0 0.0
    %1291 = vmatpush.msra.mxu0 0.0
    %1292 = vmatpush.msra.mxu0 0.0
    %1293 = vmatpush.msra.mxu0 0.0
    %1294 = vmatpush.msra.mxu0 0.0
    %1295 = vmatpush.msra.mxu0 %v1264
    %1296 = vmatpush.msra.mxu0 %v1262
    %1297 = vmatpush.msra.mxu0 %v1260
    %1298 = vmatpush.msra.mxu0 %v1258
    %1299 = vmatpush.msra.mxu0 %v1256
    %1300 = vmatpush.msra.mxu0 %v1254
    %1301 = vmatpush.msra.mxu0 %v1252
    %1302 = vmatpush.msra.mxu0 %v1250
    %1303 = vmatmul.f32.gmra.mxu0 %v1265
    %v1304 = vpop.f32.mrf.mxu0
    %v1305 = vadd.f32 0.0, %v1304
    %1306 = vdwg.mxu0
    %v1307 = vadd.f32 %v1247, %v1285
    %v1308 = vadd.f32 %v1248, %v1305
    %v1309 = vxor.u32 %v1307, 2147483648
    %v1310 = vmul.f32 %v1309, 1.442695
    %v1311 = vpow.pop %v1310
    %v1312 = vadd.f32 %v1311, 1.0
    %v1313 = vrcp.pop %v1312
    %v1314 = vmul.f32 %v1312, %v1313
    %v1315 = vsub.f32 1.0, %v1314
    %v1316 = vmul.f32 %v1313, %v1315
    %v1317 = vadd.f32 %v1313, %v1316
    %vm1318 = vweird.f32 %v1312
    %vm1319 = vweird.f32 %v1313
    %vm1320 = vmor %vm1318, %vm1319
    %v1321 = vsel %vm1320, %v1313, %v1317
    %v1322 = vand.u32 2147483647, %v1312
    %vm1323 = vcmp.eq.f32.partialorder %v1322, 8.507059e+37
    %v1324 = vand.u32 %v1312, 2147483648
    %v1325 = vor.u32 1.1754944e-38, %v1324
    %v1326 = vsel %vm1323, %v1325, %v1321
    %v1327 = vmul.f32 1.0, %v1326
    %v1328 = vtanh.pop %v1308
    %v1329 = vxor.u32 %v1308, 2147483648
    %v1330 = vmul.f32 %v1329, 1.442695
    %v1331 = vpow.pop %v1330
    %v1332 = vadd.f32 %v1331, 1.0
    %v1333 = vrcp.pop %v1332
    %v1334 = vmul.f32 %v1332, %v1333
    %v1335 = vsub.f32 1.0, %v1334
    %v1336 = vmul.f32 %v1333, %v1335
    %v1337 = vadd.f32 %v1333, %v1336
    %vm1338 = vweird.f32 %v1332
    %vm1339 = vweird.f32 %v1333
    %vm1340 = vmor %vm1338, %vm1339
    %v1341 = vsel %vm1340, %v1333, %v1337
    %v1342 = vand.u32 2147483647, %v1332
    %vm1343 = vcmp.eq.f32.partialorder %v1342, 8.507059e+37
    %v1344 = vand.u32 %v1332, 2147483648
    %v1345 = vor.u32 1.1754944e-38, %v1344
    %v1346 = vsel %vm1343, %v1345, %v1341
    %v1347 = vmul.f32 1.0, %v1346
    %v1348 = vmul.f32 %v1327, %v1229
    %v1349 = vmul.f32 %v1327, %v1328
    %1351 = vrot.lane.b32.xlu0 %v1349, 64
    %v1352 = vpop.permute.xlu0 %1351
    %v1354 = vadd.f32 %v1348, %v1352
    %v1355 = vtanh.pop %v1354
    %v1356 = vmul.f32 %v1347, %v1355
    %1358 = vrot.lane.b32.xlu0 %v1356, 64
    %v1359 = vpop.permute.xlu0 %1358
    %s1361 = scalar_lea.vmem [#allocation3], 56
    %1362 = vst.msk [vmem:[%s1361] sm:$0xff] %vm202, %v1359
    %1363 = vrot.lane.b32.xlu0 %v1356, 32
    %v1364 = vpop.permute.xlu0 %1363
    %1366 = vst.msk [vmem:[#allocation4] sm:$0xff] %vm202, %v1364
    %v1367 = vld [vmem:[#allocation3] sm:$0xff]
    %v1368 = vld [vmem:[#allocation3 + $0x8] sm:$0xff]
    %v1369 = vld [vmem:[#allocation3 + $0x10] sm:$0xff]
    %v1370 = vld [vmem:[#allocation3 + $0x18] sm:$0xff]
    %v1371 = vld [vmem:[#allocation3 + $0x20] sm:$0xff]
    %v1372 = vld [vmem:[#allocation3 + $0x28] sm:$0xff]
    %v1373 = vld [vmem:[#allocation3 + $0x30] sm:$0xff]
    %v1374 = vld [vmem:[#allocation3 + $0x38] sm:$0xff]
    %v1375 = vld [vmem:[#allocation6] sm:$0xff]
    %v1376 = vld [vmem:[#allocation6 + $0x8] sm:$0xff]
    %v1377 = vld [vmem:[#allocation6 + $0x10] sm:$0xff]
    %v1378 = vld [vmem:[#allocation6 + $0x18] sm:$0xff]
    %v1379 = vld [vmem:[#allocation6 + $0x20] sm:$0xff]
    %v1380 = vld [vmem:[#allocation6 + $0x28] sm:$0xff]
    %v1381 = vld [vmem:[#allocation6 + $0x30] sm:$0xff]
    %v1382 = vld [vmem:[#allocation6 + $0x38] sm:$0xff]
    %v1383 = vld [vmem:[#allocation4] sm:$0xff]
    %v1384 = vld [vmem:[#allocation4 + $0x8] sm:$0xff]
    %v1385 = vld [vmem:[#allocation4 + $0x10] sm:$0xff]
    %v1386 = vld [vmem:[#allocation4 + $0x18] sm:$0xff]
    %v1387 = vld [vmem:[#allocation4 + $0x20] sm:$0xff]
    %v1388 = vld [vmem:[#allocation4 + $0x28] sm:$0xff]
    %v1389 = vld [vmem:[#allocation4 + $0x30] sm:$0xff]
    %v1390 = vld [vmem:[#allocation4 + $0x38] sm:$0xff]
    %v1391 = vld [vmem:[#allocation6 + $0x40] sm:$0xff]
    %v1392 = vld [vmem:[#allocation6 + $0x48] sm:$0xff]
    %v1393 = vld [vmem:[#allocation6 + $0x50] sm:$0xff]
    %v1394 = vld [vmem:[#allocation6 + $0x58] sm:$0xff]
    %v1395 = vld [vmem:[#allocation6 + $0x60] sm:$0xff]
    %v1396 = vld [vmem:[#allocation6 + $0x68] sm:$0xff]
    %v1397 = vld [vmem:[#allocation6 + $0x70] sm:$0xff]
    %v1398 = vld [vmem:[#allocation6 + $0x78] sm:$0xff]
    %v1400 = vsel %vm202, %v1383, 0
    %v1403 = vsel %vm202, %v1384, 0
    %v1406 = vsel %vm202, %v1385, 0
    %v1409 = vsel %vm202, %v1386, 0
    %v1412 = vsel %vm202, %v1387, 0
    %v1415 = vsel %vm202, %v1388, 0
    %v1418 = vsel %vm202, %v1389, 0
    %v1421 = vsel %vm202, %v1390, 0
    %1423 = vmatpush.msra.mxu0 0.0
    %1424 = vmatpush.msra.mxu0 0.0
    %1425 = vmatpush.msra.mxu0 0.0
    %1426 = vmatpush.msra.mxu0 0.0
    %1427 = vmatpush.msra.mxu0 0.0
    %1428 = vmatpush.msra.mxu0 0.0
    %1429 = vmatpush.msra.mxu0 0.0
    %1430 = vmatpush.msra.mxu0 0.0
    %1431 = vmatpush.msra.mxu0 0.0
    %1432 = vmatpush.msra.mxu0 0.0
    %1433 = vmatpush.msra.mxu0 0.0
    %1434 = vmatpush.msra.mxu0 0.0
    %1435 = vmatpush.msra.mxu0 %v1397
    %1436 = vmatpush.msra.mxu0 %v1395
    %1437 = vmatpush.msra.mxu0 %v1393
    %1438 = vmatpush.msra.mxu0 %v1391
    %1439 = vmatmul.f32.gmra.mxu0 %v1400
    %v1440 = vpop.f32.mrf.mxu0
    %v1441 = vadd.f32 0.0, %v1440
    %1442 = vmatmul.f32.gmra.mxu0 %v1403
    %v1443 = vpop.f32.mrf.mxu0
    %v1444 = vadd.f32 0.0, %v1443
    %1445 = vmatmul.f32.gmra.mxu0 %v1406
    %v1446 = vpop.f32.mrf.mxu0
    %v1447 = vadd.f32 0.0, %v1446
    %1448 = vmatmul.f32.gmra.mxu0 %v1409
    %v1449 = vpop.f32.mrf.mxu0
    %v1450 = vadd.f32 0.0, %v1449
    %1451 = vmatmul.f32.gmra.mxu0 %v1412
    %v1452 = vpop.f32.mrf.mxu0
    %v1453 = vadd.f32 0.0, %v1452
    %1454 = vmatmul.f32.gmra.mxu0 %v1415
    %v1455 = vpop.f32.mrf.mxu0
    %v1456 = vadd.f32 0.0, %v1455
    %1457 = vmatmul.f32.gmra.mxu0 %v1418
    %v1458 = vpop.f32.mrf.mxu0
    %v1459 = vadd.f32 0.0, %v1458
    %1460 = vmatmul.f32.gmra.mxu0 %v1421
    %v1461 = vpop.f32.mrf.mxu0
    %v1462 = vadd.f32 0.0, %v1461
    %1463 = vdwg.mxu0
    %1464 = vmatpush.msra.mxu0 0.0
    %1465 = vmatpush.msra.mxu0 0.0
    %1466 = vmatpush.msra.mxu0 0.0
    %1467 = vmatpush.msra.mxu0 0.0
    %1468 = vmatpush.msra.mxu0 0.0
    %1469 = vmatpush.msra.mxu0 0.0
    %1470 = vmatpush.msra.mxu0 0.0
    %1471 = vmatpush.msra.mxu0 0.0
    %1472 = vmatpush.msra.mxu0 0.0
    %1473 = vmatpush.msra.mxu0 0.0
    %1474 = vmatpush.msra.mxu0 0.0
    %1475 = vmatpush.msra.mxu0 0.0
    %1476 = vmatpush.msra.mxu0 %v1398
    %1477 = vmatpush.msra.mxu0 %v1396
    %1478 = vmatpush.msra.mxu0 %v1394
    %1479 = vmatpush.msra.mxu0 %v1392
    %1480 = vmatmul.f32.gmra.mxu0 %v1400
    %v1481 = vpop.f32.mrf.mxu0
    %v1482 = vadd.f32 0.0, %v1481
    %1483 = vmatmul.f32.gmra.mxu0 %v1403
    %v1484 = vpop.f32.mrf.mxu0
    %v1485 = vadd.f32 0.0, %v1484
    %1486 = vmatmul.f32.gmra.mxu0 %v1406
    %v1487 = vpop.f32.mrf.mxu0
    %v1488 = vadd.f32 0.0, %v1487
    %1489 = vmatmul.f32.gmra.mxu0 %v1409
    %v1490 = vpop.f32.mrf.mxu0
    %v1491 = vadd.f32 0.0, %v1490
    %1492 = vmatmul.f32.gmra.mxu0 %v1412
    %v1493 = vpop.f32.mrf.mxu0
    %v1494 = vadd.f32 0.0, %v1493
    %1495 = vmatmul.f32.gmra.mxu0 %v1415
    %v1496 = vpop.f32.mrf.mxu0
    %v1497 = vadd.f32 0.0, %v1496
    %1498 = vmatmul.f32.gmra.mxu0 %v1418
    %v1499 = vpop.f32.mrf.mxu0
    %v1500 = vadd.f32 0.0, %v1499
    %1501 = vmatmul.f32.gmra.mxu0 %v1421
    %v1502 = vpop.f32.mrf.mxu0
    %v1503 = vadd.f32 0.0, %v1502
    %1504 = vdwg.mxu0
    %v1506 = vsel %vm202, %v1367, 0
    %v1509 = vsel %vm202, %v1368, 0
    %v1512 = vsel %vm202, %v1369, 0
    %v1515 = vsel %vm202, %v1370, 0
    %v1518 = vsel %vm202, %v1371, 0
    %v1521 = vsel %vm202, %v1372, 0
    %v1524 = vsel %vm202, %v1373, 0
    %v1527 = vsel %vm202, %v1374, 0
    %1529 = vmatpush.msra.mxu0 0.0
    %1530 = vmatpush.msra.mxu0 0.0
    %1531 = vmatpush.msra.mxu0 0.0
    %1532 = vmatpush.msra.mxu0 0.0
    %1533 = vmatpush.msra.mxu0 0.0
    %1534 = vmatpush.msra.mxu0 0.0
    %1535 = vmatpush.msra.mxu0 0.0
    %1536 = vmatpush.msra.mxu0 0.0
    %1537 = vmatpush.msra.mxu0 0.0
    %1538 = vmatpush.msra.mxu0 0.0
    %1539 = vmatpush.msra.mxu0 0.0
    %1540 = vmatpush.msra.mxu0 0.0
    %1541 = vmatpush.msra.mxu0 %v1381
    %1542 = vmatpush.msra.mxu0 %v1379
    %1543 = vmatpush.msra.mxu0 %v1377
    %1544 = vmatpush.msra.mxu0 %v1375
    %1545 = vmatmul.f32.gmra.mxu0 %v1506
    %v1546 = vpop.f32.mrf.mxu0
    %v1547 = vadd.f32 %v1441, %v1546
    %1548 = vmatmul.f32.gmra.mxu0 %v1509
    %v1549 = vpop.f32.mrf.mxu0
    %v1550 = vadd.f32 %v1444, %v1549
    %1551 = vmatmul.f32.gmra.mxu0 %v1512
    %v1552 = vpop.f32.mrf.mxu0
    %v1553 = vadd.f32 %v1447, %v1552
    %1554 = vmatmul.f32.gmra.mxu0 %v1515
    %v1555 = vpop.f32.mrf.mxu0
    %v1556 = vadd.f32 %v1450, %v1555
    %1557 = vmatmul.f32.gmra.mxu0 %v1518
    %v1558 = vpop.f32.mrf.mxu0
    %v1559 = vadd.f32 %v1453, %v1558
    %1560 = vmatmul.f32.gmra.mxu0 %v1521
    %v1561 = vpop.f32.mrf.mxu0
    %v1562 = vadd.f32 %v1456, %v1561
    %1563 = vmatmul.f32.gmra.mxu0 %v1524
    %v1564 = vpop.f32.mrf.mxu0
    %v1565 = vadd.f32 %v1459, %v1564
    %1566 = vmatmul.f32.gmra.mxu0 %v1527
    %v1567 = vpop.f32.mrf.mxu0
    %v1568 = vadd.f32 %v1462, %v1567
    %1569 = vdwg.mxu0
    %1570 = vmatpush.msra.mxu0 0.0
    %1571 = vmatpush.msra.mxu0 0.0
    %1572 = vmatpush.msra.mxu0 0.0
    %1573 = vmatpush.msra.mxu0 0.0
    %1574 = vmatpush.msra.mxu0 0.0
    %1575 = vmatpush.msra.mxu0 0.0
    %1576 = vmatpush.msra.mxu0 0.0
    %1577 = vmatpush.msra.mxu0 0.0
    %1578 = vmatpush.msra.mxu0 0.0
    %1579 = vmatpush.msra.mxu0 0.0
    %1580 = vmatpush.msra.mxu0 0.0
    %1581 = vmatpush.msra.mxu0 0.0
    %1582 = vmatpush.msra.mxu0 %v1382
    %1583 = vmatpush.msra.mxu0 %v1380
    %1584 = vmatpush.msra.mxu0 %v1378
    %1585 = vmatpush.msra.mxu0 %v1376
    %1586 = vmatmul.f32.gmra.mxu0 %v1506
    %v1587 = vpop.f32.mrf.mxu0
    %v1588 = vadd.f32 %v1482, %v1587
    %1589 = vmatmul.f32.gmra.mxu0 %v1509
    %v1590 = vpop.f32.mrf.mxu0
    %v1591 = vadd.f32 %v1485, %v1590
    %1592 = vmatmul.f32.gmra.mxu0 %v1512
    %v1593 = vpop.f32.mrf.mxu0
    %v1594 = vadd.f32 %v1488, %v1593
    %1595 = vmatmul.f32.gmra.mxu0 %v1515
    %v1596 = vpop.f32.mrf.mxu0
    %v1597 = vadd.f32 %v1491, %v1596
    %1598 = vmatmul.f32.gmra.mxu0 %v1518
    %v1599 = vpop.f32.mrf.mxu0
    %v1600 = vadd.f32 %v1494, %v1599
    %1601 = vmatmul.f32.gmra.mxu0 %v1521
    %v1602 = vpop.f32.mrf.mxu0
    %v1603 = vadd.f32 %v1497, %v1602
    %1604 = vmatmul.f32.gmra.mxu0 %v1524
    %v1605 = vpop.f32.mrf.mxu0
    %v1606 = vadd.f32 %v1500, %v1605
    %1607 = vmatmul.f32.gmra.mxu0 %v1527
    %v1608 = vpop.f32.mrf.mxu0
    %v1609 = vadd.f32 %v1503, %v1608
    %1610 = vdwg.mxu0
    %v1611 = vld [vmem:[%s7] sm:$0x3]
    %v1613 = vperm.slane %v1611, 0
    %v1614 = vperm.slane %v1611, 1
    %v1617 = vadd.f32 %v1547, %v1613
    %v1618 = vadd.f32 %v1588, %v1614
    %v1619 = vadd.f32 %v1550, %v1613
    %v1620 = vadd.f32 %v1591, %v1614
    %v1621 = vadd.f32 %v1553, %v1613
    %v1622 = vadd.f32 %v1594, %v1614
    %v1623 = vadd.f32 %v1556, %v1613
    %v1624 = vadd.f32 %v1597, %v1614
    %v1625 = vadd.f32 %v1559, %v1613
    %v1626 = vadd.f32 %v1600, %v1614
    %v1627 = vadd.f32 %v1562, %v1613
    %v1628 = vadd.f32 %v1603, %v1614
    %v1629 = vadd.f32 %v1565, %v1613
    %v1630 = vadd.f32 %v1606, %v1614
    %v1631 = vadd.f32 %v1568, %v1613
    %v1632 = vadd.f32 %v1609, %v1614
    %1633 = vst [vmem:[#allocation2] sm:$0xff] %v1617
    %1634 = vst [vmem:[#allocation2 + $0x8] sm:$0xff] %v1618
    %1635 = vst [vmem:[#allocation2 + $0x10] sm:$0xff] %v1619
    %1636 = vst [vmem:[#allocation2 + $0x18] sm:$0xff] %v1620
    %1637 = vst [vmem:[#allocation2 + $0x20] sm:$0xff] %v1621
    %1638 = vst [vmem:[#allocation2 + $0x28] sm:$0xff] %v1622
    %1639 = vst [vmem:[#allocation2 + $0x30] sm:$0xff] %v1623
    %1640 = vst [vmem:[#allocation2 + $0x38] sm:$0xff] %v1624
    %1641 = vst [vmem:[#allocation2 + $0x40] sm:$0xff] %v1625
    %1642 = vst [vmem:[#allocation2 + $0x48] sm:$0xff] %v1626
    %1643 = vst [vmem:[#allocation2 + $0x50] sm:$0xff] %v1627
    %1644 = vst [vmem:[#allocation2 + $0x58] sm:$0xff] %v1628
    %1645 = vst [vmem:[#allocation2 + $0x60] sm:$0xff] %v1629
    %1646 = vst [vmem:[#allocation2 + $0x68] sm:$0xff] %v1630
    %1647 = vst [vmem:[#allocation2 + $0x70] sm:$0xff] %v1631
    %1648 = vst [vmem:[#allocation2 + $0x78] sm:$0xff] %v1632
    %v1649 = vld [vmem:[%s346] sm:$0xff]
    %v1650 = vld [vmem:[%s346 + $0x8] sm:$0xff]
    %v1651 = vld [vmem:[%s351] sm:$0xff]
    %v1652 = vld [vmem:[%s351 + $0x8] sm:$0xff]
    %v1653 = vsel %vm210, %v1651, %v1649
    %v1654 = vsel %vm210, %v1652, %v1650
    %v1655 = vld [vmem:[#allocation8] sm:$0xff]
    %v1656 = vld [vmem:[#allocation8 + $0x8] sm:$0xff]
    %v1657 = vld [vmem:[#allocation8 + $0x10] sm:$0xff]
    %v1658 = vld [vmem:[#allocation8 + $0x18] sm:$0xff]
    %v1659 = vld [vmem:[#allocation8 + $0x20] sm:$0xff]
    %v1660 = vld [vmem:[#allocation8 + $0x28] sm:$0xff]
    %v1661 = vld [vmem:[#allocation8 + $0x30] sm:$0xff]
    %v1662 = vld [vmem:[#allocation8 + $0x38] sm:$0xff]
    %v1663 = vld [vmem:[#allocation8 + $0x40] sm:$0xff]
    %v1664 = vld [vmem:[#allocation8 + $0x48] sm:$0xff]
    %v1665 = vld [vmem:[#allocation8 + $0x50] sm:$0xff]
    %v1666 = vld [vmem:[#allocation8 + $0x58] sm:$0xff]
    %v1667 = vld [vmem:[#allocation8 + $0x60] sm:$0xff]
    %v1668 = vld [vmem:[#allocation8 + $0x68] sm:$0xff]
    %v1669 = vld [vmem:[#allocation8 + $0x70] sm:$0xff]
    %v1670 = vld [vmem:[#allocation8 + $0x78] sm:$0xff]
    %1671 = vmatpush.msra.mxu0 0.0
    %1672 = vmatpush.msra.mxu0 0.0
    %1673 = vmatpush.msra.mxu0 0.0
    %1674 = vmatpush.msra.mxu0 0.0
    %1675 = vmatpush.msra.mxu0 0.0
    %1676 = vmatpush.msra.mxu0 0.0
    %1677 = vmatpush.msra.mxu0 0.0
    %1678 = vmatpush.msra.mxu0 0.0
    %1679 = vmatpush.msra.mxu0 %v1669
    %1680 = vmatpush.msra.mxu0 %v1667
    %1681 = vmatpush.msra.mxu0 %v1665
    %1682 = vmatpush.msra.mxu0 %v1663
    %1683 = vmatpush.msra.mxu0 %v1661
    %1684 = vmatpush.msra.mxu0 %v1659
    %1685 = vmatpush.msra.mxu0 %v1657
    %1686 = vmatpush.msra.mxu0 %v1655
    %1687 = vmatmul.f32.gmra.mxu0 %v373
    %v1688 = vpop.f32.mrf.mxu0
    %v1689 = vadd.f32 0.0, %v1688
    %1690 = vdwg.mxu0
    %1691 = vmatpush.msra.mxu0 0.0
    %1692 = vmatpush.msra.mxu0 0.0
    %1693 = vmatpush.msra.mxu0 0.0
    %1694 = vmatpush.msra.mxu0 0.0
    %1695 = vmatpush.msra.mxu0 0.0
    %1696 = vmatpush.msra.mxu0 0.0
    %1697 = vmatpush.msra.mxu0 0.0
    %1698 = vmatpush.msra.mxu0 0.0
    %1699 = vmatpush.msra.mxu0 %v1670
    %1700 = vmatpush.msra.mxu0 %v1668
    %1701 = vmatpush.msra.mxu0 %v1666
    %1702 = vmatpush.msra.mxu0 %v1664
    %1703 = vmatpush.msra.mxu0 %v1662
    %1704 = vmatpush.msra.mxu0 %v1660
    %1705 = vmatpush.msra.mxu0 %v1658
    %1706 = vmatpush.msra.mxu0 %v1656
    %1707 = vmatmul.f32.gmra.mxu0 %v373
    %v1708 = vpop.f32.mrf.mxu0
    %v1709 = vadd.f32 0.0, %v1708
    %1710 = vdwg.mxu0
    %v1711 = vadd.f32 %v1653, %v1689
    %v1712 = vadd.f32 %v1654, %v1709
    %v1713 = vxor.u32 %v1711, 2147483648
    %v1714 = vmul.f32 %v1713, 1.442695
    %v1715 = vpow.pop %v1714
    %v1716 = vadd.f32 %v1715, 1.0
    %v1717 = vrcp.pop %v1716
    %v1718 = vmul.f32 %v1716, %v1717
    %v1719 = vsub.f32 1.0, %v1718
    %v1720 = vmul.f32 %v1717, %v1719
    %v1721 = vadd.f32 %v1717, %v1720
    %vm1722 = vweird.f32 %v1716
    %vm1723 = vweird.f32 %v1717
    %vm1724 = vmor %vm1722, %vm1723
    %v1725 = vsel %vm1724, %v1717, %v1721
    %v1726 = vand.u32 2147483647, %v1716
    %vm1727 = vcmp.eq.f32.partialorder %v1726, 8.507059e+37
    %v1728 = vand.u32 %v1716, 2147483648
    %v1729 = vor.u32 1.1754944e-38, %v1728
    %v1730 = vsel %vm1727, %v1729, %v1725
    %v1731 = vmul.f32 1.0, %v1730
    %v1732 = vtanh.pop %v1712
    %v1733 = vxor.u32 %v1712, 2147483648
    %v1734 = vmul.f32 %v1733, 1.442695
    %v1735 = vpow.pop %v1734
    %v1736 = vadd.f32 %v1735, 1.0
    %v1737 = vrcp.pop %v1736
    %v1738 = vmul.f32 %v1736, %v1737
    %v1739 = vsub.f32 1.0, %v1738
    %v1740 = vmul.f32 %v1737, %v1739
    %v1741 = vadd.f32 %v1737, %v1740
    %vm1742 = vweird.f32 %v1736
    %vm1743 = vweird.f32 %v1737
    %vm1744 = vmor %vm1742, %vm1743
    %v1745 = vsel %vm1744, %v1737, %v1741
    %v1746 = vand.u32 2147483647, %v1736
    %vm1747 = vcmp.eq.f32.partialorder %v1746, 8.507059e+37
    %v1748 = vand.u32 %v1736, 2147483648
    %v1749 = vor.u32 1.1754944e-38, %v1748
    %v1750 = vsel %vm1747, %v1749, %v1745
    %v1751 = vmul.f32 1.0, %v1750
    %v1752 = vmul.f32 %v1731, 0.0
    %v1753 = vmul.f32 %v1731, %v1732
    %1755 = vrot.lane.b32.xlu0 %v1753, 64
    %v1756 = vpop.permute.xlu0 %1755
    %v1758 = vadd.f32 %v1752, %v1756
    %v1759 = vtanh.pop %v1758
    %v1760 = vmul.f32 %v1751, %v1759
    %1762 = vrot.lane.b32.xlu0 %v1760, 32
    %v1763 = vpop.permute.xlu0 %1762
    %1765 = vst.msk [vmem:[#allocation5] sm:$0xff] %vm202, %v1763
    %v1766 = vld [vmem:[%s477] sm:$0xff]
    %v1767 = vld [vmem:[%s477 + $0x8] sm:$0xff]
    %v1768 = vld [vmem:[%s482] sm:$0xff]
    %v1769 = vld [vmem:[%s482 + $0x8] sm:$0xff]
    %v1770 = vsel %vm210, %v1768, %v1766
    %v1771 = vsel %vm210, %v1769, %v1767
    %v1772 = vld [vmem:[#allocation8] sm:$0xff]
    %v1773 = vld [vmem:[#allocation8 + $0x8] sm:$0xff]
    %v1774 = vld [vmem:[#allocation8 + $0x10] sm:$0xff]
    %v1775 = vld [vmem:[#allocation8 + $0x18] sm:$0xff]
    %v1776 = vld [vmem:[#allocation8 + $0x20] sm:$0xff]
    %v1777 = vld [vmem:[#allocation8 + $0x28] sm:$0xff]
    %v1778 = vld [vmem:[#allocation8 + $0x30] sm:$0xff]
    %v1779 = vld [vmem:[#allocation8 + $0x38] sm:$0xff]
    %v1780 = vld [vmem:[#allocation8 + $0x40] sm:$0xff]
    %v1781 = vld [vmem:[#allocation8 + $0x48] sm:$0xff]
    %v1782 = vld [vmem:[#allocation8 + $0x50] sm:$0xff]
    %v1783 = vld [vmem:[#allocation8 + $0x58] sm:$0xff]
    %v1784 = vld [vmem:[#allocation8 + $0x60] sm:$0xff]
    %v1785 = vld [vmem:[#allocation8 + $0x68] sm:$0xff]
    %v1786 = vld [vmem:[#allocation8 + $0x70] sm:$0xff]
    %v1787 = vld [vmem:[#allocation8 + $0x78] sm:$0xff]
    %1788 = vrot.lane.b32.xlu0 %v1760, 64
    %v1789 = vpop.permute.xlu0 %1788
    %v1790 = vsel %vm208, %v1789, 0
    %1792 = vmatpush.msra.mxu0 0.0
    %1793 = vmatpush.msra.mxu0 0.0
    %1794 = vmatpush.msra.mxu0 0.0
    %1795 = vmatpush.msra.mxu0 0.0
    %1796 = vmatpush.msra.mxu0 0.0
    %1797 = vmatpush.msra.mxu0 0.0
    %1798 = vmatpush.msra.mxu0 0.0
    %1799 = vmatpush.msra.mxu0 0.0
    %1800 = vmatpush.msra.mxu0 %v1786
    %1801 = vmatpush.msra.mxu0 %v1784
    %1802 = vmatpush.msra.mxu0 %v1782
    %1803 = vmatpush.msra.mxu0 %v1780
    %1804 = vmatpush.msra.mxu0 %v1778
    %1805 = vmatpush.msra.mxu0 %v1776
    %1806 = vmatpush.msra.mxu0 %v1774
    %1807 = vmatpush.msra.mxu0 %v1772
    %1808 = vmatmul.f32.gmra.mxu0 %v1790
    %v1809 = vpop.f32.mrf.mxu0
    %v1810 = vadd.f32 0.0, %v1809
    %1811 = vdwg.mxu0
    %1812 = vmatpush.msra.mxu0 0.0
    %1813 = vmatpush.msra.mxu0 0.0
    %1814 = vmatpush.msra.mxu0 0.0
    %1815 = vmatpush.msra.mxu0 0.0
    %1816 = vmatpush.msra.mxu0 0.0
    %1817 = vmatpush.msra.mxu0 0.0
    %1818 = vmatpush.msra.mxu0 0.0
    %1819 = vmatpush.msra.mxu0 0.0
    %1820 = vmatpush.msra.mxu0 %v1787
    %1821 = vmatpush.msra.mxu0 %v1785
    %1822 = vmatpush.msra.mxu0 %v1783
    %1823 = vmatpush.msra.mxu0 %v1781
    %1824 = vmatpush.msra.mxu0 %v1779
    %1825 = vmatpush.msra.mxu0 %v1777
    %1826 = vmatpush.msra.mxu0 %v1775
    %1827 = vmatpush.msra.mxu0 %v1773
    %1828 = vmatmul.f32.gmra.mxu0 %v1790
    %v1829 = vpop.f32.mrf.mxu0
    %v1830 = vadd.f32 0.0, %v1829
    %1831 = vdwg.mxu0
    %v1832 = vadd.f32 %v1770, %v1810
    %v1833 = vadd.f32 %v1771, %v1830
    %v1834 = vxor.u32 %v1832, 2147483648
    %v1835 = vmul.f32 %v1834, 1.442695
    %v1836 = vpow.pop %v1835
    %v1837 = vadd.f32 %v1836, 1.0
    %v1838 = vrcp.pop %v1837
    %v1839 = vmul.f32 %v1837, %v1838
    %v1840 = vsub.f32 1.0, %v1839
    %v1841 = vmul.f32 %v1838, %v1840
    %v1842 = vadd.f32 %v1838, %v1841
    %vm1843 = vweird.f32 %v1837
    %vm1844 = vweird.f32 %v1838
    %vm1845 = vmor %vm1843, %vm1844
    %v1846 = vsel %vm1845, %v1838, %v1842
    %v1847 = vand.u32 2147483647, %v1837
    %vm1848 = vcmp.eq.f32.partialorder %v1847, 8.507059e+37
    %v1849 = vand.u32 %v1837, 2147483648
    %v1850 = vor.u32 1.1754944e-38, %v1849
    %v1851 = vsel %vm1848, %v1850, %v1846
    %v1852 = vmul.f32 1.0, %v1851
    %v1853 = vtanh.pop %v1833
    %v1854 = vxor.u32 %v1833, 2147483648
    %v1855 = vmul.f32 %v1854, 1.442695
    %v1856 = vpow.pop %v1855
    %v1857 = vadd.f32 %v1856, 1.0
    %v1858 = vrcp.pop %v1857
    %v1859 = vmul.f32 %v1857, %v1858
    %v1860 = vsub.f32 1.0, %v1859
    %v1861 = vmul.f32 %v1858, %v1860
    %v1862 = vadd.f32 %v1858, %v1861
    %vm1863 = vweird.f32 %v1857
    %vm1864 = vweird.f32 %v1858
    %vm1865 = vmor %vm1863, %vm1864
    %v1866 = vsel %vm1865, %v1858, %v1862
    %v1867 = vand.u32 2147483647, %v1857
    %vm1868 = vcmp.eq.f32.partialorder %v1867, 8.507059e+37
    %v1869 = vand.u32 %v1857, 2147483648
    %v1870 = vor.u32 1.1754944e-38, %v1869
    %v1871 = vsel %vm1868, %v1870, %v1866
    %v1872 = vmul.f32 1.0, %v1871
    %v1873 = vmul.f32 %v1852, %v1758
    %v1874 = vmul.f32 %v1852, %v1853
    %1876 = vrot.lane.b32.xlu0 %v1874, 64
    %v1877 = vpop.permute.xlu0 %1876
    %v1879 = vadd.f32 %v1873, %v1877
    %v1880 = vtanh.pop %v1879
    %v1881 = vmul.f32 %v1872, %v1880
    %v1882 = vld [vmem:[%s608] sm:$0xff]
    %v1883 = vld [vmem:[%s608 + $0x8] sm:$0xff]
    %v1884 = vld [vmem:[%s613] sm:$0xff]
    %v1885 = vld [vmem:[%s613 + $0x8] sm:$0xff]
    %v1886 = vsel %vm210, %v1884, %v1882
    %v1887 = vsel %vm210, %v1885, %v1883
    %1889 = vrot.lane.b32.xlu0 %v1881, 64
    %v1890 = vpop.permute.xlu0 %1889
    %v1891 = vsel %vm208, %v1890, 0
    %1893 = vmatpush.msra.mxu0 0.0
    %1894 = vmatpush.msra.mxu0 0.0
    %1895 = vmatpush.msra.mxu0 0.0
    %1896 = vmatpush.msra.mxu0 0.0
    %1897 = vmatpush.msra.mxu0 0.0
    %1898 = vmatpush.msra.mxu0 0.0
    %1899 = vmatpush.msra.mxu0 0.0
    %1900 = vmatpush.msra.mxu0 0.0
    %1901 = vmatpush.msra.mxu0 %v1786
    %1902 = vmatpush.msra.mxu0 %v1784
    %1903 = vmatpush.msra.mxu0 %v1782
    %1904 = vmatpush.msra.mxu0 %v1780
    %1905 = vmatpush.msra.mxu0 %v1778
    %1906 = vmatpush.msra.mxu0 %v1776
    %1907 = vmatpush.msra.mxu0 %v1774
    %1908 = vmatpush.msra.mxu0 %v1772
    %1909 = vmatmul.f32.gmra.mxu0 %v1891
    %v1910 = vpop.f32.mrf.mxu0
    %v1911 = vadd.f32 0.0, %v1910
    %1912 = vdwg.mxu0
    %1913 = vmatpush.msra.mxu0 0.0
    %1914 = vmatpush.msra.mxu0 0.0
    %1915 = vmatpush.msra.mxu0 0.0
    %1916 = vmatpush.msra.mxu0 0.0
    %1917 = vmatpush.msra.mxu0 0.0
    %1918 = vmatpush.msra.mxu0 0.0
    %1919 = vmatpush.msra.mxu0 0.0
    %1920 = vmatpush.msra.mxu0 0.0
    %1921 = vmatpush.msra.mxu0 %v1787
    %1922 = vmatpush.msra.mxu0 %v1785
    %1923 = vmatpush.msra.mxu0 %v1783
    %1924 = vmatpush.msra.mxu0 %v1781
    %1925 = vmatpush.msra.mxu0 %v1779
    %1926 = vmatpush.msra.mxu0 %v1777
    %1927 = vmatpush.msra.mxu0 %v1775
    %1928 = vmatpush.msra.mxu0 %v1773
    %1929 = vmatmul.f32.gmra.mxu0 %v1891
    %v1930 = vpop.f32.mrf.mxu0
    %v1931 = vadd.f32 0.0, %v1930
    %1932 = vdwg.mxu0
    %v1933 = vadd.f32 %v1886, %v1911
    %v1934 = vadd.f32 %v1887, %v1931
    %v1935 = vxor.u32 %v1933, 2147483648
    %v1936 = vmul.f32 %v1935, 1.442695
    %v1937 = vpow.pop %v1936
    %v1938 = vadd.f32 %v1937, 1.0
    %v1939 = vrcp.pop %v1938
    %v1940 = vmul.f32 %v1938, %v1939
    %v1941 = vsub.f32 1.0, %v1940
    %v1942 = vmul.f32 %v1939, %v1941
    %v1943 = vadd.f32 %v1939, %v1942
    %vm1944 = vweird.f32 %v1938
    %vm1945 = vweird.f32 %v1939
    %vm1946 = vmor %vm1944, %vm1945
    %v1947 = vsel %vm1946, %v1939, %v1943
    %v1948 = vand.u32 2147483647, %v1938
    %vm1949 = vcmp.eq.f32.partialorder %v1948, 8.507059e+37
    %v1950 = vand.u32 %v1938, 2147483648
    %v1951 = vor.u32 1.1754944e-38, %v1950
    %v1952 = vsel %vm1949, %v1951, %v1947
    %v1953 = vmul.f32 1.0, %v1952
    %v1954 = vtanh.pop %v1934
    %v1955 = vxor.u32 %v1934, 2147483648
    %v1956 = vmul.f32 %v1955, 1.442695
    %v1957 = vpow.pop %v1956
    %v1958 = vadd.f32 %v1957, 1.0
    %v1959 = vrcp.pop %v1958
    %v1960 = vmul.f32 %v1958, %v1959
    %v1961 = vsub.f32 1.0, %v1960
    %v1962 = vmul.f32 %v1959, %v1961
    %v1963 = vadd.f32 %v1959, %v1962
    %vm1964 = vweird.f32 %v1958
    %vm1965 = vweird.f32 %v1959
    %vm1966 = vmor %vm1964, %vm1965
    %v1967 = vsel %vm1966, %v1959, %v1963
    %v1968 = vand.u32 2147483647, %v1958
    %vm1969 = vcmp.eq.f32.partialorder %v1968, 8.507059e+37
    %v1970 = vand.u32 %v1958, 2147483648
    %v1971 = vor.u32 1.1754944e-38, %v1970
    %v1972 = vsel %vm1969, %v1971, %v1967
    %v1973 = vmul.f32 1.0, %v1972
    %v1974 = vmul.f32 %v1953, %v1879
    %v1975 = vmul.f32 %v1953, %v1954
    %1977 = vrot.lane.b32.xlu0 %v1975, 64
    %v1978 = vpop.permute.xlu0 %1977
    %v1980 = vadd.f32 %v1974, %v1978
    %v1981 = vtanh.pop %v1980
    %v1982 = vmul.f32 %v1973, %v1981
    %v1983 = vld [vmem:[%s739] sm:$0xff]
    %v1984 = vld [vmem:[%s739 + $0x8] sm:$0xff]
    %v1985 = vld [vmem:[%s744] sm:$0xff]
    %v1986 = vld [vmem:[%s744 + $0x8] sm:$0xff]
    %v1987 = vsel %vm210, %v1985, %v1983
    %v1988 = vsel %vm210, %v1986, %v1984
    %1990 = vrot.lane.b32.xlu0 %v1982, 64
    %v1991 = vpop.permute.xlu0 %1990
    %v1992 = vsel %vm208, %v1991, 0
    %1994 = vmatpush.msra.mxu0 0.0
    %1995 = vmatpush.msra.mxu0 0.0
    %1996 = vmatpush.msra.mxu0 0.0
    %1997 = vmatpush.msra.mxu0 0.0
    %1998 = vmatpush.msra.mxu0 0.0
    %1999 = vmatpush.msra.mxu0 0.0
    %2000 = vmatpush.msra.mxu0 0.0
    %2001 = vmatpush.msra.mxu0 0.0
    %2002 = vmatpush.msra.mxu0 %v1786
    %2003 = vmatpush.msra.mxu0 %v1784
    %2004 = vmatpush.msra.mxu0 %v1782
    %2005 = vmatpush.msra.mxu0 %v1780
    %2006 = vmatpush.msra.mxu0 %v1778
    %2007 = vmatpush.msra.mxu0 %v1776
    %2008 = vmatpush.msra.mxu0 %v1774
    %2009 = vmatpush.msra.mxu0 %v1772
    %2010 = vmatmul.f32.gmra.mxu0 %v1992
    %v2011 = vpop.f32.mrf.mxu0
    %v2012 = vadd.f32 0.0, %v2011
    %2013 = vdwg.mxu0
    %2014 = vmatpush.msra.mxu0 0.0
    %2015 = vmatpush.msra.mxu0 0.0
    %2016 = vmatpush.msra.mxu0 0.0
    %2017 = vmatpush.msra.mxu0 0.0
    %2018 = vmatpush.msra.mxu0 0.0
    %2019 = vmatpush.msra.mxu0 0.0
    %2020 = vmatpush.msra.mxu0 0.0
    %2021 = vmatpush.msra.mxu0 0.0
    %2022 = vmatpush.msra.mxu0 %v1787
    %2023 = vmatpush.msra.mxu0 %v1785
    %2024 = vmatpush.msra.mxu0 %v1783
    %2025 = vmatpush.msra.mxu0 %v1781
    %2026 = vmatpush.msra.mxu0 %v1779
    %2027 = vmatpush.msra.mxu0 %v1777
    %2028 = vmatpush.msra.mxu0 %v1775
    %2029 = vmatpush.msra.mxu0 %v1773
    %2030 = vmatmul.f32.gmra.mxu0 %v1992
    %v2031 = vpop.f32.mrf.mxu0
    %v2032 = vadd.f32 0.0, %v2031
    %2033 = vdwg.mxu0
    %v2034 = vadd.f32 %v1987, %v2012
    %v2035 = vadd.f32 %v1988, %v2032
    %v2036 = vxor.u32 %v2034, 2147483648
    %v2037 = vmul.f32 %v2036, 1.442695
    %v2038 = vpow.pop %v2037
    %v2039 = vadd.f32 %v2038, 1.0
    %v2040 = vrcp.pop %v2039
    %v2041 = vmul.f32 %v2039, %v2040
    %v2042 = vsub.f32 1.0, %v2041
    %v2043 = vmul.f32 %v2040, %v2042
    %v2044 = vadd.f32 %v2040, %v2043
    %vm2045 = vweird.f32 %v2039
    %vm2046 = vweird.f32 %v2040
    %vm2047 = vmor %vm2045, %vm2046
    %v2048 = vsel %vm2047, %v2040, %v2044
    %v2049 = vand.u32 2147483647, %v2039
    %vm2050 = vcmp.eq.f32.partialorder %v2049, 8.507059e+37
    %v2051 = vand.u32 %v2039, 2147483648
    %v2052 = vor.u32 1.1754944e-38, %v2051
    %v2053 = vsel %vm2050, %v2052, %v2048
    %v2054 = vmul.f32 1.0, %v2053
    %v2055 = vtanh.pop %v2035
    %v2056 = vxor.u32 %v2035, 2147483648
    %v2057 = vmul.f32 %v2056, 1.442695
    %v2058 = vpow.pop %v2057
    %v2059 = vadd.f32 %v2058, 1.0
    %v2060 = vrcp.pop %v2059
    %v2061 = vmul.f32 %v2059, %v2060
    %v2062 = vsub.f32 1.0, %v2061
    %v2063 = vmul.f32 %v2060, %v2062
    %v2064 = vadd.f32 %v2060, %v2063
    %vm2065 = vweird.f32 %v2059
    %vm2066 = vweird.f32 %v2060
    %vm2067 = vmor %vm2065, %vm2066
    %v2068 = vsel %vm2067, %v2060, %v2064
    %v2069 = vand.u32 2147483647, %v2059
    %vm2070 = vcmp.eq.f32.partialorder %v2069, 8.507059e+37
    %v2071 = vand.u32 %v2059, 2147483648
    %v2072 = vor.u32 1.1754944e-38, %v2071
    %v2073 = vsel %vm2070, %v2072, %v2068
    %v2074 = vmul.f32 1.0, %v2073
    %v2075 = vmul.f32 %v2054, %v1980
    %v2076 = vmul.f32 %v2054, %v2055
    %2078 = vrot.lane.b32.xlu0 %v2076, 64
    %v2079 = vpop.permute.xlu0 %2078
    %v2081 = vadd.f32 %v2075, %v2079
    %v2082 = vtanh.pop %v2081
    %v2083 = vmul.f32 %v2074, %v2082
    %v2084 = vsel %vm210, %v1983, %v1985
    %v2085 = vsel %vm210, %v1984, %v1986
    %2087 = vrot.lane.b32.xlu0 %v2083, 64
    %v2088 = vpop.permute.xlu0 %2087
    %v2089 = vsel %vm208, %v2088, 0
    %2091 = vmatpush.msra.mxu0 0.0
    %2092 = vmatpush.msra.mxu0 0.0
    %2093 = vmatpush.msra.mxu0 0.0
    %2094 = vmatpush.msra.mxu0 0.0
    %2095 = vmatpush.msra.mxu0 0.0
    %2096 = vmatpush.msra.mxu0 0.0
    %2097 = vmatpush.msra.mxu0 0.0
    %2098 = vmatpush.msra.mxu0 0.0
    %2099 = vmatpush.msra.mxu0 %v1786
    %2100 = vmatpush.msra.mxu0 %v1784
    %2101 = vmatpush.msra.mxu0 %v1782
    %2102 = vmatpush.msra.mxu0 %v1780
    %2103 = vmatpush.msra.mxu0 %v1778
    %2104 = vmatpush.msra.mxu0 %v1776
    %2105 = vmatpush.msra.mxu0 %v1774
    %2106 = vmatpush.msra.mxu0 %v1772
    %2107 = vmatmul.f32.gmra.mxu0 %v2089
    %v2108 = vpop.f32.mrf.mxu0
    %v2109 = vadd.f32 0.0, %v2108
    %2110 = vdwg.mxu0
    %2111 = vmatpush.msra.mxu0 0.0
    %2112 = vmatpush.msra.mxu0 0.0
    %2113 = vmatpush.msra.mxu0 0.0
    %2114 = vmatpush.msra.mxu0 0.0
    %2115 = vmatpush.msra.mxu0 0.0
    %2116 = vmatpush.msra.mxu0 0.0
    %2117 = vmatpush.msra.mxu0 0.0
    %2118 = vmatpush.msra.mxu0 0.0
    %2119 = vmatpush.msra.mxu0 %v1787
    %2120 = vmatpush.msra.mxu0 %v1785
    %2121 = vmatpush.msra.mxu0 %v1783
    %2122 = vmatpush.msra.mxu0 %v1781
    %2123 = vmatpush.msra.mxu0 %v1779
    %2124 = vmatpush.msra.mxu0 %v1777
    %2125 = vmatpush.msra.mxu0 %v1775
    %2126 = vmatpush.msra.mxu0 %v1773
    %2127 = vmatmul.f32.gmra.mxu0 %v2089
    %v2128 = vpop.f32.mrf.mxu0
    %v2129 = vadd.f32 0.0, %v2128
    %2130 = vdwg.mxu0
    %v2131 = vadd.f32 %v2084, %v2109
    %v2132 = vadd.f32 %v2085, %v2129
    %v2133 = vxor.u32 %v2131, 2147483648
    %v2134 = vmul.f32 %v2133, 1.442695
    %v2135 = vpow.pop %v2134
    %v2136 = vadd.f32 %v2135, 1.0
    %v2137 = vrcp.pop %v2136
    %v2138 = vmul.f32 %v2136, %v2137
    %v2139 = vsub.f32 1.0, %v2138
    %v2140 = vmul.f32 %v2137, %v2139
    %v2141 = vadd.f32 %v2137, %v2140
    %vm2142 = vweird.f32 %v2136
    %vm2143 = vweird.f32 %v2137
    %vm2144 = vmor %vm2142, %vm2143
    %v2145 = vsel %vm2144, %v2137, %v2141
    %v2146 = vand.u32 2147483647, %v2136
    %vm2147 = vcmp.eq.f32.partialorder %v2146, 8.507059e+37
    %v2148 = vand.u32 %v2136, 2147483648
    %v2149 = vor.u32 1.1754944e-38, %v2148
    %v2150 = vsel %vm2147, %v2149, %v2145
    %v2151 = vmul.f32 1.0, %v2150
    %v2152 = vtanh.pop %v2132
    %v2153 = vxor.u32 %v2132, 2147483648
    %v2154 = vmul.f32 %v2153, 1.442695
    %v2155 = vpow.pop %v2154
    %v2156 = vadd.f32 %v2155, 1.0
    %v2157 = vrcp.pop %v2156
    %v2158 = vmul.f32 %v2156, %v2157
    %v2159 = vsub.f32 1.0, %v2158
    %v2160 = vmul.f32 %v2157, %v2159
    %v2161 = vadd.f32 %v2157, %v2160
    %vm2162 = vweird.f32 %v2156
    %vm2163 = vweird.f32 %v2157
    %vm2164 = vmor %vm2162, %vm2163
    %v2165 = vsel %vm2164, %v2157, %v2161
    %v2166 = vand.u32 2147483647, %v2156
    %vm2167 = vcmp.eq.f32.partialorder %v2166, 8.507059e+37
    %v2168 = vand.u32 %v2156, 2147483648
    %v2169 = vor.u32 1.1754944e-38, %v2168
    %v2170 = vsel %vm2167, %v2169, %v2165
    %v2171 = vmul.f32 1.0, %v2170
    %v2172 = vmul.f32 %v2151, %v2081
    %v2173 = vmul.f32 %v2151, %v2152
    %2175 = vrot.lane.b32.xlu0 %v2173, 64
    %v2176 = vpop.permute.xlu0 %2175
    %v2178 = vadd.f32 %v2172, %v2176
    %v2179 = vtanh.pop %v2178
    %v2180 = vmul.f32 %v2171, %v2179
    %v2181 = vsel %vm210, %v1882, %v1884
    %v2182 = vsel %vm210, %v1883, %v1885
    %2184 = vrot.lane.b32.xlu0 %v2180, 64
    %v2185 = vpop.permute.xlu0 %2184
    %v2186 = vsel %vm208, %v2185, 0
    %2188 = vmatpush.msra.mxu0 0.0
    %2189 = vmatpush.msra.mxu0 0.0
    %2190 = vmatpush.msra.mxu0 0.0
    %2191 = vmatpush.msra.mxu0 0.0
    %2192 = vmatpush.msra.mxu0 0.0
    %2193 = vmatpush.msra.mxu0 0.0
    %2194 = vmatpush.msra.mxu0 0.0
    %2195 = vmatpush.msra.mxu0 0.0
    %2196 = vmatpush.msra.mxu0 %v1786
    %2197 = vmatpush.msra.mxu0 %v1784
    %2198 = vmatpush.msra.mxu0 %v1782
    %2199 = vmatpush.msra.mxu0 %v1780
    %2200 = vmatpush.msra.mxu0 %v1778
    %2201 = vmatpush.msra.mxu0 %v1776
    %2202 = vmatpush.msra.mxu0 %v1774
    %2203 = vmatpush.msra.mxu0 %v1772
    %2204 = vmatmul.f32.gmra.mxu0 %v2186
    %v2205 = vpop.f32.mrf.mxu0
    %v2206 = vadd.f32 0.0, %v2205
    %2207 = vdwg.mxu0
    %2208 = vmatpush.msra.mxu0 0.0
    %2209 = vmatpush.msra.mxu0 0.0
    %2210 = vmatpush.msra.mxu0 0.0
    %2211 = vmatpush.msra.mxu0 0.0
    %2212 = vmatpush.msra.mxu0 0.0
    %2213 = vmatpush.msra.mxu0 0.0
    %2214 = vmatpush.msra.mxu0 0.0
    %2215 = vmatpush.msra.mxu0 0.0
    %2216 = vmatpush.msra.mxu0 %v1787
    %2217 = vmatpush.msra.mxu0 %v1785
    %2218 = vmatpush.msra.mxu0 %v1783
    %2219 = vmatpush.msra.mxu0 %v1781
    %2220 = vmatpush.msra.mxu0 %v1779
    %2221 = vmatpush.msra.mxu0 %v1777
    %2222 = vmatpush.msra.mxu0 %v1775
    %2223 = vmatpush.msra.mxu0 %v1773
    %2224 = vmatmul.f32.gmra.mxu0 %v2186
    %v2225 = vpop.f32.mrf.mxu0
    %v2226 = vadd.f32 0.0, %v2225
    %2227 = vdwg.mxu0
    %v2228 = vadd.f32 %v2181, %v2206
    %v2229 = vadd.f32 %v2182, %v2226
    %v2230 = vxor.u32 %v2228, 2147483648
    %v2231 = vmul.f32 %v2230, 1.442695
    %v2232 = vpow.pop %v2231
    %v2233 = vadd.f32 %v2232, 1.0
    %v2234 = vrcp.pop %v2233
    %v2235 = vmul.f32 %v2233, %v2234
    %v2236 = vsub.f32 1.0, %v2235
    %v2237 = vmul.f32 %v2234, %v2236
    %v2238 = vadd.f32 %v2234, %v2237
    %vm2239 = vweird.f32 %v2233
    %vm2240 = vweird.f32 %v2234
    %vm2241 = vmor %vm2239, %vm2240
    %v2242 = vsel %vm2241, %v2234, %v2238
    %v2243 = vand.u32 2147483647, %v2233
    %vm2244 = vcmp.eq.f32.partialorder %v2243, 8.507059e+37
    %v2245 = vand.u32 %v2233, 2147483648
    %v2246 = vor.u32 1.1754944e-38, %v2245
    %v2247 = vsel %vm2244, %v2246, %v2242
    %v2248 = vmul.f32 1.0, %v2247
    %v2249 = vtanh.pop %v2229
    %v2250 = vxor.u32 %v2229, 2147483648
    %v2251 = vmul.f32 %v2250, 1.442695
    %v2252 = vpow.pop %v2251
    %v2253 = vadd.f32 %v2252, 1.0
    %v2254 = vrcp.pop %v2253
    %v2255 = vmul.f32 %v2253, %v2254
    %v2256 = vsub.f32 1.0, %v2255
    %v2257 = vmul.f32 %v2254, %v2256
    %v2258 = vadd.f32 %v2254, %v2257
    %vm2259 = vweird.f32 %v2253
    %vm2260 = vweird.f32 %v2254
    %vm2261 = vmor %vm2259, %vm2260
    %v2262 = vsel %vm2261, %v2254, %v2258
    %v2263 = vand.u32 2147483647, %v2253
    %vm2264 = vcmp.eq.f32.partialorder %v2263, 8.507059e+37
    %v2265 = vand.u32 %v2253, 2147483648
    %v2266 = vor.u32 1.1754944e-38, %v2265
    %v2267 = vsel %vm2264, %v2266, %v2262
    %v2268 = vmul.f32 1.0, %v2267
    %v2269 = vmul.f32 %v2248, %v2178
    %v2270 = vmul.f32 %v2248, %v2249
    %2272 = vrot.lane.b32.xlu0 %v2270, 64
    %v2273 = vpop.permute.xlu0 %2272
    %v2275 = vadd.f32 %v2269, %v2273
    %v2276 = vtanh.pop %v2275
    %v2277 = vmul.f32 %v2268, %v2276
    %v2278 = vsel %vm210, %v1766, %v1768
    %v2279 = vsel %vm210, %v1767, %v1769
    %2281 = vrot.lane.b32.xlu0 %v2277, 64
    %v2282 = vpop.permute.xlu0 %2281
    %v2283 = vsel %vm208, %v2282, 0
    %2285 = vmatpush.msra.mxu0 0.0
    %2286 = vmatpush.msra.mxu0 0.0
    %2287 = vmatpush.msra.mxu0 0.0
    %2288 = vmatpush.msra.mxu0 0.0
    %2289 = vmatpush.msra.mxu0 0.0
    %2290 = vmatpush.msra.mxu0 0.0
    %2291 = vmatpush.msra.mxu0 0.0
    %2292 = vmatpush.msra.mxu0 0.0
    %2293 = vmatpush.msra.mxu0 %v1786
    %2294 = vmatpush.msra.mxu0 %v1784
    %2295 = vmatpush.msra.mxu0 %v1782
    %2296 = vmatpush.msra.mxu0 %v1780
    %2297 = vmatpush.msra.mxu0 %v1778
    %2298 = vmatpush.msra.mxu0 %v1776
    %2299 = vmatpush.msra.mxu0 %v1774
    %2300 = vmatpush.msra.mxu0 %v1772
    %2301 = vmatmul.f32.gmra.mxu0 %v2283
    %v2302 = vpop.f32.mrf.mxu0
    %v2303 = vadd.f32 0.0, %v2302
    %2304 = vdwg.mxu0
    %2305 = vmatpush.msra.mxu0 0.0
    %2306 = vmatpush.msra.mxu0 0.0
    %2307 = vmatpush.msra.mxu0 0.0
    %2308 = vmatpush.msra.mxu0 0.0
    %2309 = vmatpush.msra.mxu0 0.0
    %2310 = vmatpush.msra.mxu0 0.0
    %2311 = vmatpush.msra.mxu0 0.0
    %2312 = vmatpush.msra.mxu0 0.0
    %2313 = vmatpush.msra.mxu0 %v1787
    %2314 = vmatpush.msra.mxu0 %v1785
    %2315 = vmatpush.msra.mxu0 %v1783
    %2316 = vmatpush.msra.mxu0 %v1781
    %2317 = vmatpush.msra.mxu0 %v1779
    %2318 = vmatpush.msra.mxu0 %v1777
    %2319 = vmatpush.msra.mxu0 %v1775
    %2320 = vmatpush.msra.mxu0 %v1773
    %2321 = vmatmul.f32.gmra.mxu0 %v2283
    %v2322 = vpop.f32.mrf.mxu0
    %v2323 = vadd.f32 0.0, %v2322
    %2324 = vdwg.mxu0
    %v2325 = vadd.f32 %v2278, %v2303
    %v2326 = vadd.f32 %v2279, %v2323
    %v2327 = vxor.u32 %v2325, 2147483648
    %v2328 = vmul.f32 %v2327, 1.442695
    %v2329 = vpow.pop %v2328
    %v2330 = vadd.f32 %v2329, 1.0
    %v2331 = vrcp.pop %v2330
    %v2332 = vmul.f32 %v2330, %v2331
    %v2333 = vsub.f32 1.0, %v2332
    %v2334 = vmul.f32 %v2331, %v2333
    %v2335 = vadd.f32 %v2331, %v2334
    %vm2336 = vweird.f32 %v2330
    %vm2337 = vweird.f32 %v2331
    %vm2338 = vmor %vm2336, %vm2337
    %v2339 = vsel %vm2338, %v2331, %v2335
    %v2340 = vand.u32 2147483647, %v2330
    %vm2341 = vcmp.eq.f32.partialorder %v2340, 8.507059e+37
    %v2342 = vand.u32 %v2330, 2147483648
    %v2343 = vor.u32 1.1754944e-38, %v2342
    %v2344 = vsel %vm2341, %v2343, %v2339
    %v2345 = vmul.f32 1.0, %v2344
    %v2346 = vtanh.pop %v2326
    %v2347 = vxor.u32 %v2326, 2147483648
    %v2348 = vmul.f32 %v2347, 1.442695
    %v2349 = vpow.pop %v2348
    %v2350 = vadd.f32 %v2349, 1.0
    %v2351 = vrcp.pop %v2350
    %v2352 = vmul.f32 %v2350, %v2351
    %v2353 = vsub.f32 1.0, %v2352
    %v2354 = vmul.f32 %v2351, %v2353
    %v2355 = vadd.f32 %v2351, %v2354
    %vm2356 = vweird.f32 %v2350
    %vm2357 = vweird.f32 %v2351
    %vm2358 = vmor %vm2356, %vm2357
    %v2359 = vsel %vm2358, %v2351, %v2355
    %v2360 = vand.u32 2147483647, %v2350
    %vm2361 = vcmp.eq.f32.partialorder %v2360, 8.507059e+37
    %v2362 = vand.u32 %v2350, 2147483648
    %v2363 = vor.u32 1.1754944e-38, %v2362
    %v2364 = vsel %vm2361, %v2363, %v2359
    %v2365 = vmul.f32 1.0, %v2364
    %v2366 = vmul.f32 %v2345, %v2275
    %v2367 = vmul.f32 %v2345, %v2346
    %2369 = vrot.lane.b32.xlu0 %v2367, 64
    %v2370 = vpop.permute.xlu0 %2369
    %v2372 = vadd.f32 %v2366, %v2370
    %v2373 = vtanh.pop %v2372
    %v2374 = vmul.f32 %v2365, %v2373
    %v2375 = vld [vmem:[%s351] sm:$0xff]
    %v2376 = vld [vmem:[%s351 + $0x8] sm:$0xff]
    %v2377 = vld [vmem:[%s346] sm:$0xff]
    %v2378 = vld [vmem:[%s346 + $0x8] sm:$0xff]
    %v2379 = vsel %vm210, %v2377, %v2375
    %v2380 = vsel %vm210, %v2378, %v2376
    %2382 = vrot.lane.b32.xlu0 %v2374, 64
    %v2383 = vpop.permute.xlu0 %2382
    %v2384 = vsel %vm208, %v2383, 0
    %2386 = vmatpush.msra.mxu0 0.0
    %2387 = vmatpush.msra.mxu0 0.0
    %2388 = vmatpush.msra.mxu0 0.0
    %2389 = vmatpush.msra.mxu0 0.0
    %2390 = vmatpush.msra.mxu0 0.0
    %2391 = vmatpush.msra.mxu0 0.0
    %2392 = vmatpush.msra.mxu0 0.0
    %2393 = vmatpush.msra.mxu0 0.0
    %2394 = vmatpush.msra.mxu0 %v1786
    %2395 = vmatpush.msra.mxu0 %v1784
    %2396 = vmatpush.msra.mxu0 %v1782
    %2397 = vmatpush.msra.mxu0 %v1780
    %2398 = vmatpush.msra.mxu0 %v1778
    %2399 = vmatpush.msra.mxu0 %v1776
    %2400 = vmatpush.msra.mxu0 %v1774
    %2401 = vmatpush.msra.mxu0 %v1772
    %2402 = vmatmul.f32.gmra.mxu0 %v2384
    %v2403 = vpop.f32.mrf.mxu0
    %v2404 = vadd.f32 0.0, %v2403
    %2405 = vdwg.mxu0
    %2406 = vmatpush.msra.mxu0 0.0
    %2407 = vmatpush.msra.mxu0 0.0
    %2408 = vmatpush.msra.mxu0 0.0
    %2409 = vmatpush.msra.mxu0 0.0
    %2410 = vmatpush.msra.mxu0 0.0
    %2411 = vmatpush.msra.mxu0 0.0
    %2412 = vmatpush.msra.mxu0 0.0
    %2413 = vmatpush.msra.mxu0 0.0
    %2414 = vmatpush.msra.mxu0 %v1787
    %2415 = vmatpush.msra.mxu0 %v1785
    %2416 = vmatpush.msra.mxu0 %v1783
    %2417 = vmatpush.msra.mxu0 %v1781
    %2418 = vmatpush.msra.mxu0 %v1779
    %2419 = vmatpush.msra.mxu0 %v1777
    %2420 = vmatpush.msra.mxu0 %v1775
    %2421 = vmatpush.msra.mxu0 %v1773
    %2422 = vmatmul.f32.gmra.mxu0 %v2384
    %v2423 = vpop.f32.mrf.mxu0
    %v2424 = vadd.f32 0.0, %v2423
    %2425 = vdwg.mxu0
    %v2426 = vadd.f32 %v2379, %v2404
    %v2427 = vadd.f32 %v2380, %v2424
    %v2428 = vxor.u32 %v2426, 2147483648
    %v2429 = vmul.f32 %v2428, 1.442695
    %v2430 = vpow.pop %v2429
    %v2431 = vadd.f32 %v2430, 1.0
    %v2432 = vrcp.pop %v2431
    %v2433 = vmul.f32 %v2431, %v2432
    %v2434 = vsub.f32 1.0, %v2433
    %v2435 = vmul.f32 %v2432, %v2434
    %v2436 = vadd.f32 %v2432, %v2435
    %vm2437 = vweird.f32 %v2431
    %vm2438 = vweird.f32 %v2432
    %vm2439 = vmor %vm2437, %vm2438
    %v2440 = vsel %vm2439, %v2432, %v2436
    %v2441 = vand.u32 2147483647, %v2431
    %vm2442 = vcmp.eq.f32.partialorder %v2441, 8.507059e+37
    %v2443 = vand.u32 %v2431, 2147483648
    %v2444 = vor.u32 1.1754944e-38, %v2443
    %v2445 = vsel %vm2442, %v2444, %v2440
    %v2446 = vmul.f32 1.0, %v2445
    %v2447 = vtanh.pop %v2427
    %v2448 = vxor.u32 %v2427, 2147483648
    %v2449 = vmul.f32 %v2448, 1.442695
    %v2450 = vpow.pop %v2449
    %v2451 = vadd.f32 %v2450, 1.0
    %v2452 = vrcp.pop %v2451
    %v2453 = vmul.f32 %v2451, %v2452
    %v2454 = vsub.f32 1.0, %v2453
    %v2455 = vmul.f32 %v2452, %v2454
    %v2456 = vadd.f32 %v2452, %v2455
    %vm2457 = vweird.f32 %v2451
    %vm2458 = vweird.f32 %v2452
    %vm2459 = vmor %vm2457, %vm2458
    %v2460 = vsel %vm2459, %v2452, %v2456
    %v2461 = vand.u32 2147483647, %v2451
    %vm2462 = vcmp.eq.f32.partialorder %v2461, 8.507059e+37
    %v2463 = vand.u32 %v2451, 2147483648
    %v2464 = vor.u32 1.1754944e-38, %v2463
    %v2465 = vsel %vm2462, %v2464, %v2460
    %v2466 = vmul.f32 1.0, %v2465
    %v2467 = vmul.f32 %v2446, %v2372
    %v2468 = vmul.f32 %v2446, %v2447
    %2470 = vrot.lane.b32.xlu0 %v2468, 64
    %v2471 = vpop.permute.xlu0 %2470
    %v2473 = vadd.f32 %v2467, %v2471
    %v2474 = vtanh.pop %v2473
    %v2475 = vmul.f32 %v2466, %v2474
    %v2476 = vld [vmem:[%s8] sm:$0xff]
    %v2477 = vld [vmem:[%s8 + $0x8] sm:$0xff]
    %v2478 = vld [vmem:[%s8 + $0x10] sm:$0xff]
    %v2479 = vld [vmem:[%s8 + $0x18] sm:$0xff]
    %v2480 = vld [vmem:[#allocation5] sm:$0xff]
    %v2481 = vld [vmem:[%s8 + $0x20] sm:$0xff]
    %v2482 = vld [vmem:[%s8 + $0x28] sm:$0xff]
    %v2483 = vld [vmem:[%s8 + $0x30] sm:$0xff]
    %v2484 = vld [vmem:[%s8 + $0x38] sm:$0xff]
    %v2486 = vsel %vm202, %v2480, 0
    %2488 = vmatpush.msra.mxu0 0.0
    %2489 = vmatpush.msra.mxu0 0.0
    %2490 = vmatpush.msra.mxu0 0.0
    %2491 = vmatpush.msra.mxu0 0.0
    %2492 = vmatpush.msra.mxu0 0.0
    %2493 = vmatpush.msra.mxu0 0.0
    %2494 = vmatpush.msra.mxu0 0.0
    %2495 = vmatpush.msra.mxu0 0.0
    %2496 = vmatpush.msra.mxu0 0.0
    %2497 = vmatpush.msra.mxu0 0.0
    %2498 = vmatpush.msra.mxu0 0.0
    %2499 = vmatpush.msra.mxu0 0.0
    %2500 = vmatpush.msra.mxu0 %v2484
    %2501 = vmatpush.msra.mxu0 %v2483
    %2502 = vmatpush.msra.mxu0 %v2482
    %2503 = vmatpush.msra.mxu0 %v2481
    %2504 = vmatmul.f32.gmra.mxu0 %v2486
    %v2505 = vpop.f32.mrf.mxu0
    %v2506 = vadd.f32 0.0, %v2505
    %2507 = vdwg.mxu0
    %2509 = vrot.lane.b32.xlu0 %v2475, 64
    %v2510 = vpop.permute.xlu0 %2509
    %v2511 = vsel %vm202, %v2510, 0
    %2513 = vmatpush.msra.mxu0 0.0
    %2514 = vmatpush.msra.mxu0 0.0
    %2515 = vmatpush.msra.mxu0 0.0
    %2516 = vmatpush.msra.mxu0 0.0
    %2517 = vmatpush.msra.mxu0 0.0
    %2518 = vmatpush.msra.mxu0 0.0
    %2519 = vmatpush.msra.mxu0 0.0
    %2520 = vmatpush.msra.mxu0 0.0
    %2521 = vmatpush.msra.mxu0 0.0
    %2522 = vmatpush.msra.mxu0 0.0
    %2523 = vmatpush.msra.mxu0 0.0
    %2524 = vmatpush.msra.mxu0 0.0
    %2525 = vmatpush.msra.mxu0 %v2479
    %2526 = vmatpush.msra.mxu0 %v2478
    %2527 = vmatpush.msra.mxu0 %v2477
    %2528 = vmatpush.msra.mxu0 %v2476
    %2529 = vmatmul.f32.gmra.mxu0 %v2511
    %v2530 = vpop.f32.mrf.mxu0
    %v2531 = vadd.f32 %v2506, %v2530
    %2532 = vdwg.mxu0
    %v2533 = vld [vmem:[%s9] sm:$0x1]
    %v2535 = vperm.slane %v2533, 0
    %v2537 = vadd.f32 %v2531, %v2535
    %vm2538 = vcmask 64512
    %v2539 = vsel %vm2538, %v2537, -inf
    %2540 = vmax.xlane.f32.xlu0 %v2539
    %v2541 = vpop.xlane.xlu0 %2540
    %v2542 = vsub.f32 %v2537, %v2541
    %v2543 = vmul.f32 %v2542, 1.442695
    %v2544 = vpow.pop %v2543
    %v2545 = vsel %vm2538, %v2544, 0.0
    %2546 = vadd.xlane.f32.xlu0 %v2545
    %v2547 = vpop.xlane.xlu0 %2546
    %v2548 = vlog2.pop %v2547
    %v2549 = vmul.f32 %v2548, 0.6931472
    %v2550 = vsub.f32 %v2542, %v2549
    %2551 = vst.msk [vmem:[%s10] sm:$0xff] %vm2538, %v2550
    // Predicated region
    $region50: #{lstm_classifier_forward.1} parent=1 // pred_check
      _
    $region51: #{lstm_classifier_forward.1} parent=1 // pred_check_branch
      %2553 = sbr.rel (0) target = $region53
    $region52: #{lstm_classifier_forward.1} parent=1 // pred_region
      _
    $region53: #{lstm_classifier_forward.1} parent=1 // pred_fallthru
      _
    // Predicated region
    $region54: #{lstm_classifier_forward.1} parent=1 // pred_check
      _
    $region55: #{lstm_classifier_forward.1} parent=1 // pred_check_branch
      %2555 = sbr.rel (0) target = $region57
    $region56: #{lstm_classifier_forward.1} parent=1 // pred_region
      _
    $region57: #{lstm_classifier_forward.1} parent=1 // pred_fallthru
      _
    %2556 = vsyncpa [#allocation7], 1
    %2557 = vsyncpa [#allocation9], 1

</llo_original>
